<compile_context>
chip_gen: v7x
topology: tpu7x:2x2x1
jax: 0.10.0
libtpu: 0.0.40
codegen_flags: <defaults>
</compile_context>

<pallas_src>
import functools
import math

import jax
import jax.numpy as jnp
from jax.experimental import pallas as pl
from jax.experimental.pallas import tpu as pltpu


_VMEM_CAP = 64 * 1024 * 1024   # fits v7x; v5e/v6e have 128 MiB physical.


def _vmem_limit(nbytes):
    """Scoped-VMEM request: actual need + headroom, floored at the v6e/v7x
    default (32 MiB) and capped at 64 MiB so the plan also fits v7x."""
    return int(min(max(int(nbytes * 1.25) + (4 << 20), 32 << 20), _VMEM_CAP))


# ----------------------------------------------------------------------------
# Single-buffered resident blocks (pl.Buffered(1)) -- probed once for support.
# ----------------------------------------------------------------------------
_WEIGHT_PIPELINE_MODE = "unset"


def _weight_pipeline_mode():
    """pl.Buffered(1) if this Pallas build supports pipeline_mode on a
    constant-index BlockSpec (halves resident-weight VMEM), else None."""
    global _WEIGHT_PIPELINE_MODE
    if _WEIGHT_PIPELINE_MODE == "unset":
        try:
            def _probe(x_ref, w_ref, o_ref):
                o_ref[...] = x_ref[...] + w_ref[...]
            fn = pl.pallas_call(
                _probe,
                out_shape=jax.ShapeDtypeStruct((16, 128), jnp.float32),
                grid=(2,),
                in_specs=[pl.BlockSpec((8, 128), lambda i: (i, 0)),
                          pl.BlockSpec((8, 128), lambda i: (0, 0),
                                       pipeline_mode=pl.Buffered(1))],
                out_specs=pl.BlockSpec((8, 128), lambda i: (i, 0)),
            )
            jax.block_until_ready(fn(jnp.zeros((16, 128), jnp.float32),
                                     jnp.zeros((8, 128), jnp.float32)))
            _WEIGHT_PIPELINE_MODE = pl.Buffered(1)
        except Exception:
            _WEIGHT_PIPELINE_MODE = None
    return _WEIGHT_PIPELINE_MODE


def _resident_spec(shape):
    """BlockSpec for a block that is identical at every grid step (weights,
    biases, LN params): constant index_map, single-buffered when supported."""
    zero = (0,) * len(shape)
    imap = lambda *_: zero
    pm = _weight_pipeline_mode()
    if pm is not None:
        return pl.BlockSpec(shape, imap, pipeline_mode=pm)
    return pl.BlockSpec(shape, imap)


# ----------------------------------------------------------------------------
# Pallas kernels
# ----------------------------------------------------------------------------
def _mha_res_ln_kernel(*refs, num_heads, d_k, eps, has_mask, causal, q_tile):
    """Fused, per (batch, Lq-tile):
         per-head Q/K/V projection ((tq|lk, d_k) @ (d_k, d_k)),
         scaled-dot attention (scale pre-folded into Wq),
         W_O projection + bias, residual add (the query input), LayerNorm.
       Matmul operands use the weight dtype (f32 or bf16); accumulation,
       softmax and LayerNorm math stays f32."""
    if has_mask:
        (q_ref, k_ref, v_ref, mask_ref, wq_ref, wk_ref, wv_ref, wo_ref,
         bo_ref, g_ref, b_ref, o_ref) = refs
    else:
        (q_ref, k_ref, v_ref, wq_ref, wk_ref, wv_ref, wo_ref,
         bo_ref, g_ref, b_ref, o_ref) = refs
        mask_ref = None

    f32 = jnp.float32
    mm = wq_ref.dtype                       # matmul operand dtype (f32 / bf16)
    xq = q_ref[0].astype(f32)               # (tq, D)  -- also the residual
    xk = k_ref[0].astype(f32)               # (lk, D)
    xv = v_ref[0].astype(f32)               # (lk, D)
    tq = xq.shape[0]
    lk = xk.shape[0]
    d_model = num_heads * d_k

    if causal:
        # In-kernel causal mask: no mask DMA at all for self-attention.
        q0 = pl.program_id(1) * q_tile
        row = jax.lax.broadcasted_iota(jnp.int32, (tq, lk), 0) + q0
        col = jax.lax.broadcasted_iota(jnp.int32, (tq, lk), 1)
        causal_bias = jnp.where(col <= row, 0.0, -1e30).astype(f32)

    wo = wo_ref[...]                        # (D, D), already transposed
    unfold_wo = (d_k % 128 == 0)            # full-K W_O matmul on wide MXUs
    ctx_heads = []
    acc = jnp.zeros((tq, d_model), f32)

    for h in range(num_heads):              # static unroll (small H); see TODO
        sl = slice(h * d_k, (h + 1) * d_k)
        # Per-head projections: only L*D*d_k MACs total (no block-diag waste).
        qh = jnp.dot(xq[:, sl].astype(mm), wq_ref[...],
                     preferred_element_type=f32)          # scale folded in Wq
        kh = jnp.dot(xk[:, sl].astype(mm), wk_ref[...],
                     preferred_element_type=f32)
        vh = jnp.dot(xv[:, sl].astype(mm), wv_ref[...],
                     preferred_element_type=f32)
        # scores = q_h @ k_h^T  (contract dim 1 of both operands: no .T)
        s = jax.lax.dot_general(qh.astype(mm), kh.astype(mm),
                                (((1,), (1,)), ((), ())),
                                preferred_element_type=f32)
        if causal:
            s = s + causal_bias
        if mask_ref is not None:
            hm = mask_ref.shape[1]          # 1 (broadcast over heads) or H
            s = s + mask_ref[0, h if hm > 1 else 0].astype(f32)  # additive
        s = s - jnp.max(s, axis=-1, keepdims=True)
        probs = jnp.exp(s)
        attn = probs * pl.reciprocal(
            jnp.sum(probs, axis=-1, keepdims=True), approx=True)
        ctx = jnp.dot(attn.astype(mm), vh.astype(mm),
                      preferred_element_type=f32)         # (tq, d_k)
        if unfold_wo:
            ctx_heads.append(ctx)
        else:
            # Fold W_O into the head loop:
            #   concat_h(ctx_h) @ Wo^T == sum_h ctx_h @ Wo^T[h*d_k:(h+1)*d_k,:]
            acc = acc + jnp.dot(ctx.astype(mm), wo[sl, :],
                                preferred_element_type=f32)
    if unfold_wo:
        ctx_all = jnp.concatenate(ctx_heads, axis=-1)     # (tq, D)
        acc = jnp.dot(ctx_all.astype(mm), wo, preferred_element_type=f32)

    y = acc + bo_ref[...] + xq                            # bias + residual
    mu = jnp.mean(y, axis=-1, keepdims=True)
    var = jnp.mean(jnp.square(y - mu), axis=-1, keepdims=True)
    out = (y - mu) * jax.lax.rsqrt(var + eps) * g_ref[...] + b_ref[...]
    o_ref[0] = out.astype(o_ref.dtype)


def _ffn_res_ln_kernel(x_ref, w1_ref, b1_ref, w2_ref, b2_ref, g_ref, b_ref,
                       o_ref, *, eps):
    """Fused FFN + residual + LayerNorm on a (TILE_M, d_model) row tile:
       y = LN( relu(x @ W1^T + b1) @ W2^T + b2 + x )"""
    f32 = jnp.float32
    mm = w1_ref.dtype
    x = x_ref[...].astype(f32)                            # (tm, D)
    h = jnp.dot(x.astype(mm), w1_ref[...],
                preferred_element_type=f32) + b1_ref[...]
    h = jnp.maximum(h, 0.0)
    y = jnp.dot(h.astype(mm), w2_ref[...],
                preferred_element_type=f32) + b2_ref[...]
    y = y + x                                             # residual (f32)
    mu = jnp.mean(y, axis=-1, keepdims=True)
    var = jnp.mean(jnp.square(y - mu), axis=-1, keepdims=True)
    out = (y - mu) * jax.lax.rsqrt(var + eps) * g_ref[...] + b_ref[...]
    o_ref[...] = out.astype(o_ref.dtype)


# ----------------------------------------------------------------------------
# Pallas wrappers
# ----------------------------------------------------------------------------
def _pick_row_tile(m, target):
    """Largest row tile that divides m, is a multiple of 8 and <= target."""
    if m <= target:
        return m
    t = (target // 8) * 8
    while t >= 8:
        if m % t == 0:
            return t
        t -= 8
    return m


def mha_res_ln(prep, q, k, v, mask, num_heads, *, eps=1e-5, causal=False,
               out_dtype=jnp.float32, q_tile_target=256):
    """q:(N,Lq,D) k,v:(N,Lk,D) mask:(1|N, 1|H, Lq, Lk) -> LN(MHA(q,k,v) + q).
       If causal=True, the mask argument is ignored and a causal mask is
       generated in-kernel (no mask DMA)."""
    n, lq, d_model = q.shape
    lk = k.shape[1]
    d_k = d_model // num_heads
    tq = _pick_row_tile(lq, q_tile_target)
    has_mask = (mask is not None) and (not causal)

    in_specs = [
        pl.BlockSpec((1, tq, d_model), lambda b, i: (b, i, 0)),   # q (+residual)
        pl.BlockSpec((1, lk, d_model), lambda b, i: (b, 0, 0)),   # k
        pl.BlockSpec((1, lk, d_model), lambda b, i: (b, 0, 0)),   # v
    ]
    args = [q, k, v]
    hm = 1
    if has_mask:
        # Additive bf16 mask (0 / -1e30): one VPU add instead of cmp+select
        # and half the HBM bytes of an f32 mask.
        add_mask = jnp.where(mask == 0, -1e30, 0.0).astype(jnp.bfloat16)
        nm, hm = add_mask.shape[0], add_mask.shape[1]
        if nm > 1:
            mask_map = lambda b, i: (b, 0, i, 0)
        else:
            mask_map = lambda b, i: (0, 0, i, 0)
        in_specs.append(pl.BlockSpec((1, hm, tq, lk), mask_map))
        args.append(add_mask)

    in_specs += [
        _resident_spec((d_k, d_k)),            # Wq^T (pre-scaled)
        _resident_spec((d_k, d_k)),            # Wk^T
        _resident_spec((d_k, d_k)),            # Wv^T
        _resident_spec((d_model, d_model)),    # Wo^T
        _resident_spec((1, d_model)),          # bo
        _resident_spec((1, d_model)),          # gamma
        _resident_spec((1, d_model)),          # beta
    ]
    args += [prep["Wq_t"], prep["Wk_t"], prep["Wv_t"], prep["Wo_t"],
             prep["bo"], prep["gamma"], prep["beta"]]

    # VMEM budget: resident weights (x buffer count) + pipelined activation
    # tiles + rough compute-intermediate headroom.
    mm_isz = jnp.dtype(prep["Wq_t"].dtype).itemsize
    wbuf = 1 if _weight_pipeline_mode() is not None else 2
    wbytes = ((3 * d_k * d_k + d_model * d_model) * mm_isz
              + 3 * d_model * 4) * wbuf
    abytes = 2 * tq * d_model * jnp.dtype(q.dtype).itemsize
    abytes += 2 * 2 * lk * d_model * jnp.dtype(k.dtype).itemsize
    abytes += (2 * hm * tq * lk * 2) if has_mask else 0
    abytes += 2 * tq * d_model * jnp.dtype(out_dtype).itemsize
    sbytes = 4 * (2 * tq * lk + (2 * tq + lk) * d_k + 2 * tq * d_model)

    kernel = functools.partial(_mha_res_ln_kernel, num_heads=num_heads,
                               d_k=d_k, eps=eps, has_mask=has_mask,
                               causal=causal, q_tile=tq)
    return pl.pallas_call(
        kernel,
        out_shape=jax.ShapeDtypeStruct((n, lq, d_model), out_dtype),
        grid=(n, lq // tq),
        in_specs=in_specs,
        out_specs=pl.BlockSpec((1, tq, d_model), lambda b, i: (b, i, 0)),
        compiler_params=pltpu.CompilerParams(
            dimension_semantics=("parallel", "parallel"),
            vmem_limit_bytes=_vmem_limit(wbytes + abytes + sbytes)),
    )(*args)


def ffn_res_ln(prep, x2d, *, eps=1e-5, row_tile=512, out_dtype=jnp.float32):
    """x2d: (M, D) -> LN(FFN(x2d) + x2d), row-tiled grid, resident weights."""
    m, d_model = x2d.shape
    d_ff = prep["W1_t"].shape[1]
    mm_isz = jnp.dtype(prep["W1_t"].dtype).itemsize
    # v7x (64 MiB VMEM): f32 weights + large d_ff need a smaller row tile
    # (the f32 hidden intermediate is tm*d_ff*4 bytes on top of weights).
    if mm_isz == 4 and d_ff >= 4096:
        row_tile = min(row_tile, 256)
    tm = _pick_row_tile(m, row_tile)

    wbuf = 1 if _weight_pipeline_mode() is not None else 2
    wbytes = (2 * d_model * d_ff * mm_isz + (d_ff + 3 * d_model) * 4) * wbuf
    abytes = 2 * tm * d_model * jnp.dtype(x2d.dtype).itemsize
    abytes += 2 * tm * d_model * jnp.dtype(out_dtype).itemsize
    sbytes = 4 * (tm * d_ff + 2 * tm * d_model)

    kernel = functools.partial(_ffn_res_ln_kernel, eps=eps)
    return pl.pallas_call(
        kernel,
        out_shape=jax.ShapeDtypeStruct((m, d_model), out_dtype),
        grid=(m // tm,),
        in_specs=[
            pl.BlockSpec((tm, d_model), lambda i: (i, 0)),   # x tile
            _resident_spec((d_model, d_ff)),                 # W1^T
            _resident_spec((1, d_ff)),                       # b1
            _resident_spec((d_ff, d_model)),                 # W2^T
            _resident_spec((1, d_model)),                    # b2
            _resident_spec((1, d_model)),                    # gamma
            _resident_spec((1, d_model)),                    # beta
        ],
        out_specs=pl.BlockSpec((tm, d_model), lambda i: (i, 0)),
        compiler_params=pltpu.CompilerParams(
            dimension_semantics=("parallel",),
            vmem_limit_bytes=_vmem_limit(wbytes + abytes + sbytes)),
    )(x2d, prep["W1_t"], prep["b1"], prep["W2_t"], prep["b2"],
      prep["gamma"], prep["beta"])


# ----------------------------------------------------------------------------
# Weight preparation (pure layout plumbing, outside the kernels)
# ----------------------------------------------------------------------------
def _prep_attn(p, gamma, beta, use_bf16):
    mmdt = jnp.bfloat16 if use_bf16 else jnp.float32
    d_k = p["Wq"].shape[0]
    return {
        # Per-head projection y_h = x_h @ W^T; 1/sqrt(d_k) folded into Wq.
        "Wq_t": (p["Wq"].T / math.sqrt(d_k)).astype(mmdt),
        "Wk_t": p["Wk"].T.astype(mmdt),
        "Wv_t": p["Wv"].T.astype(mmdt),
        "Wo_t": p["Wo"].T.astype(mmdt),
        "bo": p["bo"].reshape(1, -1).astype(jnp.float32),
        "gamma": gamma.reshape(1, -1).astype(jnp.float32),
        "beta": beta.reshape(1, -1).astype(jnp.float32),
    }


def _prep_ffn(w1, b1, w2, b2, gamma, beta, use_bf16):
    mmdt = jnp.bfloat16 if use_bf16 else jnp.float32
    return {
        "W1_t": w1.T.astype(mmdt),
        "b1": b1.reshape(1, -1).astype(jnp.float32),
        "W2_t": w2.T.astype(mmdt),
        "b2": b2.reshape(1, -1).astype(jnp.float32),
        "gamma": gamma.reshape(1, -1).astype(jnp.float32),
        "beta": beta.reshape(1, -1).astype(jnp.float32),
    }


# ----------------------------------------------------------------------------
# Module composition: DecoderBlock = self-attn/LN -> cross-attn/LN -> FFN/LN
# ----------------------------------------------------------------------------
def decoder_block(params, x, key, value, src_mask, tgt_mask, num_heads,
                  use_bf16=False, tgt_causal=False):
    n, lq, d_model = x.shape
    p_self = _prep_attn(params["self_attn"], params["norm_g"],
                        params["norm_b"], use_bf16)
    blk = params["block"]
    p_cross = _prep_attn(blk["attn"], blk["norm1_g"], blk["norm1_b"], use_bf16)
    p_ffn = _prep_ffn(blk["W1"], blk["b1"], blk["W2"], blk["b2"],
                      blk["norm2_g"], blk["norm2_b"], use_bf16)

    # bf16 intermediates between the three calls halve inter-call HBM traffic
    # (biggest payoff on v5e); LN / softmax / residual math stays f32.
    inter_dt = jnp.bfloat16 if use_bf16 else jnp.float32

    # dropout = identity (eval mode)
    query = mha_res_ln(p_self, x, x, x, tgt_mask, num_heads,
                       causal=tgt_causal, out_dtype=inter_dt)          # norm
    x2 = mha_res_ln(p_cross, query, key, value, src_mask, num_heads,
                    out_dtype=inter_dt)                                # norm1
    out = ffn_res_ln(p_ffn, x2.reshape(-1, d_model))                   # norm2
    return out.reshape(n, lq, d_model)


# ----------------------------------------------------------------------------
# Pure-JAX reference (PyTorch semantics, for correctness check)
# ----------------------------------------------------------------------------
def _mha_ref(p, query, key, value, mask, num_heads):
    n, lq, d_model = query.shape
    lk = key.shape[1]
    d_k = d_model // num_heads
    q = query.reshape(n, lq, num_heads, d_k) @ p["Wq"].T
    k = key.reshape(n, lk, num_heads, d_k) @ p["Wk"].T
    v = value.reshape(n, lk, num_heads, d_k) @ p["Wv"].T
    score = jnp.einsum("nqhd,nkhd->nhqk", q, k) / math.sqrt(d_k)
    score = jnp.where(mask == 0, -jnp.inf, score)
    attn = jax.nn.softmax(score, axis=-1)
    ctx = jnp.einsum("nhqk,nkhd->nqhd", attn, v).reshape(n, lq, d_model)
    return ctx @ p["Wo"].T + p["bo"]


def _ln_ref(x, g, b, eps=1e-5):
    mu = jnp.mean(x, axis=-1, keepdims=True)
    var = jnp.mean((x - mu) ** 2, axis=-1, keepdims=True)
    return (x - mu) * jax.lax.rsqrt(var + eps) * g + b


def _decoder_ref(params, x, key, value, src_mask, tgt_mask, num_heads):
    ctx = _mha_ref(params["self_attn"], x, x, x, tgt_mask, num_heads)
    query = _ln_ref(ctx + x, params["norm_g"], params["norm_b"])
    p = params["block"]
    ctx2 = _mha_ref(p["attn"], query, key, value, src_mask, num_heads)
    x2 = _ln_ref(ctx2 + query, p["norm1_g"], p["norm1_b"])
    fwd = jnp.maximum(x2 @ p["W1"].T + p["b1"], 0.0) @ p["W2"].T + p["b2"]
    return _ln_ref(x2 + fwd, p["norm2_g"], p["norm2_b"])


# ----------------------------------------------------------------------------
# Parameter init
# ----------------------------------------------------------------------------
def init_params(rng, d_model, d_ff, num_heads):
    d_k = d_model // num_heads
    ks = jax.random.split(rng, 12)

    def w(k, o, i, s=0.05):
        return jax.random.normal(k, (o, i), jnp.float32) * s

    def vec(k, n, s=0.05):
        return jax.random.normal(k, (n,), jnp.float32) * s

    def mha_params(key):
        k0, k1, k2, k3, k4 = jax.random.split(key, 5)
        return {
            "Wq": w(k0, d_k, d_k), "Wk": w(k1, d_k, d_k), "Wv": w(k2, d_k, d_k),
            "Wo": w(k3, d_model, d_model), "bo": vec(k4, d_model),
        }

    def ln_params(key):
        k0, k1 = jax.random.split(key, 2)
        return (1.0 + 0.1 * jax.random.normal(k0, (d_model,), jnp.float32),
                0.1 * jax.random.normal(k1, (d_model,), jnp.float32))

    ng, nb = ln_params(ks[2])
    n1g, n1b = ln_params(ks[3])
    n2g, n2b = ln_params(ks[4])
    return {
        "self_attn": mha_params(ks[0]),
        "norm_g": ng, "norm_b": nb,
        "block": {
            "attn": mha_params(ks[1]),
            "norm1_g": n1g, "norm1_b": n1b,
            "norm2_g": n2g, "norm2_b": n2b,
            "W1": w(ks[5], d_ff, d_model), "b1": vec(ks[6], d_ff),
            "W2": w(ks[7], d_model, d_ff), "b2": vec(ks[8], d_model),
        },
    }


# ----------------------------------------------------------------------------
if __name__ == "__main__":
    batch, seq, d_model, d_ff, num_heads = 2, 8, 32, 64, 4

    root = jax.random.PRNGKey(0)
    k_par, k_x, k_k, k_v = jax.random.split(root, 4)
    params = init_params(k_par, d_model, d_ff, num_heads)

    x = jax.random.normal(k_x, (batch, seq, d_model), jnp.float32)
    enc_key = jax.random.normal(k_k, (batch, seq, d_model), jnp.float32)
    enc_value = jax.random.normal(k_v, (batch, seq, d_model), jnp.float32)

    # tgt mask: causal; src mask: all ones.  shape (1, 1, Lq, Lk), broadcast.
    tgt_mask = jnp.tril(jnp.ones((seq, seq), jnp.float32))[None, None]
    src_mask = jnp.ones((1, 1, seq, seq), jnp.float32)

    ref = _decoder_ref(params, x, enc_key, enc_value,
                       src_mask, tgt_mask, num_heads)

    # 1) f32 path, explicit masks shipped as additive bf16 bias.
    out = jax.block_until_ready(
        decoder_block(params, x, enc_key, enc_value,
                      src_mask, tgt_mask, num_heads, use_bf16=False))
    assert out.shape == (batch, seq, d_model)
    assert jnp.allclose(out, ref, atol=5e-3, rtol=5e-3), \
        f"f32 max err {jnp.max(jnp.abs(out - ref))}"

    # 2) f32 path, in-kernel causal mask for self-attention (no mask DMA).
    out_c = jax.block_until_ready(
        decoder_block(params, x, enc_key, enc_value,
                      src_mask, tgt_mask, num_heads, use_bf16=False,
                      tgt_causal=True))
    assert jnp.allclose(out_c, ref, atol=5e-3, rtol=5e-3), \
        f"causal max err {jnp.max(jnp.abs(out_c - ref))}"

    # 3) bf16 matmul operands + bf16 intermediates (MXU / HBM friendly).
    out_bf16 = jax.block_until_ready(
        decoder_block(params, x, enc_key, enc_value,
                      src_mask, tgt_mask, num_heads, use_bf16=True,
                      tgt_causal=True))
    assert jnp.all(jnp.isfinite(out_bf16))
    assert jnp.allclose(out_bf16, ref, atol=3e-1, rtol=3e-1), \
        f"bf16 max err {jnp.max(jnp.abs(out_bf16 - ref))}"

    print("KERNEL_OK")
</pallas_src>

<mosaic_0001>
module attributes {stable_mosaic.version = 11 : i64} {
  func.func @_probe(%arg0: i32, %arg1: memref<8x128xf32, #tpu.memory_space<vmem>>, %arg2: memref<8x128xf32, #tpu.memory_space<vmem>>, %arg3: memref<8x128xf32, #tpu.memory_space<vmem>>) attributes {dimension_semantics = [#tpu.dimension_semantics<arbitrary>], iteration_bounds = array<i64: 2>, scalar_prefetch = 0 : i64, scratch_operands = 0 : i64, tpu.core_type = #tpu.core_type<tc>, window_params = [{transform_indices = @transform_0, window_bounds = array<i64: 8, 128>}, {pipeline_mode = #tpu.pipeline_mode<synchronous>, transform_indices = @transform_1, window_bounds = array<i64: 8, 128>}, {transform_indices = @transform_2, window_bounds = array<i64: 8, 128>}]} {
    %c0 = arith.constant 0 : index
    %c0_0 = arith.constant 0 : index
    %0 = vector.load %arg1[%c0, %c0_0] : memref<8x128xf32, #tpu.memory_space<vmem>>, vector<8x128xf32>
    %c0_1 = arith.constant 0 : index
    %c0_2 = arith.constant 0 : index
    %1 = vector.load %arg2[%c0_1, %c0_2] : memref<8x128xf32, #tpu.memory_space<vmem>>, vector<8x128xf32>
    %2 = arith.addf %0, %1 : vector<8x128xf32>
    %c0_3 = arith.constant 0 : index
    %c0_4 = arith.constant 0 : index
    %3 = vector.load %arg3[%c0_3, %c0_4] : memref<8x128xf32, #tpu.memory_space<vmem>>, vector<8x128xf32>
    tpu.vector_store %arg3[%c0_3, %c0_4], %2 {strides = array<i32>} : memref<8x128xf32, #tpu.memory_space<vmem>>, vector<8x128xf32>,
    return
  }
  func.func @transform_0(%arg0: i32) -> (i32, i32) {
    %c0_i32 = arith.constant 0 : i32
    %c0_i32_0 = arith.constant 0 : i32
    return %arg0, %c0_i32 : i32, i32
  }
  func.func @transform_1(%arg0: i32) -> (i32, i32) {
    %c0_i32 = arith.constant 0 : i32
    %c0_i32_0 = arith.constant 0 : i32
    %c0_i32_1 = arith.constant 0 : i32
    return %c0_i32, %c0_i32_0 : i32, i32
  }
  func.func @transform_2(%arg0: i32) -> (i32, i32) {
    %c0_i32 = arith.constant 0 : i32
    %c0_i32_0 = arith.constant 0 : i32
    return %arg0, %c0_i32 : i32, i32
  }
}

module attributes {stable_mosaic.version = 11 : i64} {
  func.func @_mha_res_ln_kernel(%arg0: i32, %arg1: i32, %arg2: memref<1x8x32xf32, #tpu.memory_space<vmem>>, %arg3: memref<1x8x32xf32, #tpu.memory_space<vmem>>, %arg4: memref<1x8x32xf32, #tpu.memory_space<vmem>>, %arg5: memref<1x1x8x8xbf16, #tpu.memory_space<vmem>>, %arg6: memref<8x8xf32, #tpu.memory_space<vmem>>, %arg7: memref<8x8xf32, #tpu.memory_space<vmem>>, %arg8: memref<8x8xf32, #tpu.memory_space<vmem>>, %arg9: memref<32x32xf32, #tpu.memory_space<vmem>>, %arg10: memref<1x32xf32, #tpu.memory_space<vmem>>, %arg11: memref<1x32xf32, #tpu.memory_space<vmem>>, %arg12: memref<1x32xf32, #tpu.memory_space<vmem>>, %arg13: memref<1x8x32xf32, #tpu.memory_space<vmem>>) attributes {dimension_semantics = [#tpu.dimension_semantics<parallel>, #tpu.dimension_semantics<parallel>], iteration_bounds = array<i64: 2, 1>, scalar_prefetch = 0 : i64, scratch_operands = 0 : i64, tpu.core_type = #tpu.core_type<tc>, window_params = [{transform_indices = @transform_0, window_bounds = array<i64: 1, 8, 32>}, {transform_indices = @transform_1, window_bounds = array<i64: 1, 8, 32>}, {transform_indices = @transform_2, window_bounds = array<i64: 1, 8, 32>}, {transform_indices = @transform_3, window_bounds = array<i64: 1, 1, 8, 8>}, {pipeline_mode = #tpu.pipeline_mode<synchronous>, transform_indices = @transform_4, window_bounds = array<i64: 8, 8>}, {pipeline_mode = #tpu.pipeline_mode<synchronous>, transform_indices = @transform_5, window_bounds = array<i64: 8, 8>}, {pipeline_mode = #tpu.pipeline_mode<synchronous>, transform_indices = @transform_6, window_bounds = array<i64: 8, 8>}, {pipeline_mode = #tpu.pipeline_mode<synchronous>, transform_indices = @transform_7, window_bounds = array<i64: 32, 32>}, {pipeline_mode = #tpu.pipeline_mode<synchronous>, transform_indices = @transform_8, window_bounds = array<i64: 1, 32>}, {pipeline_mode = #tpu.pipeline_mode<synchronous>, transform_indices = @transform_9, window_bounds = array<i64: 1, 32>}, {pipeline_mode = #tpu.pipeline_mode<synchronous>, transform_indices = @transform_10, window_bounds = array<i64: 1, 32>}, {transform_indices = @transform_11, window_bounds = array<i64: 1, 8, 32>}]} {
    %c0 = arith.constant 0 : index
    %c0_0 = arith.constant 0 : index
    %c0_1 = arith.constant 0 : index
    %0 = vector.load %arg2[%c0, %c0_0, %c0_1] : memref<1x8x32xf32, #tpu.memory_space<vmem>>, vector<1x8x32xf32>
    %1 = vector.shape_cast %0 : vector<1x8x32xf32> to vector<8x32xf32>
    %c0_2 = arith.constant 0 : index
    %c0_3 = arith.constant 0 : index
    %c0_4 = arith.constant 0 : index
    %2 = vector.load %arg3[%c0_2, %c0_3, %c0_4] : memref<1x8x32xf32, #tpu.memory_space<vmem>>, vector<1x8x32xf32>
    %3 = vector.shape_cast %2 : vector<1x8x32xf32> to vector<8x32xf32>
    %c0_5 = arith.constant 0 : index
    %c0_6 = arith.constant 0 : index
    %c0_7 = arith.constant 0 : index
    %4 = vector.load %arg4[%c0_5, %c0_6, %c0_7] : memref<1x8x32xf32, #tpu.memory_space<vmem>>, vector<1x8x32xf32>
    %5 = vector.shape_cast %4 : vector<1x8x32xf32> to vector<8x32xf32>
    %c0_8 = arith.constant 0 : index
    %c0_9 = arith.constant 0 : index
    %6 = vector.load %arg9[%c0_8, %c0_9] : memref<32x32xf32, #tpu.memory_space<vmem>>, vector<32x32xf32>
    %cst = arith.constant 0.000000e+00 : f32
    %7 = vector.broadcast %cst : f32 to vector<8x32xf32>
    %8 = vector.extract_strided_slice %1 {offsets = [0, 0], sizes = [8, 8], strides = [1, 1]} : vector<8x32xf32> to vector<8x8xf32>
    %c0_10 = arith.constant 0 : index
    %c0_11 = arith.constant 0 : index
    %9 = vector.load %arg6[%c0_10, %c0_11] : memref<8x8xf32, #tpu.memory_space<vmem>>, vector<8x8xf32>
    %cst_12 = arith.constant dense<0.000000e+00> : vector<8x8xf32>
    %10 = tpu.matmul %8, %9, %cst_12 {dimension_numbers = #tpu.dot_dimension_numbers<[1], [0], [0], [1], [0, 0, 1, 1], [], []>} : vector<8x8xf32>, vector<8x8xf32>, vector<8x8xf32> -> vector<8x8xf32>
    %11 = vector.extract_strided_slice %3 {offsets = [0, 0], sizes = [8, 8], strides = [1, 1]} : vector<8x32xf32> to vector<8x8xf32>
    %c0_13 = arith.constant 0 : index
    %c0_14 = arith.constant 0 : index
    %12 = vector.load %arg7[%c0_13, %c0_14] : memref<8x8xf32, #tpu.memory_space<vmem>>, vector<8x8xf32>
    %cst_15 = arith.constant dense<0.000000e+00> : vector<8x8xf32>
    %13 = tpu.matmul %11, %12, %cst_15 {dimension_numbers = #tpu.dot_dimension_numbers<[1], [0], [0], [1], [0, 0, 1, 1], [], []>} : vector<8x8xf32>, vector<8x8xf32>, vector<8x8xf32> -> vector<8x8xf32>
    %14 = vector.extract_strided_slice %5 {offsets = [0, 0], sizes = [8, 8], strides = [1, 1]} : vector<8x32xf32> to vector<8x8xf32>
    %c0_16 = arith.constant 0 : index
    %c0_17 = arith.constant 0 : index
    %15 = vector.load %arg8[%c0_16, %c0_17] : memref<8x8xf32, #tpu.memory_space<vmem>>, vector<8x8xf32>
    %cst_18 = arith.constant dense<0.000000e+00> : vector<8x8xf32>
    %16 = tpu.matmul %14, %15, %cst_18 {dimension_numbers = #tpu.dot_dimension_numbers<[1], [0], [0], [1], [0, 0, 1, 1], [], []>} : vector<8x8xf32>, vector<8x8xf32>, vector<8x8xf32> -> vector<8x8xf32>
    %cst_19 = arith.constant dense<0.000000e+00> : vector<8x8xf32>
    %17 = tpu.matmul %10, %13, %cst_19 {dimension_numbers = #tpu.dot_dimension_numbers<[1], [1], [0], [0], [0, 0, 1, 0], [], []>} : vector<8x8xf32>, vector<8x8xf32>, vector<8x8xf32> -> vector<8x8xf32>
    %c0_20 = arith.constant 0 : index
    %c0_21 = arith.constant 0 : index
    %c0_22 = arith.constant 0 : index
    %c0_23 = arith.constant 0 : index
    %18 = vector.load %arg5[%c0_20, %c0_21, %c0_22, %c0_23] : memref<1x1x8x8xbf16, #tpu.memory_space<vmem>>, vector<1x1x8x8xbf16>
    %19 = vector.shape_cast %18 : vector<1x1x8x8xbf16> to vector<8x8xbf16>
    %20 = arith.extf %19 : vector<8x8xbf16> to vector<8x8xf32>
    %21 = arith.addf %17, %20 : vector<8x8xf32>
    %cst_24 = arith.constant dense<0xFF800000> : vector<8xf32>
    %22 = vector.multi_reduction <maximumf>, %21, %cst_24 [1] : vector<8x8xf32> to vector<8xf32>
    %23 = vector.shape_cast %22 : vector<8xf32> to vector<8x1xf32>
    %24 = vector.broadcast %23 : vector<8x1xf32> to vector<8x8xf32>
    %25 = arith.subf %21, %24 : vector<8x8xf32>
    %26 = math.exp %25 : vector<8x8xf32>
    %cst_25 = arith.constant dense<0.000000e+00> : vector<8xf32>
    %27 = vector.multi_reduction <add>, %26, %cst_25 [1] : vector<8x8xf32> to vector<8xf32>
    %28 = vector.shape_cast %27 : vector<8xf32> to vector<8x1xf32>
    %29 = tpu.reciprocal %28 {approx = true} : vector<8x1xf32> -> vector<8x1xf32>
    %30 = vector.broadcast %29 : vector<8x1xf32> to vector<8x8xf32>
    %31 = arith.mulf %26, %30 : vector<8x8xf32>
    %cst_26 = arith.constant dense<0.000000e+00> : vector<8x8xf32>
    %32 = tpu.matmul %31, %16, %cst_26 {dimension_numbers = #tpu.dot_dimension_numbers<[1], [0], [0], [1], [0, 0, 1, 1], [], []>} : vector<8x8xf32>, vector<8x8xf32>, vector<8x8xf32> -> vector<8x8xf32>
    %33 = vector.extract_strided_slice %6 {offsets = [0, 0], sizes = [8, 32], strides = [1, 1]} : vector<32x32xf32> to vector<8x32xf32>
    %cst_27 = arith.constant dense<0.000000e+00> : vector<8x32xf32>
    %34 = tpu.matmul %32, %33, %cst_27 {dimension_numbers = #tpu.dot_dimension_numbers<[1], [0], [0], [1], [0, 0, 1, 1], [], []>} : vector<8x8xf32>, vector<8x32xf32>, vector<8x32xf32> -> vector<8x32xf32>
    %35 = arith.addf %7, %34 : vector<8x32xf32>
    %36 = vector.extract_strided_slice %1 {offsets = [0, 8], sizes = [8, 8], strides = [1, 1]} : vector<8x32xf32> to vector<8x8xf32>
    %c0_28 = arith.constant 0 : index
    %c0_29 = arith.constant 0 : index
    %37 = vector.load %arg6[%c0_28, %c0_29] : memref<8x8xf32, #tpu.memory_space<vmem>>, vector<8x8xf32>
    %cst_30 = arith.constant dense<0.000000e+00> : vector<8x8xf32>
    %38 = tpu.matmul %36, %37, %cst_30 {dimension_numbers = #tpu.dot_dimension_numbers<[1], [0], [0], [1], [0, 0, 1, 1], [], []>} : vector<8x8xf32>, vector<8x8xf32>, vector<8x8xf32> -> vector<8x8xf32>
    %39 = vector.extract_strided_slice %3 {offsets = [0, 8], sizes = [8, 8], strides = [1, 1]} : vector<8x32xf32> to vector<8x8xf32>
    %c0_31 = arith.constant 0 : index
    %c0_32 = arith.constant 0 : index
    %40 = vector.load %arg7[%c0_31, %c0_32] : memref<8x8xf32, #tpu.memory_space<vmem>>, vector<8x8xf32>
    %cst_33 = arith.constant dense<0.000000e+00> : vector<8x8xf32>
    %41 = tpu.matmul %39, %40, %cst_33 {dimension_numbers = #tpu.dot_dimension_numbers<[1], [0], [0], [1], [0, 0, 1, 1], [], []>} : vector<8x8xf32>, vector<8x8xf32>, vector<8x8xf32> -> vector<8x8xf32>
    %42 = vector.extract_strided_slice %5 {offsets = [0, 8], sizes = [8, 8], strides = [1, 1]} : vector<8x32xf32> to vector<8x8xf32>
    %c0_34 = arith.constant 0 : index
    %c0_35 = arith.constant 0 : index
    %43 = vector.load %arg8[%c0_34, %c0_35] : memref<8x8xf32, #tpu.memory_space<vmem>>, vector<8x8xf32>
    %cst_36 = arith.constant dense<0.000000e+00> : vector<8x8xf32>
    %44 = tpu.matmul %42, %43, %cst_36 {dimension_numbers = #tpu.dot_dimension_numbers<[1], [0], [0], [1], [0, 0, 1, 1], [], []>} : vector<8x8xf32>, vector<8x8xf32>, vector<8x8xf32> -> vector<8x8xf32>
    %cst_37 = arith.constant dense<0.000000e+00> : vector<8x8xf32>
    %45 = tpu.matmul %38, %41, %cst_37 {dimension_numbers = #tpu.dot_dimension_numbers<[1], [1], [0], [0], [0, 0, 1, 0], [], []>} : vector<8x8xf32>, vector<8x8xf32>, vector<8x8xf32> -> vector<8x8xf32>
    %c0_38 = arith.constant 0 : index
    %c0_39 = arith.constant 0 : index
    %c0_40 = arith.constant 0 : index
    %c0_41 = arith.constant 0 : index
    %46 = vector.load %arg5[%c0_38, %c0_39, %c0_40, %c0_41] : memref<1x1x8x8xbf16, #tpu.memory_space<vmem>>, vector<1x1x8x8xbf16>
    %47 = vector.shape_cast %46 : vector<1x1x8x8xbf16> to vector<8x8xbf16>
    %48 = arith.extf %47 : vector<8x8xbf16> to vector<8x8xf32>
    %49 = arith.addf %45, %48 : vector<8x8xf32>
    %cst_42 = arith.constant dense<0xFF800000> : vector<8xf32>
    %50 = vector.multi_reduction <maximumf>, %49, %cst_42 [1] : vector<8x8xf32> to vector<8xf32>
    %51 = vector.shape_cast %50 : vector<8xf32> to vector<8x1xf32>
    %52 = vector.broadcast %51 : vector<8x1xf32> to vector<8x8xf32>
    %53 = arith.subf %49, %52 : vector<8x8xf32>
    %54 = math.exp %53 : vector<8x8xf32>
    %cst_43 = arith.constant dense<0.000000e+00> : vector<8xf32>
    %55 = vector.multi_reduction <add>, %54, %cst_43 [1] : vector<8x8xf32> to vector<8xf32>
    %56 = vector.shape_cast %55 : vector<8xf32> to vector<8x1xf32>
    %57 = tpu.reciprocal %56 {approx = true} : vector<8x1xf32> -> vector<8x1xf32>
    %58 = vector.broadcast %57 : vector<8x1xf32> to vector<8x8xf32>
    %59 = arith.mulf %54, %58 : vector<8x8xf32>
    %cst_44 = arith.constant dense<0.000000e+00> : vector<8x8xf32>
    %60 = tpu.matmul %59, %44, %cst_44 {dimension_numbers = #tpu.dot_dimension_numbers<[1], [0], [0], [1], [0, 0, 1, 1], [], []>} : vector<8x8xf32>, vector<8x8xf32>, vector<8x8xf32> -> vector<8x8xf32>
    %61 = vector.extract_strided_slice %6 {offsets = [8, 0], sizes = [8, 32], strides = [1, 1]} : vector<32x32xf32> to vector<8x32xf32>
    %cst_45 = arith.constant dense<0.000000e+00> : vector<8x32xf32>
    %62 = tpu.matmul %60, %61, %cst_45 {dimension_numbers = #tpu.dot_dimension_numbers<[1], [0], [0], [1], [0, 0, 1, 1], [], []>} : vector<8x8xf32>, vector<8x32xf32>, vector<8x32xf32> -> vector<8x32xf32>
    %63 = arith.addf %35, %62 : vector<8x32xf32>
    %64 = vector.extract_strided_slice %1 {offsets = [0, 16], sizes = [8, 8], strides = [1, 1]} : vector<8x32xf32> to vector<8x8xf32>
    %c0_46 = arith.constant 0 : index
    %c0_47 = arith.constant 0 : index
    %65 = vector.load %arg6[%c0_46, %c0_47] : memref<8x8xf32, #tpu.memory_space<vmem>>, vector<8x8xf32>
    %cst_48 = arith.constant dense<0.000000e+00> : vector<8x8xf32>
    %66 = tpu.matmul %64, %65, %cst_48 {dimension_numbers = #tpu.dot_dimension_numbers<[1], [0], [0], [1], [0, 0, 1, 1], [], []>} : vector<8x8xf32>, vector<8x8xf32>, vector<8x8xf32> -> vector<8x8xf32>
    %67 = vector.extract_strided_slice %3 {offsets = [0, 16], sizes = [8, 8], strides = [1, 1]} : vector<8x32xf32> to vector<8x8xf32>
    %c0_49 = arith.constant 0 : index
    %c0_50 = arith.constant 0 : index
    %68 = vector.load %arg7[%c0_49, %c0_50] : memref<8x8xf32, #tpu.memory_space<vmem>>, vector<8x8xf32>
    %cst_51 = arith.constant dense<0.000000e+00> : vector<8x8xf32>
    %69 = tpu.matmul %67, %68, %cst_51 {dimension_numbers = #tpu.dot_dimension_numbers<[1], [0], [0], [1], [0, 0, 1, 1], [], []>} : vector<8x8xf32>, vector<8x8xf32>, vector<8x8xf32> -> vector<8x8xf32>
    %70 = vector.extract_strided_slice %5 {offsets = [0, 16], sizes = [8, 8], strides = [1, 1]} : vector<8x32xf32> to vector<8x8xf32>
    %c0_52 = arith.constant 0 : index
    %c0_53 = arith.constant 0 : index
    %71 = vector.load %arg8[%c0_52, %c0_53] : memref<8x8xf32, #tpu.memory_space<vmem>>, vector<8x8xf32>
    %cst_54 = arith.constant dense<0.000000e+00> : vector<8x8xf32>
    %72 = tpu.matmul %70, %71, %cst_54 {dimension_numbers = #tpu.dot_dimension_numbers<[1], [0], [0], [1], [0, 0, 1, 1], [], []>} : vector<8x8xf32>, vector<8x8xf32>, vector<8x8xf32> -> vector<8x8xf32>
    %cst_55 = arith.constant dense<0.000000e+00> : vector<8x8xf32>
    %73 = tpu.matmul %66, %69, %cst_55 {dimension_numbers = #tpu.dot_dimension_numbers<[1], [1], [0], [0], [0, 0, 1, 0], [], []>} : vector<8x8xf32>, vector<8x8xf32>, vector<8x8xf32> -> vector<8x8xf32>
    %c0_56 = arith.constant 0 : index
    %c0_57 = arith.constant 0 : index
    %c0_58 = arith.constant 0 : index
    %c0_59 = arith.constant 0 : index
    %74 = vector.load %arg5[%c0_56, %c0_57, %c0_58, %c0_59] : memref<1x1x8x8xbf16, #tpu.memory_space<vmem>>, vector<1x1x8x8xbf16>
    %75 = vector.shape_cast %74 : vector<1x1x8x8xbf16> to vector<8x8xbf16>
    %76 = arith.extf %75 : vector<8x8xbf16> to vector<8x8xf32>
    %77 = arith.addf %73, %76 : vector<8x8xf32>
    %cst_60 = arith.constant dense<0xFF800000> : vector<8xf32>
    %78 = vector.multi_reduction <maximumf>, %77, %cst_60 [1] : vector<8x8xf32> to vector<8xf32>
    %79 = vector.shape_cast %78 : vector<8xf32> to vector<8x1xf32>
    %80 = vector.broadcast %79 : vector<8x1xf32> to vector<8x8xf32>
    %81 = arith.subf %77, %80 : vector<8x8xf32>
    %82 = math.exp %81 : vector<8x8xf32>
    %cst_61 = arith.constant dense<0.000000e+00> : vector<8xf32>
    %83 = vector.multi_reduction <add>, %82, %cst_61 [1] : vector<8x8xf32> to vector<8xf32>
    %84 = vector.shape_cast %83 : vector<8xf32> to vector<8x1xf32>
    %85 = tpu.reciprocal %84 {approx = true} : vector<8x1xf32> -> vector<8x1xf32>
    %86 = vector.broadcast %85 : vector<8x1xf32> to vector<8x8xf32>
    %87 = arith.mulf %82, %86 : vector<8x8xf32>
    %cst_62 = arith.constant dense<0.000000e+00> : vector<8x8xf32>
    %88 = tpu.matmul %87, %72, %cst_62 {dimension_numbers = #tpu.dot_dimension_numbers<[1], [0], [0], [1], [0, 0, 1, 1], [], []>} : vector<8x8xf32>, vector<8x8xf32>, vector<8x8xf32> -> vector<8x8xf32>
    %89 = vector.extract_strided_slice %6 {offsets = [16, 0], sizes = [8, 32], strides = [1, 1]} : vector<32x32xf32> to vector<8x32xf32>
    %cst_63 = arith.constant dense<0.000000e+00> : vector<8x32xf32>
    %90 = tpu.matmul %88, %89, %cst_63 {dimension_numbers = #tpu.dot_dimension_numbers<[1], [0], [0], [1], [0, 0, 1, 1], [], []>} : vector<8x8xf32>, vector<8x32xf32>, vector<8x32xf32> -> vector<8x32xf32>
    %91 = arith.addf %63, %90 : vector<8x32xf32>
    %92 = vector.extract_strided_slice %1 {offsets = [0, 24], sizes = [8, 8], strides = [1, 1]} : vector<8x32xf32> to vector<8x8xf32>
    %c0_64 = arith.constant 0 : index
    %c0_65 = arith.constant 0 : index
    %93 = vector.load %arg6[%c0_64, %c0_65] : memref<8x8xf32, #tpu.memory_space<vmem>>, vector<8x8xf32>
    %cst_66 = arith.constant dense<0.000000e+00> : vector<8x8xf32>
    %94 = tpu.matmul %92, %93, %cst_66 {dimension_numbers = #tpu.dot_dimension_numbers<[1], [0], [0], [1], [0, 0, 1, 1], [], []>} : vector<8x8xf32>, vector<8x8xf32>, vector<8x8xf32> -> vector<8x8xf32>
    %95 = vector.extract_strided_slice %3 {offsets = [0, 24], sizes = [8, 8], strides = [1, 1]} : vector<8x32xf32> to vector<8x8xf32>
    %c0_67 = arith.constant 0 : index
    %c0_68 = arith.constant 0 : index
    %96 = vector.load %arg7[%c0_67, %c0_68] : memref<8x8xf32, #tpu.memory_space<vmem>>, vector<8x8xf32>
    %cst_69 = arith.constant dense<0.000000e+00> : vector<8x8xf32>
    %97 = tpu.matmul %95, %96, %cst_69 {dimension_numbers = #tpu.dot_dimension_numbers<[1], [0], [0], [1], [0, 0, 1, 1], [], []>} : vector<8x8xf32>, vector<8x8xf32>, vector<8x8xf32> -> vector<8x8xf32>
    %98 = vector.extract_strided_slice %5 {offsets = [0, 24], sizes = [8, 8], strides = [1, 1]} : vector<8x32xf32> to vector<8x8xf32>
    %c0_70 = arith.constant 0 : index
    %c0_71 = arith.constant 0 : index
    %99 = vector.load %arg8[%c0_70, %c0_71] : memref<8x8xf32, #tpu.memory_space<vmem>>, vector<8x8xf32>
    %cst_72 = arith.constant dense<0.000000e+00> : vector<8x8xf32>
    %100 = tpu.matmul %98, %99, %cst_72 {dimension_numbers = #tpu.dot_dimension_numbers<[1], [0], [0], [1], [0, 0, 1, 1], [], []>} : vector<8x8xf32>, vector<8x8xf32>, vector<8x8xf32> -> vector<8x8xf32>
    %cst_73 = arith.constant dense<0.000000e+00> : vector<8x8xf32>
    %101 = tpu.matmul %94, %97, %cst_73 {dimension_numbers = #tpu.dot_dimension_numbers<[1], [1], [0], [0], [0, 0, 1, 0], [], []>} : vector<8x8xf32>, vector<8x8xf32>, vector<8x8xf32> -> vector<8x8xf32>
    %c0_74 = arith.constant 0 : index
    %c0_75 = arith.constant 0 : index
    %c0_76 = arith.constant 0 : index
    %c0_77 = arith.constant 0 : index
    %102 = vector.load %arg5[%c0_74, %c0_75, %c0_76, %c0_77] : memref<1x1x8x8xbf16, #tpu.memory_space<vmem>>, vector<1x1x8x8xbf16>
    %103 = vector.shape_cast %102 : vector<1x1x8x8xbf16> to vector<8x8xbf16>
    %104 = arith.extf %103 : vector<8x8xbf16> to vector<8x8xf32>
    %105 = arith.addf %101, %104 : vector<8x8xf32>
    %cst_78 = arith.constant dense<0xFF800000> : vector<8xf32>
    %106 = vector.multi_reduction <maximumf>, %105, %cst_78 [1] : vector<8x8xf32> to vector<8xf32>
    %107 = vector.shape_cast %106 : vector<8xf32> to vector<8x1xf32>
    %108 = vector.broadcast %107 : vector<8x1xf32> to vector<8x8xf32>
    %109 = arith.subf %105, %108 : vector<8x8xf32>
    %110 = math.exp %109 : vector<8x8xf32>
    %cst_79 = arith.constant dense<0.000000e+00> : vector<8xf32>
    %111 = vector.multi_reduction <add>, %110, %cst_79 [1] : vector<8x8xf32> to vector<8xf32>
    %112 = vector.shape_cast %111 : vector<8xf32> to vector<8x1xf32>
    %113 = tpu.reciprocal %112 {approx = true} : vector<8x1xf32> -> vector<8x1xf32>
    %114 = vector.broadcast %113 : vector<8x1xf32> to vector<8x8xf32>
    %115 = arith.mulf %110, %114 : vector<8x8xf32>
    %cst_80 = arith.constant dense<0.000000e+00> : vector<8x8xf32>
    %116 = tpu.matmul %115, %100, %cst_80 {dimension_numbers = #tpu.dot_dimension_numbers<[1], [0], [0], [1], [0, 0, 1, 1], [], []>} : vector<8x8xf32>, vector<8x8xf32>, vector<8x8xf32> -> vector<8x8xf32>
    %117 = vector.extract_strided_slice %6 {offsets = [24, 0], sizes = [8, 32], strides = [1, 1]} : vector<32x32xf32> to vector<8x32xf32>
    %cst_81 = arith.constant dense<0.000000e+00> : vector<8x32xf32>
    %118 = tpu.matmul %116, %117, %cst_81 {dimension_numbers = #tpu.dot_dimension_numbers<[1], [0], [0], [1], [0, 0, 1, 1], [], []>} : vector<8x8xf32>, vector<8x32xf32>, vector<8x32xf32> -> vector<8x32xf32>
    %119 = arith.addf %91, %118 : vector<8x32xf32>
    %c0_82 = arith.constant 0 : index
    %c0_83 = arith.constant 0 : index
    %120 = vector.load %arg10[%c0_82, %c0_83] : memref<1x32xf32, #tpu.memory_space<vmem>>, vector<1x32xf32>
    %121 = vector.broadcast %120 : vector<1x32xf32> to vector<8x32xf32>
    %122 = arith.addf %119, %121 : vector<8x32xf32>
    %123 = arith.addf %122, %1 : vector<8x32xf32>
    %cst_84 = arith.constant dense<0.000000e+00> : vector<8xf32>
    %124 = vector.multi_reduction <add>, %123, %cst_84 [1] : vector<8x32xf32> to vector<8xf32>
    %125 = vector.shape_cast %124 : vector<8xf32> to vector<8x1xf32>
    %cst_85 = arith.constant 3.200000e+01 : f32
    %126 = vector.broadcast %cst_85 : f32 to vector<8x1xf32>
    %127 = arith.divf %125, %126 : vector<8x1xf32>
    %128 = vector.broadcast %127 : vector<8x1xf32> to vector<8x32xf32>
    %129 = arith.subf %123, %128 : vector<8x32xf32>
    %130 = arith.mulf %129, %129 : vector<8x32xf32>
    %cst_86 = arith.constant dense<0.000000e+00> : vector<8xf32>
    %131 = vector.multi_reduction <add>, %130, %cst_86 [1] : vector<8x32xf32> to vector<8xf32>
    %132 = vector.shape_cast %131 : vector<8xf32> to vector<8x1xf32>
    %cst_87 = arith.constant 3.200000e+01 : f32
    %133 = vector.broadcast %cst_87 : f32 to vector<8x1xf32>
    %134 = arith.divf %132, %133 : vector<8x1xf32>
    %135 = vector.broadcast %127 : vector<8x1xf32> to vector<8x32xf32>
    %136 = arith.subf %123, %135 : vector<8x32xf32>
    %cst_88 = arith.constant 9.99999974E-6 : f32
    %137 = vector.broadcast %cst_88 : f32 to vector<8x1xf32>
    %138 = arith.addf %134, %137 : vector<8x1xf32>
    %139 = math.rsqrt %138 : vector<8x1xf32>
    %140 = vector.broadcast %139 : vector<8x1xf32> to vector<8x32xf32>
    %141 = arith.mulf %136, %140 : vector<8x32xf32>
    %c0_89 = arith.constant 0 : index
    %c0_90 = arith.constant 0 : index
    %142 = vector.load %arg11[%c0_89, %c0_90] : memref<1x32xf32, #tpu.memory_space<vmem>>, vector<1x32xf32>
    %143 = vector.broadcast %142 : vector<1x32xf32> to vector<8x32xf32>
    %144 = arith.mulf %141, %143 : vector<8x32xf32>
    %c0_91 = arith.constant 0 : index
    %c0_92 = arith.constant 0 : index
    %145 = vector.load %arg12[%c0_91, %c0_92] : memref<1x32xf32, #tpu.memory_space<vmem>>, vector<1x32xf32>
    %146 = vector.broadcast %145 : vector<1x32xf32> to vector<8x32xf32>
    %147 = arith.addf %144, %146 : vector<8x32xf32>
    %c0_93 = arith.constant 0 : index
    %c0_94 = arith.constant 0 : index
    %c0_95 = arith.constant 0 : index
    %148 = vector.load %arg13[%c0_93, %c0_94, %c0_95] : memref<1x8x32xf32, #tpu.memory_space<vmem>>, vector<1x8x32xf32>
    %149 = vector.shape_cast %148 : vector<1x8x32xf32> to vector<8x32xf32>
    %150 = vector.shape_cast %147 : vector<8x32xf32> to vector<1x8x32xf32>
    tpu.vector_store %arg13[%c0_93, %c0_94, %c0_95], %150 {strides = array<i32>} : memref<1x8x32xf32, #tpu.memory_space<vmem>>, vector<1x8x32xf32>,
    return
  }
  func.func @transform_0(%arg0: i32, %arg1: i32) -> (i32, i32, i32) {
    %c0_i32 = arith.constant 0 : i32
    %c0_i32_0 = arith.constant 0 : i32
    return %arg0, %arg1, %c0_i32 : i32, i32, i32
  }
  func.func @transform_1(%arg0: i32, %arg1: i32) -> (i32, i32, i32) {
    %c0_i32 = arith.constant 0 : i32
    %c0_i32_0 = arith.constant 0 : i32
    %c0_i32_1 = arith.constant 0 : i32
    return %arg0, %c0_i32, %c0_i32_0 : i32, i32, i32
  }
  func.func @transform_2(%arg0: i32, %arg1: i32) -> (i32, i32, i32) {
    %c0_i32 = arith.constant 0 : i32
    %c0_i32_0 = arith.constant 0 : i32
    %c0_i32_1 = arith.constant 0 : i32
    return %arg0, %c0_i32, %c0_i32_0 : i32, i32, i32
  }
  func.func @transform_3(%arg0: i32, %arg1: i32) -> (i32, i32, i32, i32) {
    %c0_i32 = arith.constant 0 : i32
    %c0_i32_0 = arith.constant 0 : i32
    %c0_i32_1 = arith.constant 0 : i32
    %c0_i32_2 = arith.constant 0 : i32
    return %c0_i32, %c0_i32_0, %arg1, %c0_i32_1 : i32, i32, i32, i32
  }
  func.func @transform_4(%arg0: i32, %arg1: i32) -> (i32, i32) {
    %c0_i32 = arith.constant 0 : i32
    %c0_i32_0 = arith.constant 0 : i32
    %c0_i32_1 = arith.constant 0 : i32
    return %c0_i32, %c0_i32_0 : i32, i32
  }
  func.func @transform_5(%arg0: i32, %arg1: i32) -> (i32, i32) {
    %c0_i32 = arith.constant 0 : i32
    %c0_i32_0 = arith.constant 0 : i32
    %c0_i32_1 = arith.constant 0 : i32
    return %c0_i32, %c0_i32_0 : i32, i32
  }
  func.func @transform_6(%arg0: i32, %arg1: i32) -> (i32, i32) {
    %c0_i32 = arith.constant 0 : i32
    %c0_i32_0 = arith.constant 0 : i32
    %c0_i32_1 = arith.constant 0 : i32
    return %c0_i32, %c0_i32_0 : i32, i32
  }
  func.func @transform_7(%arg0: i32, %arg1: i32) -> (i32, i32) {
    %c0_i32 = arith.constant 0 : i32
    %c0_i32_0 = arith.constant 0 : i32
    %c0_i32_1 = arith.constant 0 : i32
    return %c0_i32, %c0_i32_0 : i32, i32
  }
  func.func @transform_8(%arg0: i32, %arg1: i32) -> (i32, i32) {
    %c0_i32 = arith.constant 0 : i32
    %c0_i32_0 = arith.constant 0 : i32
    %c0_i32_1 = arith.constant 0 : i32
    return %c0_i32, %c0_i32_0 : i32, i32
  }
  func.func @transform_9(%arg0: i32, %arg1: i32) -> (i32, i32) {
    %c0_i32 = arith.constant 0 : i32
    %c0_i32_0 = arith.constant 0 : i32
    %c0_i32_1 = arith.constant 0 : i32
    return %c0_i32, %c0_i32_0 : i32, i32
  }
  func.func @transform_10(%arg0: i32, %arg1: i32) -> (i32, i32) {
    %c0_i32 = arith.constant 0 : i32
    %c0_i32_0 = arith.constant 0 : i32
    %c0_i32_1 = arith.constant 0 : i32
    return %c0_i32, %c0_i32_0 : i32, i32
  }
  func.func @transform_11(%arg0: i32, %arg1: i32) -> (i32, i32, i32) {
    %c0_i32 = arith.constant 0 : i32
    %c0_i32_0 = arith.constant 0 : i32
    return %arg0, %arg1, %c0_i32 : i32, i32, i32
  }
}

</mosaic_0001>

<llo_original>
// kernel: tpu_custom_call.1
$region0: #{tpu_custom_call.1}
  #allocation0 [shape = 'u32[]', space=smem, size = 0x4, offset = 0x4, fixed_abs, tag = 'smem constant byte address 0x4 - core index']
  #allocation1 [shape = 'u32[144,128]{1,0:T(1,128)}', space=vmem, size = 0x12000, scoped, tag = 'internal scratch']
  %s0 = inlined_call_operand.hbm [shape: f32[16,128], index: 0, kind: input, shape index: {}]
  %s1 = inlined_call_operand.hbm [shape: f32[8,128], index: 1, kind: input, shape index: {}]
  %s2 = inlined_call_operand.hbm [shape: f32[16,128], index: 2, kind: output, shape index: {}]
  %s3 = sld [smem:[#allocation0]]
  $region49: #{tpu_custom_call.1} parent=0
    _
  %s5 = ssub.s32 1, %s3
  %s6 = scalar_select 0, %s5, %s3
  $region1: #{tpu_custom_call.1} parent=0
    #allocation2 [shape = 'u8[8192]{0}', space=vmem, size = 0x2000, scoped, tag = 'input window, operand 0']
    #allocation3 [shape = 's32[2]{0}', space=sflag, size = 0x8, scoped, tag = 'scoped memory for tpu_custom_call.1']
    #allocation4 [shape = 's32[2]{0}', space=sflag, size = 0x8, scoped, tag = 'scoped memory for tpu_custom_call.1']
    #allocation5 [shape = 'u8[4096]{0}', space=vmem, size = 0x1000, scoped, tag = 'input window, operand 1, single buffered']
    #allocation6 [shape = 's32[1]{0}', space=sflag, size = 0x4, scoped, tag = 'scoped memory for tpu_custom_call.1']
    #allocation7 [shape = 'u8[8192]{0}', space=vmem, size = 0x2000, scoped, tag = 'output window, operand 0']
    %7 = vsyncpa [#allocation3], 0
    %s8 = scalar_lea.sflag [#allocation3], 1
    %9 = vsyncpa %s8, 0
    %10 = vsyncpa [#allocation6], 0
    %11 = vsyncpa [#allocation4], 0
    %s12 = scalar_lea.sflag [#allocation4], 1
    %13 = vsyncpa %s12, 0
    loop: start=0, step=1, limit=4
    $region2: #{tpu_custom_call.1} parent=1 // loop_pre_header
      _
    $region3: #{tpu_custom_call.1} parent=1 // loop_header
      %s15 = sphi 0, %s19
      %p16 = scmp.ge.s32.totalorder %s15, 4
      %s25 = sphi 0, %s27
      %s28 = sphi 0, %s25
      %s29 = sphi 0, %s28
      %s45 = sphi 0, %s29
      %s49 = sphi 0, %s49
      %s51 = sphi 0, %s49
      %s52 = sphi 0, %s51
      %s66 = sphi 0, %s52
      %s72 = sphi 0, %s74
      %s75 = sphi 0, %s72
      %s76 = sphi 0, %s75
      %s92 = sphi 0, %s76
    $region4: #{tpu_custom_call.1} parent=1 // loop_header_branch
      %18 = sbr.rel (%p16) target = $region8
    $region5: #{tpu_custom_call.1} parent=1 // loop_body
      %s20 = ssub.s32 %s15, 1
      %s21 = ssub.s32 %s15, 2
      %s22 = sadd.s32 %s15, 1
      %s23 = ssub.s32 %s15, %s22
      %p24 = scmp.eq.s32.totalorder %s23, 0
      %s26 = sadd.s32 %s25, 1
      %s27 = scalar_select %p24, %s25, %s26
      %p30 = pneg %p24
      %p31 = scmp.eq.s32.totalorder %s15, 1
      %p32 = por %p30, %p31
      %p33 = scmp.ne.s32.totalorder %s25, %s28
      %p34 = scmp.eq.s32.totalorder %s15, 0
      %p35 = por %p33, %p34
      %p36 = scmp.ne.s32.totalorder %s25, %s28
      %p37 = scmp.eq.s32.totalorder %s20, 1
      %p38 = por %p36, %p37
      %p39 = scmp.ne.s32.totalorder %s28, %s29
      %p40 = scmp.eq.s32.totalorder %s20, 0
      %p41 = por %p39, %p40
      %p42 = scmp.ne.s32.totalorder %s28, %s29
      %p43 = scmp.eq.s32.totalorder %s21, 1
      %p44 = por %p42, %p43
      %p46 = scmp.ne.s32.totalorder %s29, %s45
      %p47 = scmp.eq.s32.totalorder %s21, 0
      %p48 = por %p46, %p47
      %s50 = sadd.s32 %s49, 1
      %p53 = scmp.eq.s32.totalorder %s15, 1
      %p54 = scmp.ne.s32.totalorder %s49, %s51
      %p55 = scmp.eq.s32.totalorder %s15, 0
      %p56 = por %p54, %p55
      %p57 = scmp.ne.s32.totalorder %s49, %s51
      %p58 = scmp.eq.s32.totalorder %s20, 1
      %p59 = por %p57, %p58
      %p60 = scmp.ne.s32.totalorder %s51, %s52
      %p61 = scmp.eq.s32.totalorder %s20, 0
      %p62 = por %p60, %p61
      %p63 = scmp.ne.s32.totalorder %s51, %s52
      %p64 = scmp.eq.s32.totalorder %s21, 1
      %p65 = por %p63, %p64
      %p67 = scmp.ne.s32.totalorder %s52, %s66
      %p68 = scmp.eq.s32.totalorder %s21, 0
      %p69 = por %p67, %p68
      %s70 = ssub.s32 %s15, %s22
      %p71 = scmp.eq.s32.totalorder %s70, 0
      %s73 = sadd.s32 %s72, 1
      %s74 = scalar_select %p71, %s72, %s73
      %p77 = pneg %p71
      %p78 = scmp.eq.s32.totalorder %s15, 1
      %p79 = por %p77, %p78
      %p80 = scmp.ne.s32.totalorder %s72, %s75
      %p81 = scmp.eq.s32.totalorder %s15, 0
      %p82 = por %p80, %p81
      %p83 = scmp.ne.s32.totalorder %s72, %s75
      %p84 = scmp.eq.s32.totalorder %s20, 1
      %p85 = por %p83, %p84
      %p86 = scmp.ne.s32.totalorder %s75, %s76
      %p87 = scmp.eq.s32.totalorder %s20, 0
      %p88 = por %p86, %p87
      %p89 = scmp.ne.s32.totalorder %s75, %s76
      %p90 = scmp.eq.s32.totalorder %s21, 1
      %p91 = por %p89, %p90
      %p93 = scmp.ne.s32.totalorder %s76, %s92
      %p94 = scmp.eq.s32.totalorder %s21, 0
      %p95 = por %p93, %p94
      %p96 = scmp.le.s32.totalorder 1, %s15
      %p97 = scmp.lt.s32.totalorder %s15, 3
      %p98 = pnand %p96, %p97
      %p99 = pneg %p98
      // Predicated region
      $region9: #{tpu_custom_call.1} parent=5 // pred_check
        _
      $region10: #{tpu_custom_call.1} parent=5 // pred_check_branch
        %101 = sbr.rel (%p98) target = $region12
      $region11: #{tpu_custom_call.1} parent=5 // pred_region
        %s102 = ssub.s32 %s15, 1
        // Predicated region
        $region13: #{tpu_custom_call.1} parent=11 // pred_check
          %p103 = pneg %p62
        $region14: #{tpu_custom_call.1} parent=11 // pred_check_branch
          %105 = sbr.rel (%p103) target = $region16
        $region15: #{tpu_custom_call.1} parent=11 // pred_region
          %s107 = ssub.s32 128, 128
          %108 = vsyncadd [#allocation6], %s107
          %s110 = sshll.u32 [#allocation5], 4
          %s111 = int_to_ptr.vmem [resolvable:$true] %s110
          %113 = dma.hbm_to_vmem [thread:$0]  %s1, 128, %s111, [#allocation6]
        $region16: #{tpu_custom_call.1} parent=11 // pred_fallthru
          _
      $region12: #{tpu_custom_call.1} parent=5 // pred_fallthru
        _
      %p114 = scmp.lt.s32.totalorder %s15, 2
      // Predicated region
      $region17: #{tpu_custom_call.1} parent=5 // pred_check
        %p115 = pneg %p114
      $region18: #{tpu_custom_call.1} parent=5 // pred_check_branch
        %117 = sbr.rel (%p115) target = $region20
      $region19: #{tpu_custom_call.1} parent=5 // pred_region
        // Predicated region
        $region21: #{tpu_custom_call.1} parent=19 // pred_check
          %p118 = pneg %p35
        $region22: #{tpu_custom_call.1} parent=19 // pred_check_branch
          %120 = sbr.rel (%p118) target = $region24
        $region23: #{tpu_custom_call.1} parent=19 // pred_region
          %s121 = sand.u32 %s25, 1
          %s122 = scalar_lea.sflag [#allocation3], %s121
          %s123 = sand.u32 %s25, 1
          %s124 = smul.addr %s123, 8
          %s125 = scalar_lea.vmem [#allocation2], %s124
          %s127 = ssub.s32 128, 128
          %128 = vsyncadd %s122, %s127
          %s129 = smul.addr %s15, 128
          %s130 = scalar_lea.hbm %s0, %s129
          %s132 = sshll.u32 %s125, 4
          %s133 = int_to_ptr.vmem [resolvable:$true] %s132
          %135 = dma.hbm_to_vmem [thread:$0]  %s130, 128, %s133, %s122
        $region24: #{tpu_custom_call.1} parent=19 // pred_fallthru
          _
      $region20: #{tpu_custom_call.1} parent=5 // pred_fallthru
        _
      %p136 = scmp.le.s32.totalorder 1, %s15
      %p137 = scmp.lt.s32.totalorder %s15, 3
      %p138 = pnand %p136, %p137
      %p139 = pneg %p138
      // Predicated region
      $region25: #{tpu_custom_call.1} parent=5 // pred_check
        _
      $region26: #{tpu_custom_call.1} parent=5 // pred_check_branch
        %141 = sbr.rel (%p138) target = $region28
      $region27: #{tpu_custom_call.1} parent=5 // pred_region
        %s142 = ssub.s32 %s15, 1
        %s143 = sand.u32 %s28, 1
        %s144 = scalar_lea.sflag [#allocation3], %s143
        %s145 = sand.u32 %s28, 1
        %s146 = smul.addr %s145, 8
        %s147 = scalar_lea.vmem [#allocation2], %s146
        // Predicated region
        $region29: #{tpu_custom_call.1} parent=27 // pred_check
          %p148 = pneg %p41
        $region30: #{tpu_custom_call.1} parent=27 // pred_check_branch
          %150 = sbr.rel (%p148) target = $region32
        $region31: #{tpu_custom_call.1} parent=27 // pred_region
          %151 = dma.done %s144, 128
        $region32: #{tpu_custom_call.1} parent=27 // pred_fallthru
          _
        // Predicated region
        $region33: #{tpu_custom_call.1} parent=27 // pred_check
          %p152 = pneg %p62
        $region34: #{tpu_custom_call.1} parent=27 // pred_check_branch
          %154 = sbr.rel (%p152) target = $region36
        $region35: #{tpu_custom_call.1} parent=27 // pred_region
          %155 = dma.done [#allocation6], 128
        $region36: #{tpu_custom_call.1} parent=27 // pred_fallthru
          _
        %s156 = sand.u32 %s28, 1
        %s157 = scalar_lea.sflag [#allocation3], %s156
        %s158 = sand.u32 %s28, 1
        %s159 = smul.addr %s158, 8
        %s160 = scalar_lea.vmem [#allocation2], %s159
        %p161 = pneg %p41
        %p162 = pneg %p38
        %p163 = pneg %p62
        %p164 = pneg %p59
        %p165 = pneg %p88
        %p166 = pneg %p85
        %s167 = sand.u32 %s75, 1
        %s168 = scalar_lea.sflag [#allocation4], %s167
        %s169 = sand.u32 %s75, 1
        %s170 = smul.addr %s169, 8
        %s171 = scalar_lea.vmem [#allocation7], %s170
        %v172 = vld [vmem:[%s147] sm:$0xff]
        %v173 = vld [vmem:[#allocation5] sm:$0xff]
        %v174 = vadd.f32 %v172, %v173
        %175 = vst [vmem:[%s171] sm:$0xff] %v174
        %s176 = sand.u32 %s75, 1
        %s177 = scalar_lea.sflag [#allocation4], %s176
        %s178 = sand.u32 %s75, 1
        %s179 = smul.addr %s178, 8
        %s180 = scalar_lea.vmem [#allocation7], %s179
        // Predicated region
        $region37: #{tpu_custom_call.1} parent=27 // pred_check
          %p181 = pneg %p85
        $region38: #{tpu_custom_call.1} parent=27 // pred_check_branch
          %183 = sbr.rel (%p181) target = $region40
        $region39: #{tpu_custom_call.1} parent=27 // pred_region
          %s185 = ssub.s32 128, 128
          %186 = vsyncadd %s177, %s185
          %s187 = smul.addr %s20, 128
          %s188 = scalar_lea.hbm %s2, %s187
          %s190 = sshll.u32 %s180, 4
          %s191 = int_to_ptr.vmem [resolvable:$true] %s190
          %193 = dma.vmem_to_hbm [thread:$0]  %s191, 128, %s188, %s177
        $region40: #{tpu_custom_call.1} parent=27 // pred_fallthru
          _
      $region28: #{tpu_custom_call.1} parent=5 // pred_fallthru
        _
      %p194 = scmp.le.s32.totalorder 2, %s15
      // Predicated region
      $region41: #{tpu_custom_call.1} parent=5 // pred_check
        %p195 = pneg %p194
      $region42: #{tpu_custom_call.1} parent=5 // pred_check_branch
        %197 = sbr.rel (%p195) target = $region44
      $region43: #{tpu_custom_call.1} parent=5 // pred_region
        %s198 = ssub.s32 %s15, 2
        // Predicated region
        $region45: #{tpu_custom_call.1} parent=43 // pred_check
          %p199 = pneg %p91
        $region46: #{tpu_custom_call.1} parent=43 // pred_check_branch
          %201 = sbr.rel (%p199) target = $region48
        $region47: #{tpu_custom_call.1} parent=43 // pred_region
          %s202 = sand.u32 %s76, 1
          %s203 = scalar_lea.sflag [#allocation4], %s202
          %s204 = sand.u32 %s76, 1
          %s205 = smul.addr %s204, 8
          %s206 = scalar_lea.vmem [#allocation7], %s205
          %207 = dma.done %s203, 128
        $region48: #{tpu_custom_call.1} parent=43 // pred_fallthru
          _
      $region44: #{tpu_custom_call.1} parent=5 // pred_fallthru
        _
    $region6: #{tpu_custom_call.1} parent=1 // loop_footer
      %s19 = sadd.s32 1, %s15
    $region7: #{tpu_custom_call.1} parent=1 // loop_footer_branch
      %14 = sbr.rel target = $region3
    $region8: #{tpu_custom_call.1} parent=1 // loop_exit
      _
    %208 = vsyncpa [#allocation3], 1
    %s209 = scalar_lea.sflag [#allocation3], 1
    %210 = vsyncpa %s209, 1
    %211 = vsyncpa [#allocation6], 1
    %212 = vsyncpa [#allocation4], 1
    %s213 = scalar_lea.sflag [#allocation4], 1
    %214 = vsyncpa %s213, 1

// kernel: tpu_custom_call.1
$region0: #{tpu_custom_call.1}
  #allocation0 [shape = 'u32[]', space=smem, size = 0x4, offset = 0x4, fixed_abs, tag = 'smem constant byte address 0x4 - core index']
  #allocation1 [shape = 'u32[144,128]{1,0:T(1,128)}', space=vmem, size = 0x12000, scoped, tag = 'internal scratch']
  %s0 = inlined_call_operand.hbm [shape: f32[2,8,32], index: 0, kind: input, shape index: {}]
  %s1 = inlined_call_operand.hbm [shape: f32[2,8,32], index: 1, kind: input, shape index: {}]
  %s2 = inlined_call_operand.hbm [shape: f32[2,8,32], index: 2, kind: input, shape index: {}]
  %s3 = inlined_call_operand.hbm [shape: bf16[1,1,8,8], index: 3, kind: input, shape index: {}]
  %s4 = inlined_call_operand.vmem [shape: f32[8,8], index: 4, kind: input, shape index: {}]
  %s5 = inlined_call_operand.vmem [shape: f32[8,8], index: 5, kind: input, shape index: {}]
  %s6 = inlined_call_operand.hbm [shape: f32[8,8], index: 6, kind: input, shape index: {}]
  %s7 = inlined_call_operand.hbm [shape: f32[32,32], index: 7, kind: input, shape index: {}]
  %s8 = inlined_call_operand.vmem [shape: f32[1,32], index: 8, kind: input, shape index: {}]
  %s9 = inlined_call_operand.vmem [shape: f32[1,32], index: 9, kind: input, shape index: {}]
  %s10 = inlined_call_operand.vmem [shape: f32[1,32], index: 10, kind: input, shape index: {}]
  %s11 = inlined_call_operand.hbm [shape: f32[2,8,32], index: 11, kind: output, shape index: {}]
  %s12 = sld [smem:[#allocation0]]
  $region101: #{tpu_custom_call.1} parent=0
    _
  %s14 = ssub.s32 1, %s12
  %s15 = scalar_select 0, %s14, %s12
  $region1: #{tpu_custom_call.1} parent=0
    #allocation2 [shape = 'u8[8192]{0}', space=vmem, size = 0x2000, scoped, tag = 'input window, operand 0']
    #allocation3 [shape = 's32[2]{0}', space=sflag, size = 0x8, scoped, tag = 'scoped memory for tpu_custom_call.1']
    #allocation4 [shape = 's32[2]{0}', space=sflag, size = 0x8, scoped, tag = 'scoped memory for tpu_custom_call.1']
    #allocation5 [shape = 'u8[8192]{0}', space=vmem, size = 0x2000, scoped, tag = 'input window, operand 1']
    #allocation6 [shape = 's32[2]{0}', space=sflag, size = 0x8, scoped, tag = 'scoped memory for tpu_custom_call.1']
    #allocation7 [shape = 'u8[8192]{0}', space=vmem, size = 0x2000, scoped, tag = 'input window, operand 2']
    #allocation8 [shape = 'u8[2048]{0}', space=vmem, size = 0x800, scoped, tag = 'input window, operand 3, single buffered']
    #allocation9 [shape = 's32[1]{0}', space=sflag, size = 0x4, scoped, tag = 'scoped memory for tpu_custom_call.1']
    #allocation10 [shape = 'u8[4096]{0}', space=vmem, size = 0x1000, scoped, tag = 'input window, operand 6, single buffered']
    #allocation11 [shape = 'u8[16384]{0}', space=vmem, size = 0x4000, scoped, tag = 'input window, operand 7, single buffered']
    #allocation12 [shape = 's32[1]{0}', space=sflag, size = 0x4, scoped, tag = 'scoped memory for tpu_custom_call.1']
    #allocation13 [shape = 'u8[8192]{0}', space=vmem, size = 0x2000, scoped, tag = 'output window, operand 0']
    %16 = vsyncpa [#allocation3], 0
    %s17 = scalar_lea.sflag [#allocation3], 1
    %18 = vsyncpa %s17, 0
    %19 = vsyncpa [#allocation6], 0
    %s20 = scalar_lea.sflag [#allocation6], 1
    %21 = vsyncpa %s20, 0
    %22 = vsyncpa [#allocation9], 0
    %23 = vsyncpa [#allocation12], 0
    %24 = vsyncpa [#allocation4], 0
    %s25 = scalar_lea.sflag [#allocation4], 1
    %26 = vsyncpa %s25, 0
    loop: start=0, step=1, limit=4
    $region2: #{tpu_custom_call.1} parent=1 // loop_pre_header
      _
    $region3: #{tpu_custom_call.1} parent=1 // loop_header
      %s28 = sphi 0, %s32
      %p29 = scmp.ge.s32.totalorder %s28, 4
      %s35 = sphi 0, %s47
      %s36 = sphi 0, %s43
      %s37 = sphi 0, %s35
      %s38 = sphi 0, %s36
      %s39 = sphi 0, %s37
      %s40 = sphi 0, %s38
      %s52 = sphi 0, %s54
      %s55 = sphi 0, %s52
      %s56 = sphi 0, %s55
      %s72 = sphi 0, %s56
      %s78 = sphi 0, %s80
      %s81 = sphi 0, %s78
      %s82 = sphi 0, %s81
      %s98 = sphi 0, %s82
      %s104 = sphi 0, %s106
      %s107 = sphi 0, %s104
      %s108 = sphi 0, %s107
      %s124 = sphi 0, %s108
      %s130 = sphi 0, %s132
      %s133 = sphi 0, %s130
      %s134 = sphi 0, %s133
      %s150 = sphi 0, %s134
      %s154 = sphi 0, %s154
      %s156 = sphi 0, %s154
      %s157 = sphi 0, %s156
      %s171 = sphi 0, %s157
      %s175 = sphi 0, %s175
      %s177 = sphi 0, %s175
      %s178 = sphi 0, %s177
      %s192 = sphi 0, %s178
      %s196 = sphi 0, %s196
      %s198 = sphi 0, %s196
      %s199 = sphi 0, %s198
      %s213 = sphi 0, %s199
      %s217 = sphi 0, %s217
      %s219 = sphi 0, %s217
      %s220 = sphi 0, %s219
      %s234 = sphi 0, %s220
      %s238 = sphi 0, %s238
      %s240 = sphi 0, %s238
      %s241 = sphi 0, %s240
      %s255 = sphi 0, %s241
      %s259 = sphi 0, %s259
      %s261 = sphi 0, %s259
      %s262 = sphi 0, %s261
      %s276 = sphi 0, %s262
      %s280 = sphi 0, %s280
      %s282 = sphi 0, %s280
      %s283 = sphi 0, %s282
      %s297 = sphi 0, %s283
      %s305 = sphi 0, %s307
      %s308 = sphi 0, %s305
      %s309 = sphi 0, %s308
      %s325 = sphi 0, %s309
    $region4: #{tpu_custom_call.1} parent=1 // loop_header_branch
      %31 = sbr.rel (%p29) target = $region8
    $region5: #{tpu_custom_call.1} parent=1 // loop_body
      %s33 = ssub.s32 %s28, 1
      %s34 = ssub.s32 %s28, 2
      %s41 = sadd.s32 1, %s36
      %p42 = scmp.ge.s32.totalorder %s41, 1
      %s43 = scalar_select %p42, 0, %s41
      %s44 = sadd.s32 1, %s35
      %s45 = scalar_select %p42, %s44, %s35
      %p46 = scmp.ge.s32.totalorder %s45, 2
      %s47 = scalar_select %p46, 0, %s45
      %s48 = ssub.s32 %s35, %s47
      %s49 = ssub.s32 %s36, %s43
      %s50 = sor.u32 %s48, %s49
      %p51 = scmp.eq.s32.totalorder %s50, 0
      %s53 = sadd.s32 %s52, 1
      %s54 = scalar_select %p51, %s52, %s53
      %p57 = pneg %p51
      %p58 = scmp.eq.s32.totalorder %s28, 1
      %p59 = por %p57, %p58
      %p60 = scmp.ne.s32.totalorder %s52, %s55
      %p61 = scmp.eq.s32.totalorder %s28, 0
      %p62 = por %p60, %p61
      %p63 = scmp.ne.s32.totalorder %s52, %s55
      %p64 = scmp.eq.s32.totalorder %s33, 1
      %p65 = por %p63, %p64
      %p66 = scmp.ne.s32.totalorder %s55, %s56
      %p67 = scmp.eq.s32.totalorder %s33, 0
      %p68 = por %p66, %p67
      %p69 = scmp.ne.s32.totalorder %s55, %s56
      %p70 = scmp.eq.s32.totalorder %s34, 1
      %p71 = por %p69, %p70
      %p73 = scmp.ne.s32.totalorder %s56, %s72
      %p74 = scmp.eq.s32.totalorder %s34, 0
      %p75 = por %p73, %p74
      %s76 = ssub.s32 %s35, %s47
      %p77 = scmp.eq.s32.totalorder %s76, 0
      %s79 = sadd.s32 %s78, 1
      %s80 = scalar_select %p77, %s78, %s79
      %p83 = pneg %p77
      %p84 = scmp.eq.s32.totalorder %s28, 1
      %p85 = por %p83, %p84
      %p86 = scmp.ne.s32.totalorder %s78, %s81
      %p87 = scmp.eq.s32.totalorder %s28, 0
      %p88 = por %p86, %p87
      %p89 = scmp.ne.s32.totalorder %s78, %s81
      %p90 = scmp.eq.s32.totalorder %s33, 1
      %p91 = por %p89, %p90
      %p92 = scmp.ne.s32.totalorder %s81, %s82
      %p93 = scmp.eq.s32.totalorder %s33, 0
      %p94 = por %p92, %p93
      %p95 = scmp.ne.s32.totalorder %s81, %s82
      %p96 = scmp.eq.s32.totalorder %s34, 1
      %p97 = por %p95, %p96
      %p99 = scmp.ne.s32.totalorder %s82, %s98
      %p100 = scmp.eq.s32.totalorder %s34, 0
      %p101 = por %p99, %p100
      %s102 = ssub.s32 %s35, %s47
      %p103 = scmp.eq.s32.totalorder %s102, 0
      %s105 = sadd.s32 %s104, 1
      %s106 = scalar_select %p103, %s104, %s105
      %p109 = pneg %p103
      %p110 = scmp.eq.s32.totalorder %s28, 1
      %p111 = por %p109, %p110
      %p112 = scmp.ne.s32.totalorder %s104, %s107
      %p113 = scmp.eq.s32.totalorder %s28, 0
      %p114 = por %p112, %p113
      %p115 = scmp.ne.s32.totalorder %s104, %s107
      %p116 = scmp.eq.s32.totalorder %s33, 1
      %p117 = por %p115, %p116
      %p118 = scmp.ne.s32.totalorder %s107, %s108
      %p119 = scmp.eq.s32.totalorder %s33, 0
      %p120 = por %p118, %p119
      %p121 = scmp.ne.s32.totalorder %s107, %s108
      %p122 = scmp.eq.s32.totalorder %s34, 1
      %p123 = por %p121, %p122
      %p125 = scmp.ne.s32.totalorder %s108, %s124
      %p126 = scmp.eq.s32.totalorder %s34, 0
      %p127 = por %p125, %p126
      %s128 = ssub.s32 %s36, %s43
      %p129 = scmp.eq.s32.totalorder %s128, 0
      %s131 = sadd.s32 %s130, 1
      %s132 = scalar_select %p129, %s130, %s131
      %p135 = pneg %p129
      %p136 = scmp.eq.s32.totalorder %s28, 1
      %p137 = por %p135, %p136
      %p138 = scmp.ne.s32.totalorder %s130, %s133
      %p139 = scmp.eq.s32.totalorder %s28, 0
      %p140 = por %p138, %p139
      %p141 = scmp.ne.s32.totalorder %s130, %s133
      %p142 = scmp.eq.s32.totalorder %s33, 1
      %p143 = por %p141, %p142
      %p144 = scmp.ne.s32.totalorder %s133, %s134
      %p145 = scmp.eq.s32.totalorder %s33, 0
      %p146 = por %p144, %p145
      %p147 = scmp.ne.s32.totalorder %s133, %s134
      %p148 = scmp.eq.s32.totalorder %s34, 1
      %p149 = por %p147, %p148
      %p151 = scmp.ne.s32.totalorder %s134, %s150
      %p152 = scmp.eq.s32.totalorder %s34, 0
      %p153 = por %p151, %p152
      %s155 = sadd.s32 %s154, 1
      %p158 = scmp.eq.s32.totalorder %s28, 1
      %p159 = scmp.ne.s32.totalorder %s154, %s156
      %p160 = scmp.eq.s32.totalorder %s28, 0
      %p161 = por %p159, %p160
      %p162 = scmp.ne.s32.totalorder %s154, %s156
      %p163 = scmp.eq.s32.totalorder %s33, 1
      %p164 = por %p162, %p163
      %p165 = scmp.ne.s32.totalorder %s156, %s157
      %p166 = scmp.eq.s32.totalorder %s33, 0
      %p167 = por %p165, %p166
      %p168 = scmp.ne.s32.totalorder %s156, %s157
      %p169 = scmp.eq.s32.totalorder %s34, 1
      %p170 = por %p168, %p169
      %p172 = scmp.ne.s32.totalorder %s157, %s171
      %p173 = scmp.eq.s32.totalorder %s34, 0
      %p174 = por %p172, %p173
      %s176 = sadd.s32 %s175, 1
      %p179 = scmp.eq.s32.totalorder %s28, 1
      %p180 = scmp.ne.s32.totalorder %s175, %s177
      %p181 = scmp.eq.s32.totalorder %s28, 0
      %p182 = por %p180, %p181
      %p183 = scmp.ne.s32.totalorder %s175, %s177
      %p184 = scmp.eq.s32.totalorder %s33, 1
      %p185 = por %p183, %p184
      %p186 = scmp.ne.s32.totalorder %s177, %s178
      %p187 = scmp.eq.s32.totalorder %s33, 0
      %p188 = por %p186, %p187
      %p189 = scmp.ne.s32.totalorder %s177, %s178
      %p190 = scmp.eq.s32.totalorder %s34, 1
      %p191 = por %p189, %p190
      %p193 = scmp.ne.s32.totalorder %s178, %s192
      %p194 = scmp.eq.s32.totalorder %s34, 0
      %p195 = por %p193, %p194
      %s197 = sadd.s32 %s196, 1
      %p200 = scmp.eq.s32.totalorder %s28, 1
      %p201 = scmp.ne.s32.totalorder %s196, %s198
      %p202 = scmp.eq.s32.totalorder %s28, 0
      %p203 = por %p201, %p202
      %p204 = scmp.ne.s32.totalorder %s196, %s198
      %p205 = scmp.eq.s32.totalorder %s33, 1
      %p206 = por %p204, %p205
      %p207 = scmp.ne.s32.totalorder %s198, %s199
      %p208 = scmp.eq.s32.totalorder %s33, 0
      %p209 = por %p207, %p208
      %p210 = scmp.ne.s32.totalorder %s198, %s199
      %p211 = scmp.eq.s32.totalorder %s34, 1
      %p212 = por %p210, %p211
      %p214 = scmp.ne.s32.totalorder %s199, %s213
      %p215 = scmp.eq.s32.totalorder %s34, 0
      %p216 = por %p214, %p215
      %s218 = sadd.s32 %s217, 1
      %p221 = scmp.eq.s32.totalorder %s28, 1
      %p222 = scmp.ne.s32.totalorder %s217, %s219
      %p223 = scmp.eq.s32.totalorder %s28, 0
      %p224 = por %p222, %p223
      %p225 = scmp.ne.s32.totalorder %s217, %s219
      %p226 = scmp.eq.s32.totalorder %s33, 1
      %p227 = por %p225, %p226
      %p228 = scmp.ne.s32.totalorder %s219, %s220
      %p229 = scmp.eq.s32.totalorder %s33, 0
      %p230 = por %p228, %p229
      %p231 = scmp.ne.s32.totalorder %s219, %s220
      %p232 = scmp.eq.s32.totalorder %s34, 1
      %p233 = por %p231, %p232
      %p235 = scmp.ne.s32.totalorder %s220, %s234
      %p236 = scmp.eq.s32.totalorder %s34, 0
      %p237 = por %p235, %p236
      %s239 = sadd.s32 %s238, 1
      %p242 = scmp.eq.s32.totalorder %s28, 1
      %p243 = scmp.ne.s32.totalorder %s238, %s240
      %p244 = scmp.eq.s32.totalorder %s28, 0
      %p245 = por %p243, %p244
      %p246 = scmp.ne.s32.totalorder %s238, %s240
      %p247 = scmp.eq.s32.totalorder %s33, 1
      %p248 = por %p246, %p247
      %p249 = scmp.ne.s32.totalorder %s240, %s241
      %p250 = scmp.eq.s32.totalorder %s33, 0
      %p251 = por %p249, %p250
      %p252 = scmp.ne.s32.totalorder %s240, %s241
      %p253 = scmp.eq.s32.totalorder %s34, 1
      %p254 = por %p252, %p253
      %p256 = scmp.ne.s32.totalorder %s241, %s255
      %p257 = scmp.eq.s32.totalorder %s34, 0
      %p258 = por %p256, %p257
      %s260 = sadd.s32 %s259, 1
      %p263 = scmp.eq.s32.totalorder %s28, 1
      %p264 = scmp.ne.s32.totalorder %s259, %s261
      %p265 = scmp.eq.s32.totalorder %s28, 0
      %p266 = por %p264, %p265
      %p267 = scmp.ne.s32.totalorder %s259, %s261
      %p268 = scmp.eq.s32.totalorder %s33, 1
      %p269 = por %p267, %p268
      %p270 = scmp.ne.s32.totalorder %s261, %s262
      %p271 = scmp.eq.s32.totalorder %s33, 0
      %p272 = por %p270, %p271
      %p273 = scmp.ne.s32.totalorder %s261, %s262
      %p274 = scmp.eq.s32.totalorder %s34, 1
      %p275 = por %p273, %p274
      %p277 = scmp.ne.s32.totalorder %s262, %s276
      %p278 = scmp.eq.s32.totalorder %s34, 0
      %p279 = por %p277, %p278
      %s281 = sadd.s32 %s280, 1
      %p284 = scmp.eq.s32.totalorder %s28, 1
      %p285 = scmp.ne.s32.totalorder %s280, %s282
      %p286 = scmp.eq.s32.totalorder %s28, 0
      %p287 = por %p285, %p286
      %p288 = scmp.ne.s32.totalorder %s280, %s282
      %p289 = scmp.eq.s32.totalorder %s33, 1
      %p290 = por %p288, %p289
      %p291 = scmp.ne.s32.totalorder %s282, %s283
      %p292 = scmp.eq.s32.totalorder %s33, 0
      %p293 = por %p291, %p292
      %p294 = scmp.ne.s32.totalorder %s282, %s283
      %p295 = scmp.eq.s32.totalorder %s34, 1
      %p296 = por %p294, %p295
      %p298 = scmp.ne.s32.totalorder %s283, %s297
      %p299 = scmp.eq.s32.totalorder %s34, 0
      %p300 = por %p298, %p299
      %s301 = ssub.s32 %s35, %s47
      %s302 = ssub.s32 %s36, %s43
      %s303 = sor.u32 %s301, %s302
      %p304 = scmp.eq.s32.totalorder %s303, 0
      %s306 = sadd.s32 %s305, 1
      %s307 = scalar_select %p304, %s305, %s306
      %p310 = pneg %p304
      %p311 = scmp.eq.s32.totalorder %s28, 1
      %p312 = por %p310, %p311
      %p313 = scmp.ne.s32.totalorder %s305, %s308
      %p314 = scmp.eq.s32.totalorder %s28, 0
      %p315 = por %p313, %p314
      %p316 = scmp.ne.s32.totalorder %s305, %s308
      %p317 = scmp.eq.s32.totalorder %s33, 1
      %p318 = por %p316, %p317
      %p319 = scmp.ne.s32.totalorder %s308, %s309
      %p320 = scmp.eq.s32.totalorder %s33, 0
      %p321 = por %p319, %p320
      %p322 = scmp.ne.s32.totalorder %s308, %s309
      %p323 = scmp.eq.s32.totalorder %s34, 1
      %p324 = por %p322, %p323
      %p326 = scmp.ne.s32.totalorder %s309, %s325
      %p327 = scmp.eq.s32.totalorder %s34, 0
      %p328 = por %p326, %p327
      %p329 = scmp.le.s32.totalorder 1, %s28
      %p330 = scmp.lt.s32.totalorder %s28, 3
      %p331 = pnand %p329, %p330
      %p332 = pneg %p331
      // Predicated region
      $region9: #{tpu_custom_call.1} parent=5 // pred_check
        _
      $region10: #{tpu_custom_call.1} parent=5 // pred_check_branch
        %334 = sbr.rel (%p331) target = $region12
      $region11: #{tpu_custom_call.1} parent=5 // pred_region
        %s335 = ssub.s32 %s28, 1
        // Predicated region
        $region13: #{tpu_custom_call.1} parent=11 // pred_check
          %p336 = pneg %p146
        $region14: #{tpu_custom_call.1} parent=11 // pred_check_branch
          %338 = sbr.rel (%p336) target = $region16
        $region15: #{tpu_custom_call.1} parent=11 // pred_region
          %s340 = ssub.s32 64, 64
          %341 = vsyncadd [#allocation9], %s340
          %s342 = smul.addr %s38, 64
          %s343 = scalar_lea.hbm %s3, %s342
          %s345 = sshll.u32 [#allocation8], 4
          %s346 = int_to_ptr.vmem [resolvable:$true] %s345
          %348 = dma.hbm_to_vmem [thread:$0]  %s343, 64, %s346, [#allocation9]
        $region16: #{tpu_custom_call.1} parent=11 // pred_fallthru
          _
        // Predicated region
        $region17: #{tpu_custom_call.1} parent=11 // pred_check
          %p349 = pneg %p167
        $region18: #{tpu_custom_call.1} parent=11 // pred_check_branch
          %351 = sbr.rel (%p349) target = $region20
        $region19: #{tpu_custom_call.1} parent=11 // pred_region
          _
        $region20: #{tpu_custom_call.1} parent=11 // pred_fallthru
          _
        // Predicated region
        $region21: #{tpu_custom_call.1} parent=11 // pred_check
          %p352 = pneg %p188
        $region22: #{tpu_custom_call.1} parent=11 // pred_check_branch
          %354 = sbr.rel (%p352) target = $region24
        $region23: #{tpu_custom_call.1} parent=11 // pred_region
          _
        $region24: #{tpu_custom_call.1} parent=11 // pred_fallthru
          _
        // Predicated region
        $region25: #{tpu_custom_call.1} parent=11 // pred_check
          %p355 = pneg %p209
        $region26: #{tpu_custom_call.1} parent=11 // pred_check_branch
          %357 = sbr.rel (%p355) target = $region28
        $region27: #{tpu_custom_call.1} parent=11 // pred_region
          %s359 = ssub.s32 128, 128
          %360 = vsyncadd [#allocation9], %s359
          %s362 = sshll.u32 [#allocation10], 4
          %s363 = int_to_ptr.vmem [resolvable:$true] %s362
          %365 = dma.hbm_to_vmem [thread:$0]  %s6, 128, %s363, [#allocation9]
        $region28: #{tpu_custom_call.1} parent=11 // pred_fallthru
          _
        // Predicated region
        $region29: #{tpu_custom_call.1} parent=11 // pred_check
          %p366 = pneg %p230
        $region30: #{tpu_custom_call.1} parent=11 // pred_check_branch
          %368 = sbr.rel (%p366) target = $region32
        $region31: #{tpu_custom_call.1} parent=11 // pred_region
          %s370 = ssub.s32 512, 512
          %371 = vsyncadd [#allocation12], %s370
          %s372 = sshll.u32 [#allocation11], 4
          %s373 = int_to_ptr.vmem [resolvable:$true] %s372
          %378 = dma.hbm_to_vmem [thread:$0]  %s7, 512, %s373, [#allocation12], 128, 128, 8
        $region32: #{tpu_custom_call.1} parent=11 // pred_fallthru
          _
        // Predicated region
        $region33: #{tpu_custom_call.1} parent=11 // pred_check
          %p379 = pneg %p251
        $region34: #{tpu_custom_call.1} parent=11 // pred_check_branch
          %381 = sbr.rel (%p379) target = $region36
        $region35: #{tpu_custom_call.1} parent=11 // pred_region
          _
        $region36: #{tpu_custom_call.1} parent=11 // pred_fallthru
          _
        // Predicated region
        $region37: #{tpu_custom_call.1} parent=11 // pred_check
          %p382 = pneg %p272
        $region38: #{tpu_custom_call.1} parent=11 // pred_check_branch
          %384 = sbr.rel (%p382) target = $region40
        $region39: #{tpu_custom_call.1} parent=11 // pred_region
          _
        $region40: #{tpu_custom_call.1} parent=11 // pred_fallthru
          _
        // Predicated region
        $region41: #{tpu_custom_call.1} parent=11 // pred_check
          %p385 = pneg %p293
        $region42: #{tpu_custom_call.1} parent=11 // pred_check_branch
          %387 = sbr.rel (%p385) target = $region44
        $region43: #{tpu_custom_call.1} parent=11 // pred_region
          _
        $region44: #{tpu_custom_call.1} parent=11 // pred_fallthru
          _
      $region12: #{tpu_custom_call.1} parent=5 // pred_fallthru
        _
      %p388 = scmp.lt.s32.totalorder %s28, 2
      // Predicated region
      $region45: #{tpu_custom_call.1} parent=5 // pred_check
        %p389 = pneg %p388
      $region46: #{tpu_custom_call.1} parent=5 // pred_check_branch
        %391 = sbr.rel (%p389) target = $region48
      $region47: #{tpu_custom_call.1} parent=5 // pred_region
        // Predicated region
        $region49: #{tpu_custom_call.1} parent=47 // pred_check
          %p392 = pneg %p62
        $region50: #{tpu_custom_call.1} parent=47 // pred_check_branch
          %394 = sbr.rel (%p392) target = $region52
        $region51: #{tpu_custom_call.1} parent=47 // pred_region
          %s395 = sand.u32 %s52, 1
          %s396 = scalar_lea.sflag [#allocation3], %s395
          %s397 = sand.u32 %s52, 1
          %s398 = smul.addr %s397, 8
          %s399 = scalar_lea.vmem [#allocation2], %s398
          %s401 = ssub.s32 128, 128
          %402 = vsyncadd %s396, %s401
          %s403 = sadd.s32 %s36, %s35
          %s404 = smul.addr %s403, 128
          %s405 = scalar_lea.hbm %s0, %s404
          %s407 = sshll.u32 %s399, 4
          %s408 = int_to_ptr.vmem [resolvable:$true] %s407
          %410 = dma.hbm_to_vmem [thread:$0]  %s405, 128, %s408, %s396
        $region52: #{tpu_custom_call.1} parent=47 // pred_fallthru
          _
        // Predicated region
        $region53: #{tpu_custom_call.1} parent=47 // pred_check
          %p411 = pneg %p88
        $region54: #{tpu_custom_call.1} parent=47 // pred_check_branch
          %413 = sbr.rel (%p411) target = $region56
        $region55: #{tpu_custom_call.1} parent=47 // pred_region
          %s414 = sand.u32 %s28, 1
          %s415 = scalar_lea.sflag [#allocation6], %s414
          %s416 = sand.u32 %s78, 1
          %s417 = smul.addr %s416, 8
          %s418 = scalar_lea.vmem [#allocation5], %s417
          %s420 = ssub.s32 128, 128
          %421 = vsyncadd %s415, %s420
          %s422 = smul.addr %s35, 128
          %s423 = scalar_lea.hbm %s1, %s422
          %s425 = sshll.u32 %s418, 4
          %s426 = int_to_ptr.vmem [resolvable:$true] %s425
          %428 = dma.hbm_to_vmem [thread:$0]  %s423, 128, %s426, %s415
        $region56: #{tpu_custom_call.1} parent=47 // pred_fallthru
          _
        // Predicated region
        $region57: #{tpu_custom_call.1} parent=47 // pred_check
          %p429 = pneg %p114
        $region58: #{tpu_custom_call.1} parent=47 // pred_check_branch
          %431 = sbr.rel (%p429) target = $region60
        $region59: #{tpu_custom_call.1} parent=47 // pred_region
          %s432 = sand.u32 %s28, 1
          %s433 = scalar_lea.sflag [#allocation6], %s432
          %s434 = sand.u32 %s104, 1
          %s435 = smul.addr %s434, 8
          %s436 = scalar_lea.vmem [#allocation7], %s435
          %s438 = ssub.s32 128, 128
          %439 = vsyncadd %s433, %s438
          %s440 = smul.addr %s35, 128
          %s441 = scalar_lea.hbm %s2, %s440
          %s443 = sshll.u32 %s436, 4
          %s444 = int_to_ptr.vmem [resolvable:$true] %s443
          %446 = dma.hbm_to_vmem [thread:$0]  %s441, 128, %s444, %s433
        $region60: #{tpu_custom_call.1} parent=47 // pred_fallthru
          _
      $region48: #{tpu_custom_call.1} parent=5 // pred_fallthru
        _
      %p447 = scmp.le.s32.totalorder 1, %s28
      %p448 = scmp.lt.s32.totalorder %s28, 3
      %p449 = pnand %p447, %p448
      %p450 = pneg %p449
      // Predicated region
      $region61: #{tpu_custom_call.1} parent=5 // pred_check
        _
      $region62: #{tpu_custom_call.1} parent=5 // pred_check_branch
        %452 = sbr.rel (%p449) target = $region64
      $region63: #{tpu_custom_call.1} parent=5 // pred_region
        %s453 = ssub.s32 %s28, 1
        %s454 = sand.u32 %s55, 1
        %s455 = scalar_lea.sflag [#allocation3], %s454
        %s456 = sand.u32 %s55, 1
        %s457 = smul.addr %s456, 8
        %s458 = scalar_lea.vmem [#allocation2], %s457
        // Predicated region
        $region65: #{tpu_custom_call.1} parent=63 // pred_check
          %p459 = pneg %p68
        $region66: #{tpu_custom_call.1} parent=63 // pred_check_branch
          %461 = sbr.rel (%p459) target = $region68
        $region67: #{tpu_custom_call.1} parent=63 // pred_region
          %462 = dma.done %s455, 128
        $region68: #{tpu_custom_call.1} parent=63 // pred_fallthru
          _
        %s463 = sand.u32 %s33, 1
        %s464 = scalar_lea.sflag [#allocation6], %s463
        %s465 = sand.u32 %s81, 1
        %s466 = smul.addr %s465, 8
        %s467 = scalar_lea.vmem [#allocation5], %s466
        // Predicated region
        $region69: #{tpu_custom_call.1} parent=63 // pred_check
          %p468 = pneg %p94
        $region70: #{tpu_custom_call.1} parent=63 // pred_check_branch
          %470 = sbr.rel (%p468) target = $region72
        $region71: #{tpu_custom_call.1} parent=63 // pred_region
          %471 = dma.done %s464, 128
        $region72: #{tpu_custom_call.1} parent=63 // pred_fallthru
          _
        %s472 = sand.u32 %s33, 1
        %s473 = scalar_lea.sflag [#allocation6], %s472
        %s474 = sand.u32 %s107, 1
        %s475 = smul.addr %s474, 8
        %s476 = scalar_lea.vmem [#allocation7], %s475
        // Predicated region
        $region73: #{tpu_custom_call.1} parent=63 // pred_check
          %p477 = pneg %p120
        $region74: #{tpu_custom_call.1} parent=63 // pred_check_branch
          %479 = sbr.rel (%p477) target = $region76
        $region75: #{tpu_custom_call.1} parent=63 // pred_region
          %480 = dma.done %s473, 128
        $region76: #{tpu_custom_call.1} parent=63 // pred_fallthru
          _
        // Predicated region
        $region77: #{tpu_custom_call.1} parent=63 // pred_check
          %p481 = pneg %p146
        $region78: #{tpu_custom_call.1} parent=63 // pred_check_branch
          %483 = sbr.rel (%p481) target = $region80
        $region79: #{tpu_custom_call.1} parent=63 // pred_region
          %484 = dma.done [#allocation9], 64
        $region80: #{tpu_custom_call.1} parent=63 // pred_fallthru
          _
        // Predicated region
        $region81: #{tpu_custom_call.1} parent=63 // pred_check
          %p485 = pneg %p209
        $region82: #{tpu_custom_call.1} parent=63 // pred_check_branch
          %487 = sbr.rel (%p485) target = $region84
        $region83: #{tpu_custom_call.1} parent=63 // pred_region
          %488 = dma.done [#allocation9], 128
        $region84: #{tpu_custom_call.1} parent=63 // pred_fallthru
          _
        // Predicated region
        $region85: #{tpu_custom_call.1} parent=63 // pred_check
          %p489 = pneg %p230
        $region86: #{tpu_custom_call.1} parent=63 // pred_check_branch
          %491 = sbr.rel (%p489) target = $region88
        $region87: #{tpu_custom_call.1} parent=63 // pred_region
          %492 = dma.done [#allocation12], 512
        $region88: #{tpu_custom_call.1} parent=63 // pred_fallthru
          _
        %s493 = sand.u32 %s55, 1
        %s494 = scalar_lea.sflag [#allocation3], %s493
        %s495 = sand.u32 %s55, 1
        %s496 = smul.addr %s495, 8
        %s497 = scalar_lea.vmem [#allocation2], %s496
        %p498 = pneg %p68
        %p499 = pneg %p65
        %s500 = sand.u32 %s33, 1
        %s501 = scalar_lea.sflag [#allocation6], %s500
        %s502 = sand.u32 %s81, 1
        %s503 = smul.addr %s502, 8
        %s504 = scalar_lea.vmem [#allocation5], %s503
        %p505 = pneg %p94
        %p506 = pneg %p91
        %s507 = sand.u32 %s33, 1
        %s508 = scalar_lea.sflag [#allocation6], %s507
        %s509 = sand.u32 %s107, 1
        %s510 = smul.addr %s509, 8
        %s511 = scalar_lea.vmem [#allocation7], %s510
        %p512 = pneg %p120
        %p513 = pneg %p117
        %p514 = pneg %p146
        %p515 = pneg %p143
        %p516 = pneg %p167
        %p517 = pneg %p164
        %p518 = pneg %p188
        %p519 = pneg %p185
        %p520 = pneg %p209
        %p521 = pneg %p206
        %p522 = pneg %p230
        %p523 = pneg %p227
        %p524 = pneg %p251
        %p525 = pneg %p248
        %p526 = pneg %p272
        %p527 = pneg %p269
        %p528 = pneg %p293
        %p529 = pneg %p290
        %p530 = pneg %p321
        %p531 = pneg %p318
        %s532 = sand.u32 %s308, 1
        %s533 = scalar_lea.sflag [#allocation4], %s532
        %s534 = sand.u32 %s308, 1
        %s535 = smul.addr %s534, 8
        %s536 = scalar_lea.vmem [#allocation13], %s535
        %v537 = vld [vmem:[%s458] sm:$0xff]
        %v538 = vld [vmem:[%s467] sm:$0xff]
        %v539 = vld [vmem:[%s476] sm:$0xff]
        %v540 = vld [vmem:[#allocation11] sm:$0xff]
        %v541 = vld [vmem:[#allocation11 + $0x8] sm:$0xff]
        %v542 = vld [vmem:[#allocation11 + $0x10] sm:$0xff]
        %v543 = vld [vmem:[#allocation11 + $0x18] sm:$0xff]
        %v544 = vld [vmem:[%s4] sm:$0xff]
        %vm545 = vcmask 64512
        %v547 = vsel %vm545, %v537, 0
        %549 = vmatprep.subr.mxu0 0.0
        %550 = vmatpush1.msra.mxu0 %v544
        %551 = vmatprep.subr.mxu0 0.0
        %552 = vmatpush1.msra.mxu0 0.0
        %553 = vmatprep.subr.mxu0 0.0
        %554 = vmatpush1.msra.mxu0 0.0
        %555 = vmatprep.subr.mxu0 0.0
        %556 = vmatpush1.msra.mxu0 0.0
        %557 = vmatprep.subr.mxu0 0.0
        %558 = vmatpush1.msra.mxu0 0.0
        %559 = vmatprep.subr.mxu0 0.0
        %560 = vmatpush1.msra.mxu0 0.0
        %561 = vmatprep.subr.mxu0 0.0
        %562 = vmatpush1.msra.mxu0 0.0
        %563 = vmatprep.subr.mxu0 0.0
        %564 = vmatpush1.msra.mxu0 0.0
        %565 = vmatprep.subr.mxu0 0.0
        %566 = vmatpush1.msra.mxu0 0.0
        %567 = vmatprep.subr.mxu0 0.0
        %568 = vmatpush1.msra.mxu0 0.0
        %569 = vmatprep.subr.mxu0 0.0
        %570 = vmatpush1.msra.mxu0 0.0
        %571 = vmatprep.subr.mxu0 0.0
        %572 = vmatpush1.msra.mxu0 0.0
        %573 = vmatprep.subr.mxu0 0.0
        %574 = vmatpush1.msra.mxu0 0.0
        %575 = vmatprep.subr.mxu0 0.0
        %576 = vmatpush1.msra.mxu0 0.0
        %577 = vmatprep.subr.mxu0 0.0
        %578 = vmatpush1.msra.mxu0 0.0
        %579 = vmatprep.subr.mxu0 0.0
        %580 = vmatpush1.msra.mxu0 0.0
        %581 = vmatprep.subr.mxu0 0.0
        %582 = vmatpush1.msra.mxu0 0.0
        %583 = vmatprep.subr.mxu0 0.0
        %584 = vmatpush1.msra.mxu0 0.0
        %585 = vmatprep.subr.mxu0 0.0
        %586 = vmatpush1.msra.mxu0 0.0
        %587 = vmatprep.subr.mxu0 0.0
        %588 = vmatpush1.msra.mxu0 0.0
        %589 = vmatprep.subr.mxu0 0.0
        %590 = vmatpush1.msra.mxu0 0.0
        %591 = vmatprep.subr.mxu0 0.0
        %592 = vmatpush1.msra.mxu0 0.0
        %593 = vmatprep.subr.mxu0 0.0
        %594 = vmatpush1.msra.mxu0 0.0
        %595 = vmatprep.subr.mxu0 0.0
        %596 = vmatpush1.msra.mxu0 0.0
        %597 = vmatprep.subr.mxu0 0.0
        %598 = vmatpush1.msra.mxu0 0.0
        %599 = vmatprep.subr.mxu0 0.0
        %600 = vmatpush1.msra.mxu0 0.0
        %601 = vmatprep.subr.mxu0 0.0
        %602 = vmatpush1.msra.mxu0 0.0
        %603 = vmatprep.subr.mxu0 0.0
        %604 = vmatpush1.msra.mxu0 0.0
        %605 = vmatprep.subr.mxu0 0.0
        %606 = vmatpush1.msra.mxu0 0.0
        %607 = vmatprep.subr.mxu0 0.0
        %608 = vmatpush1.msra.mxu0 0.0
        %609 = vmatprep.subr.mxu0 0.0
        %610 = vmatpush1.msra.mxu0 0.0
        %611 = vmatprep.subr.mxu0 0.0
        %612 = vmatpush1.msra.mxu0 0.0
        %613 = vmatprep.mubr.f32.mxu0 0.0
        %614 = vmatmul.mubr.f32.gmra.mrb[0].mxu0 %v547
        %v615 = vpop.f32.mrb[0].mxu0
        %v616 = vadd.f32 0.0, %v615
        %v617 = vpop.f32.mrb[0].mxu0
        %618 = vdwg.mxu0
        %v619 = vld [vmem:[%s5] sm:$0xff]
        %v621 = vsel %vm545, %v538, 0
        %623 = vmatprep.subr.mxu0 0.0
        %624 = vmatpush1.msra.mxu0 %v619
        %625 = vmatprep.subr.mxu0 0.0
        %626 = vmatpush1.msra.mxu0 0.0
        %627 = vmatprep.subr.mxu0 0.0
        %628 = vmatpush1.msra.mxu0 0.0
        %629 = vmatprep.subr.mxu0 0.0
        %630 = vmatpush1.msra.mxu0 0.0
        %631 = vmatprep.subr.mxu0 0.0
        %632 = vmatpush1.msra.mxu0 0.0
        %633 = vmatprep.subr.mxu0 0.0
        %634 = vmatpush1.msra.mxu0 0.0
        %635 = vmatprep.subr.mxu0 0.0
        %636 = vmatpush1.msra.mxu0 0.0
        %637 = vmatprep.subr.mxu0 0.0
        %638 = vmatpush1.msra.mxu0 0.0
        %639 = vmatprep.subr.mxu0 0.0
        %640 = vmatpush1.msra.mxu0 0.0
        %641 = vmatprep.subr.mxu0 0.0
        %642 = vmatpush1.msra.mxu0 0.0
        %643 = vmatprep.subr.mxu0 0.0
        %644 = vmatpush1.msra.mxu0 0.0
        %645 = vmatprep.subr.mxu0 0.0
        %646 = vmatpush1.msra.mxu0 0.0
        %647 = vmatprep.subr.mxu0 0.0
        %648 = vmatpush1.msra.mxu0 0.0
        %649 = vmatprep.subr.mxu0 0.0
        %650 = vmatpush1.msra.mxu0 0.0
        %651 = vmatprep.subr.mxu0 0.0
        %652 = vmatpush1.msra.mxu0 0.0
        %653 = vmatprep.subr.mxu0 0.0
        %654 = vmatpush1.msra.mxu0 0.0
        %655 = vmatprep.subr.mxu0 0.0
        %656 = vmatpush1.msra.mxu0 0.0
        %657 = vmatprep.subr.mxu0 0.0
        %658 = vmatpush1.msra.mxu0 0.0
        %659 = vmatprep.subr.mxu0 0.0
        %660 = vmatpush1.msra.mxu0 0.0
        %661 = vmatprep.subr.mxu0 0.0
        %662 = vmatpush1.msra.mxu0 0.0
        %663 = vmatprep.subr.mxu0 0.0
        %664 = vmatpush1.msra.mxu0 0.0
        %665 = vmatprep.subr.mxu0 0.0
        %666 = vmatpush1.msra.mxu0 0.0
        %667 = vmatprep.subr.mxu0 0.0
        %668 = vmatpush1.msra.mxu0 0.0
        %669 = vmatprep.subr.mxu0 0.0
        %670 = vmatpush1.msra.mxu0 0.0
        %671 = vmatprep.subr.mxu0 0.0
        %672 = vmatpush1.msra.mxu0 0.0
        %673 = vmatprep.subr.mxu0 0.0
        %674 = vmatpush1.msra.mxu0 0.0
        %675 = vmatprep.subr.mxu0 0.0
        %676 = vmatpush1.msra.mxu0 0.0
        %677 = vmatprep.subr.mxu0 0.0
        %678 = vmatpush1.msra.mxu0 0.0
        %679 = vmatprep.subr.mxu0 0.0
        %680 = vmatpush1.msra.mxu0 0.0
        %681 = vmatprep.subr.mxu0 0.0
        %682 = vmatpush1.msra.mxu0 0.0
        %683 = vmatprep.subr.mxu0 0.0
        %684 = vmatpush1.msra.mxu0 0.0
        %685 = vmatprep.subr.mxu0 0.0
        %686 = vmatpush1.msra.mxu0 0.0
        %687 = vmatprep.mubr.f32.mxu0 0.0
        %688 = vmatmul.mubr.f32.gmra.mrb[0].mxu0 %v621
        %v689 = vpop.f32.mrb[0].mxu0
        %v690 = vadd.f32 0.0, %v689
        %v691 = vpop.f32.mrb[0].mxu0
        %692 = vdwg.mxu0
        %v693 = vld [vmem:[#allocation10] sm:$0xff]
        %v695 = vsel %vm545, %v539, 0
        %697 = vmatprep.subr.mxu0 0.0
        %698 = vmatpush1.msra.mxu0 %v693
        %699 = vmatprep.subr.mxu0 0.0
        %700 = vmatpush1.msra.mxu0 0.0
        %701 = vmatprep.subr.mxu0 0.0
        %702 = vmatpush1.msra.mxu0 0.0
        %703 = vmatprep.subr.mxu0 0.0
        %704 = vmatpush1.msra.mxu0 0.0
        %705 = vmatprep.subr.mxu0 0.0
        %706 = vmatpush1.msra.mxu0 0.0
        %707 = vmatprep.subr.mxu0 0.0
        %708 = vmatpush1.msra.mxu0 0.0
        %709 = vmatprep.subr.mxu0 0.0
        %710 = vmatpush1.msra.mxu0 0.0
        %711 = vmatprep.subr.mxu0 0.0
        %712 = vmatpush1.msra.mxu0 0.0
        %713 = vmatprep.subr.mxu0 0.0
        %714 = vmatpush1.msra.mxu0 0.0
        %715 = vmatprep.subr.mxu0 0.0
        %716 = vmatpush1.msra.mxu0 0.0
        %717 = vmatprep.subr.mxu0 0.0
        %718 = vmatpush1.msra.mxu0 0.0
        %719 = vmatprep.subr.mxu0 0.0
        %720 = vmatpush1.msra.mxu0 0.0
        %721 = vmatprep.subr.mxu0 0.0
        %722 = vmatpush1.msra.mxu0 0.0
        %723 = vmatprep.subr.mxu0 0.0
        %724 = vmatpush1.msra.mxu0 0.0
        %725 = vmatprep.subr.mxu0 0.0
        %726 = vmatpush1.msra.mxu0 0.0
        %727 = vmatprep.subr.mxu0 0.0
        %728 = vmatpush1.msra.mxu0 0.0
        %729 = vmatprep.subr.mxu0 0.0
        %730 = vmatpush1.msra.mxu0 0.0
        %731 = vmatprep.subr.mxu0 0.0
        %732 = vmatpush1.msra.mxu0 0.0
        %733 = vmatprep.subr.mxu0 0.0
        %734 = vmatpush1.msra.mxu0 0.0
        %735 = vmatprep.subr.mxu0 0.0
        %736 = vmatpush1.msra.mxu0 0.0
        %737 = vmatprep.subr.mxu0 0.0
        %738 = vmatpush1.msra.mxu0 0.0
        %739 = vmatprep.subr.mxu0 0.0
        %740 = vmatpush1.msra.mxu0 0.0
        %741 = vmatprep.subr.mxu0 0.0
        %742 = vmatpush1.msra.mxu0 0.0
        %743 = vmatprep.subr.mxu0 0.0
        %744 = vmatpush1.msra.mxu0 0.0
        %745 = vmatprep.subr.mxu0 0.0
        %746 = vmatpush1.msra.mxu0 0.0
        %747 = vmatprep.subr.mxu0 0.0
        %748 = vmatpush1.msra.mxu0 0.0
        %749 = vmatprep.subr.mxu0 0.0
        %750 = vmatpush1.msra.mxu0 0.0
        %751 = vmatprep.subr.mxu0 0.0
        %752 = vmatpush1.msra.mxu0 0.0
        %753 = vmatprep.subr.mxu0 0.0
        %754 = vmatpush1.msra.mxu0 0.0
        %755 = vmatprep.subr.mxu0 0.0
        %756 = vmatpush1.msra.mxu0 0.0
        %757 = vmatprep.subr.mxu0 0.0
        %758 = vmatpush1.msra.mxu0 0.0
        %759 = vmatprep.subr.mxu0 0.0
        %760 = vmatpush1.msra.mxu0 0.0
        %761 = vmatprep.mubr.f32.mxu0 0.0
        %762 = vmatmul.mubr.f32.gmra.mrb[0].mxu0 %v695
        %v763 = vpop.f32.mrb[0].mxu0
        %v764 = vadd.f32 0.0, %v763
        %v765 = vpop.f32.mrb[0].mxu0
        %766 = vdwg.mxu0
        %v767 = vld [vmem:[#allocation8] sm:$0xf]
        %v768 = vunpack.c.l.bf16 %v767
        %v770 = vsel %vm545, %v616, 0
        %v773 = vsel %vm545, %v690, 0
        %775 = vmatprep.subr.mxu0 0.0
        %776 = vmatpush1.xpose.msra.mxu0 %v773
        %777 = vmatprep.subr.mxu0 0.0
        %778 = vmatpush1.xpose.msra.mxu0 0.0
        %779 = vmatprep.subr.mxu0 0.0
        %780 = vmatpush1.xpose.msra.mxu0 0.0
        %781 = vmatprep.subr.mxu0 0.0
        %782 = vmatpush1.xpose.msra.mxu0 0.0
        %783 = vmatprep.subr.mxu0 0.0
        %784 = vmatpush1.xpose.msra.mxu0 0.0
        %785 = vmatprep.subr.mxu0 0.0
        %786 = vmatpush1.xpose.msra.mxu0 0.0
        %787 = vmatprep.subr.mxu0 0.0
        %788 = vmatpush1.xpose.msra.mxu0 0.0
        %789 = vmatprep.subr.mxu0 0.0
        %790 = vmatpush1.xpose.msra.mxu0 0.0
        %791 = vmatprep.subr.mxu0 0.0
        %792 = vmatpush1.xpose.msra.mxu0 0.0
        %793 = vmatprep.subr.mxu0 0.0
        %794 = vmatpush1.xpose.msra.mxu0 0.0
        %795 = vmatprep.subr.mxu0 0.0
        %796 = vmatpush1.xpose.msra.mxu0 0.0
        %797 = vmatprep.subr.mxu0 0.0
        %798 = vmatpush1.xpose.msra.mxu0 0.0
        %799 = vmatprep.subr.mxu0 0.0
        %800 = vmatpush1.xpose.msra.mxu0 0.0
        %801 = vmatprep.subr.mxu0 0.0
        %802 = vmatpush1.xpose.msra.mxu0 0.0
        %803 = vmatprep.subr.mxu0 0.0
        %804 = vmatpush1.xpose.msra.mxu0 0.0
        %805 = vmatprep.subr.mxu0 0.0
        %806 = vmatpush1.xpose.msra.mxu0 0.0
        %807 = vmatprep.subr.mxu0 0.0
        %808 = vmatpush1.xpose.msra.mxu0 0.0
        %809 = vmatprep.subr.mxu0 0.0
        %810 = vmatpush1.xpose.msra.mxu0 0.0
        %811 = vmatprep.subr.mxu0 0.0
        %812 = vmatpush1.xpose.msra.mxu0 0.0
        %813 = vmatprep.subr.mxu0 0.0
        %814 = vmatpush1.xpose.msra.mxu0 0.0
        %815 = vmatprep.subr.mxu0 0.0
        %816 = vmatpush1.xpose.msra.mxu0 0.0
        %817 = vmatprep.subr.mxu0 0.0
        %818 = vmatpush1.xpose.msra.mxu0 0.0
        %819 = vmatprep.subr.mxu0 0.0
        %820 = vmatpush1.xpose.msra.mxu0 0.0
        %821 = vmatprep.subr.mxu0 0.0
        %822 = vmatpush1.xpose.msra.mxu0 0.0
        %823 = vmatprep.subr.mxu0 0.0
        %824 = vmatpush1.xpose.msra.mxu0 0.0
        %825 = vmatprep.subr.mxu0 0.0
        %826 = vmatpush1.xpose.msra.mxu0 0.0
        %827 = vmatprep.subr.mxu0 0.0
        %828 = vmatpush1.xpose.msra.mxu0 0.0
        %829 = vmatprep.subr.mxu0 0.0
        %830 = vmatpush1.xpose.msra.mxu0 0.0
        %831 = vmatprep.subr.mxu0 0.0
        %832 = vmatpush1.xpose.msra.mxu0 0.0
        %833 = vmatprep.subr.mxu0 0.0
        %834 = vmatpush1.xpose.msra.mxu0 0.0
        %835 = vmatprep.subr.mxu0 0.0
        %836 = vmatpush1.xpose.msra.mxu0 0.0
        %837 = vmatprep.subr.mxu0 0.0
        %838 = vmatpush1.xpose.msra.mxu0 0.0
        %839 = vmatprep.mubr.f32.mxu0 0.0
        %840 = vmatmul.mubr.f32.gmra.mrb[0].mxu0 %v770
        %v841 = vpop.f32.mrb[0].mxu0
        %v842 = vadd.f32 %v768, %v841
        %v843 = vpop.f32.mrb[0].mxu0
        %844 = vdwg.mxu0
        %v845 = vsel %vm545, %v842, -inf
        %846 = vmax.xlane.f32.xlu0 %v845
        %v847 = vpop.xlane.xlu0 %846
        %v848 = vsub.f32 %v842, %v847
        %v849 = vmul.f32 %v848, 1.442695
        %v850 = vpow.pop %v849
        %v851 = vsel %vm545, %v850, 0.0
        %852 = vadd.xlane.f32.xlu0 %v851
        %v853 = vpop.xlane.xlu0 %852
        %v854 = vrcp.pop %v853
        %v855 = vmul.f32 %v850, %v854
        %v857 = vsel %vm545, %v855, 0
        %859 = vmatprep.subr.mxu0 0.0
        %860 = vmatpush1.msra.mxu0 %v764
        %861 = vmatprep.subr.mxu0 0.0
        %862 = vmatpush1.msra.mxu0 0.0
        %863 = vmatprep.subr.mxu0 0.0
        %864 = vmatpush1.msra.mxu0 0.0
        %865 = vmatprep.subr.mxu0 0.0
        %866 = vmatpush1.msra.mxu0 0.0
        %867 = vmatprep.subr.mxu0 0.0
        %868 = vmatpush1.msra.mxu0 0.0
        %869 = vmatprep.subr.mxu0 0.0
        %870 = vmatpush1.msra.mxu0 0.0
        %871 = vmatprep.subr.mxu0 0.0
        %872 = vmatpush1.msra.mxu0 0.0
        %873 = vmatprep.subr.mxu0 0.0
        %874 = vmatpush1.msra.mxu0 0.0
        %875 = vmatprep.subr.mxu0 0.0
        %876 = vmatpush1.msra.mxu0 0.0
        %877 = vmatprep.subr.mxu0 0.0
        %878 = vmatpush1.msra.mxu0 0.0
        %879 = vmatprep.subr.mxu0 0.0
        %880 = vmatpush1.msra.mxu0 0.0
        %881 = vmatprep.subr.mxu0 0.0
        %882 = vmatpush1.msra.mxu0 0.0
        %883 = vmatprep.subr.mxu0 0.0
        %884 = vmatpush1.msra.mxu0 0.0
        %885 = vmatprep.subr.mxu0 0.0
        %886 = vmatpush1.msra.mxu0 0.0
        %887 = vmatprep.subr.mxu0 0.0
        %888 = vmatpush1.msra.mxu0 0.0
        %889 = vmatprep.subr.mxu0 0.0
        %890 = vmatpush1.msra.mxu0 0.0
        %891 = vmatprep.subr.mxu0 0.0
        %892 = vmatpush1.msra.mxu0 0.0
        %893 = vmatprep.subr.mxu0 0.0
        %894 = vmatpush1.msra.mxu0 0.0
        %895 = vmatprep.subr.mxu0 0.0
        %896 = vmatpush1.msra.mxu0 0.0
        %897 = vmatprep.subr.mxu0 0.0
        %898 = vmatpush1.msra.mxu0 0.0
        %899 = vmatprep.subr.mxu0 0.0
        %900 = vmatpush1.msra.mxu0 0.0
        %901 = vmatprep.subr.mxu0 0.0
        %902 = vmatpush1.msra.mxu0 0.0
        %903 = vmatprep.subr.mxu0 0.0
        %904 = vmatpush1.msra.mxu0 0.0
        %905 = vmatprep.subr.mxu0 0.0
        %906 = vmatpush1.msra.mxu0 0.0
        %907 = vmatprep.subr.mxu0 0.0
        %908 = vmatpush1.msra.mxu0 0.0
        %909 = vmatprep.subr.mxu0 0.0
        %910 = vmatpush1.msra.mxu0 0.0
        %911 = vmatprep.subr.mxu0 0.0
        %912 = vmatpush1.msra.mxu0 0.0
        %913 = vmatprep.subr.mxu0 0.0
        %914 = vmatpush1.msra.mxu0 0.0
        %915 = vmatprep.subr.mxu0 0.0
        %916 = vmatpush1.msra.mxu0 0.0
        %917 = vmatprep.subr.mxu0 0.0
        %918 = vmatpush1.msra.mxu0 0.0
        %919 = vmatprep.subr.mxu0 0.0
        %920 = vmatpush1.msra.mxu0 0.0
        %921 = vmatprep.subr.mxu0 0.0
        %922 = vmatpush1.msra.mxu0 0.0
        %923 = vmatprep.mubr.f32.mxu0 0.0
        %924 = vmatmul.mubr.f32.gmra.mrb[0].mxu0 %v857
        %v925 = vpop.f32.mrb[0].mxu0
        %v926 = vadd.f32 0.0, %v925
        %v927 = vpop.f32.mrb[0].mxu0
        %928 = vdwg.mxu0
        %929 = vrot.lane.b32.xlu0 %v537, 120
        %v930 = vpop.permute.xlu0 %929
        %v931 = vsel %vm545, %v930, 0
        %933 = vmatprep.subr.mxu0 0.0
        %934 = vmatpush1.msra.mxu0 %v544
        %935 = vmatprep.subr.mxu0 0.0
        %936 = vmatpush1.msra.mxu0 0.0
        %937 = vmatprep.subr.mxu0 0.0
        %938 = vmatpush1.msra.mxu0 0.0
        %939 = vmatprep.subr.mxu0 0.0
        %940 = vmatpush1.msra.mxu0 0.0
        %941 = vmatprep.subr.mxu0 0.0
        %942 = vmatpush1.msra.mxu0 0.0
        %943 = vmatprep.subr.mxu0 0.0
        %944 = vmatpush1.msra.mxu0 0.0
        %945 = vmatprep.subr.mxu0 0.0
        %946 = vmatpush1.msra.mxu0 0.0
        %947 = vmatprep.subr.mxu0 0.0
        %948 = vmatpush1.msra.mxu0 0.0
        %949 = vmatprep.subr.mxu0 0.0
        %950 = vmatpush1.msra.mxu0 0.0
        %951 = vmatprep.subr.mxu0 0.0
        %952 = vmatpush1.msra.mxu0 0.0
        %953 = vmatprep.subr.mxu0 0.0
        %954 = vmatpush1.msra.mxu0 0.0
        %955 = vmatprep.subr.mxu0 0.0
        %956 = vmatpush1.msra.mxu0 0.0
        %957 = vmatprep.subr.mxu0 0.0
        %958 = vmatpush1.msra.mxu0 0.0
        %959 = vmatprep.subr.mxu0 0.0
        %960 = vmatpush1.msra.mxu0 0.0
        %961 = vmatprep.subr.mxu0 0.0
        %962 = vmatpush1.msra.mxu0 0.0
        %963 = vmatprep.subr.mxu0 0.0
        %964 = vmatpush1.msra.mxu0 0.0
        %965 = vmatprep.subr.mxu0 0.0
        %966 = vmatpush1.msra.mxu0 0.0
        %967 = vmatprep.subr.mxu0 0.0
        %968 = vmatpush1.msra.mxu0 0.0
        %969 = vmatprep.subr.mxu0 0.0
        %970 = vmatpush1.msra.mxu0 0.0
        %971 = vmatprep.subr.mxu0 0.0
        %972 = vmatpush1.msra.mxu0 0.0
        %973 = vmatprep.subr.mxu0 0.0
        %974 = vmatpush1.msra.mxu0 0.0
        %975 = vmatprep.subr.mxu0 0.0
        %976 = vmatpush1.msra.mxu0 0.0
        %977 = vmatprep.subr.mxu0 0.0
        %978 = vmatpush1.msra.mxu0 0.0
        %979 = vmatprep.subr.mxu0 0.0
        %980 = vmatpush1.msra.mxu0 0.0
        %981 = vmatprep.subr.mxu0 0.0
        %982 = vmatpush1.msra.mxu0 0.0
        %983 = vmatprep.subr.mxu0 0.0
        %984 = vmatpush1.msra.mxu0 0.0
        %985 = vmatprep.subr.mxu0 0.0
        %986 = vmatpush1.msra.mxu0 0.0
        %987 = vmatprep.subr.mxu0 0.0
        %988 = vmatpush1.msra.mxu0 0.0
        %989 = vmatprep.subr.mxu0 0.0
        %990 = vmatpush1.msra.mxu0 0.0
        %991 = vmatprep.subr.mxu0 0.0
        %992 = vmatpush1.msra.mxu0 0.0
        %993 = vmatprep.subr.mxu0 0.0
        %994 = vmatpush1.msra.mxu0 0.0
        %995 = vmatprep.subr.mxu0 0.0
        %996 = vmatpush1.msra.mxu0 0.0
        %997 = vmatprep.mubr.f32.mxu0 0.0
        %998 = vmatmul.mubr.f32.gmra.mrb[0].mxu0 %v931
        %v999 = vpop.f32.mrb[0].mxu0
        %v1000 = vadd.f32 0.0, %v999
        %v1001 = vpop.f32.mrb[0].mxu0
        %1002 = vdwg.mxu0
        %1003 = vrot.lane.b32.xlu0 %v538, 120
        %v1004 = vpop.permute.xlu0 %1003
        %v1005 = vsel %vm545, %v1004, 0
        %1007 = vmatprep.subr.mxu0 0.0
        %1008 = vmatpush1.msra.mxu0 %v619
        %1009 = vmatprep.subr.mxu0 0.0
        %1010 = vmatpush1.msra.mxu0 0.0
        %1011 = vmatprep.subr.mxu0 0.0
        %1012 = vmatpush1.msra.mxu0 0.0
        %1013 = vmatprep.subr.mxu0 0.0
        %1014 = vmatpush1.msra.mxu0 0.0
        %1015 = vmatprep.subr.mxu0 0.0
        %1016 = vmatpush1.msra.mxu0 0.0
        %1017 = vmatprep.subr.mxu0 0.0
        %1018 = vmatpush1.msra.mxu0 0.0
        %1019 = vmatprep.subr.mxu0 0.0
        %1020 = vmatpush1.msra.mxu0 0.0
        %1021 = vmatprep.subr.mxu0 0.0
        %1022 = vmatpush1.msra.mxu0 0.0
        %1023 = vmatprep.subr.mxu0 0.0
        %1024 = vmatpush1.msra.mxu0 0.0
        %1025 = vmatprep.subr.mxu0 0.0
        %1026 = vmatpush1.msra.mxu0 0.0
        %1027 = vmatprep.subr.mxu0 0.0
        %1028 = vmatpush1.msra.mxu0 0.0
        %1029 = vmatprep.subr.mxu0 0.0
        %1030 = vmatpush1.msra.mxu0 0.0
        %1031 = vmatprep.subr.mxu0 0.0
        %1032 = vmatpush1.msra.mxu0 0.0
        %1033 = vmatprep.subr.mxu0 0.0
        %1034 = vmatpush1.msra.mxu0 0.0
        %1035 = vmatprep.subr.mxu0 0.0
        %1036 = vmatpush1.msra.mxu0 0.0
        %1037 = vmatprep.subr.mxu0 0.0
        %1038 = vmatpush1.msra.mxu0 0.0
        %1039 = vmatprep.subr.mxu0 0.0
        %1040 = vmatpush1.msra.mxu0 0.0
        %1041 = vmatprep.subr.mxu0 0.0
        %1042 = vmatpush1.msra.mxu0 0.0
        %1043 = vmatprep.subr.mxu0 0.0
        %1044 = vmatpush1.msra.mxu0 0.0
        %1045 = vmatprep.subr.mxu0 0.0
        %1046 = vmatpush1.msra.mxu0 0.0
        %1047 = vmatprep.subr.mxu0 0.0
        %1048 = vmatpush1.msra.mxu0 0.0
        %1049 = vmatprep.subr.mxu0 0.0
        %1050 = vmatpush1.msra.mxu0 0.0
        %1051 = vmatprep.subr.mxu0 0.0
        %1052 = vmatpush1.msra.mxu0 0.0
        %1053 = vmatprep.subr.mxu0 0.0
        %1054 = vmatpush1.msra.mxu0 0.0
        %1055 = vmatprep.subr.mxu0 0.0
        %1056 = vmatpush1.msra.mxu0 0.0
        %1057 = vmatprep.subr.mxu0 0.0
        %1058 = vmatpush1.msra.mxu0 0.0
        %1059 = vmatprep.subr.mxu0 0.0
        %1060 = vmatpush1.msra.mxu0 0.0
        %1061 = vmatprep.subr.mxu0 0.0
        %1062 = vmatpush1.msra.mxu0 0.0
        %1063 = vmatprep.subr.mxu0 0.0
        %1064 = vmatpush1.msra.mxu0 0.0
        %1065 = vmatprep.subr.mxu0 0.0
        %1066 = vmatpush1.msra.mxu0 0.0
        %1067 = vmatprep.subr.mxu0 0.0
        %1068 = vmatpush1.msra.mxu0 0.0
        %1069 = vmatprep.subr.mxu0 0.0
        %1070 = vmatpush1.msra.mxu0 0.0
        %1071 = vmatprep.mubr.f32.mxu0 0.0
        %1072 = vmatmul.mubr.f32.gmra.mrb[0].mxu0 %v1005
        %v1073 = vpop.f32.mrb[0].mxu0
        %v1074 = vadd.f32 0.0, %v1073
        %v1075 = vpop.f32.mrb[0].mxu0
        %1076 = vdwg.mxu0
        %1077 = vrot.lane.b32.xlu0 %v539, 120
        %v1078 = vpop.permute.xlu0 %1077
        %v1079 = vsel %vm545, %v1078, 0
        %1081 = vmatprep.subr.mxu0 0.0
        %1082 = vmatpush1.msra.mxu0 %v693
        %1083 = vmatprep.subr.mxu0 0.0
        %1084 = vmatpush1.msra.mxu0 0.0
        %1085 = vmatprep.subr.mxu0 0.0
        %1086 = vmatpush1.msra.mxu0 0.0
        %1087 = vmatprep.subr.mxu0 0.0
        %1088 = vmatpush1.msra.mxu0 0.0
        %1089 = vmatprep.subr.mxu0 0.0
        %1090 = vmatpush1.msra.mxu0 0.0
        %1091 = vmatprep.subr.mxu0 0.0
        %1092 = vmatpush1.msra.mxu0 0.0
        %1093 = vmatprep.subr.mxu0 0.0
        %1094 = vmatpush1.msra.mxu0 0.0
        %1095 = vmatprep.subr.mxu0 0.0
        %1096 = vmatpush1.msra.mxu0 0.0
        %1097 = vmatprep.subr.mxu0 0.0
        %1098 = vmatpush1.msra.mxu0 0.0
        %1099 = vmatprep.subr.mxu0 0.0
        %1100 = vmatpush1.msra.mxu0 0.0
        %1101 = vmatprep.subr.mxu0 0.0
        %1102 = vmatpush1.msra.mxu0 0.0
        %1103 = vmatprep.subr.mxu0 0.0
        %1104 = vmatpush1.msra.mxu0 0.0
        %1105 = vmatprep.subr.mxu0 0.0
        %1106 = vmatpush1.msra.mxu0 0.0
        %1107 = vmatprep.subr.mxu0 0.0
        %1108 = vmatpush1.msra.mxu0 0.0
        %1109 = vmatprep.subr.mxu0 0.0
        %1110 = vmatpush1.msra.mxu0 0.0
        %1111 = vmatprep.subr.mxu0 0.0
        %1112 = vmatpush1.msra.mxu0 0.0
        %1113 = vmatprep.subr.mxu0 0.0
        %1114 = vmatpush1.msra.mxu0 0.0
        %1115 = vmatprep.subr.mxu0 0.0
        %1116 = vmatpush1.msra.mxu0 0.0
        %1117 = vmatprep.subr.mxu0 0.0
        %1118 = vmatpush1.msra.mxu0 0.0
        %1119 = vmatprep.subr.mxu0 0.0
        %1120 = vmatpush1.msra.mxu0 0.0
        %1121 = vmatprep.subr.mxu0 0.0
        %1122 = vmatpush1.msra.mxu0 0.0
        %1123 = vmatprep.subr.mxu0 0.0
        %1124 = vmatpush1.msra.mxu0 0.0
        %1125 = vmatprep.subr.mxu0 0.0
        %1126 = vmatpush1.msra.mxu0 0.0
        %1127 = vmatprep.subr.mxu0 0.0
        %1128 = vmatpush1.msra.mxu0 0.0
        %1129 = vmatprep.subr.mxu0 0.0
        %1130 = vmatpush1.msra.mxu0 0.0
        %1131 = vmatprep.subr.mxu0 0.0
        %1132 = vmatpush1.msra.mxu0 0.0
        %1133 = vmatprep.subr.mxu0 0.0
        %1134 = vmatpush1.msra.mxu0 0.0
        %1135 = vmatprep.subr.mxu0 0.0
        %1136 = vmatpush1.msra.mxu0 0.0
        %1137 = vmatprep.subr.mxu0 0.0
        %1138 = vmatpush1.msra.mxu0 0.0
        %1139 = vmatprep.subr.mxu0 0.0
        %1140 = vmatpush1.msra.mxu0 0.0
        %1141 = vmatprep.subr.mxu0 0.0
        %1142 = vmatpush1.msra.mxu0 0.0
        %1143 = vmatprep.subr.mxu0 0.0
        %1144 = vmatpush1.msra.mxu0 0.0
        %1145 = vmatprep.mubr.f32.mxu0 0.0
        %1146 = vmatmul.mubr.f32.gmra.mrb[0].mxu0 %v1079
        %v1147 = vpop.f32.mrb[0].mxu0
        %v1148 = vadd.f32 0.0, %v1147
        %v1149 = vpop.f32.mrb[0].mxu0
        %1150 = vdwg.mxu0
        %v1152 = vsel %vm545, %v1000, 0
        %v1155 = vsel %vm545, %v1074, 0
        %1157 = vmatprep.subr.mxu0 0.0
        %1158 = vmatpush1.xpose.msra.mxu0 %v1155
        %1159 = vmatprep.subr.mxu0 0.0
        %1160 = vmatpush1.xpose.msra.mxu0 0.0
        %1161 = vmatprep.subr.mxu0 0.0
        %1162 = vmatpush1.xpose.msra.mxu0 0.0
        %1163 = vmatprep.subr.mxu0 0.0
        %1164 = vmatpush1.xpose.msra.mxu0 0.0
        %1165 = vmatprep.subr.mxu0 0.0
        %1166 = vmatpush1.xpose.msra.mxu0 0.0
        %1167 = vmatprep.subr.mxu0 0.0
        %1168 = vmatpush1.xpose.msra.mxu0 0.0
        %1169 = vmatprep.subr.mxu0 0.0
        %1170 = vmatpush1.xpose.msra.mxu0 0.0
        %1171 = vmatprep.subr.mxu0 0.0
        %1172 = vmatpush1.xpose.msra.mxu0 0.0
        %1173 = vmatprep.subr.mxu0 0.0
        %1174 = vmatpush1.xpose.msra.mxu0 0.0
        %1175 = vmatprep.subr.mxu0 0.0
        %1176 = vmatpush1.xpose.msra.mxu0 0.0
        %1177 = vmatprep.subr.mxu0 0.0
        %1178 = vmatpush1.xpose.msra.mxu0 0.0
        %1179 = vmatprep.subr.mxu0 0.0
        %1180 = vmatpush1.xpose.msra.mxu0 0.0
        %1181 = vmatprep.subr.mxu0 0.0
        %1182 = vmatpush1.xpose.msra.mxu0 0.0
        %1183 = vmatprep.subr.mxu0 0.0
        %1184 = vmatpush1.xpose.msra.mxu0 0.0
        %1185 = vmatprep.subr.mxu0 0.0
        %1186 = vmatpush1.xpose.msra.mxu0 0.0
        %1187 = vmatprep.subr.mxu0 0.0
        %1188 = vmatpush1.xpose.msra.mxu0 0.0
        %1189 = vmatprep.subr.mxu0 0.0
        %1190 = vmatpush1.xpose.msra.mxu0 0.0
        %1191 = vmatprep.subr.mxu0 0.0
        %1192 = vmatpush1.xpose.msra.mxu0 0.0
        %1193 = vmatprep.subr.mxu0 0.0
        %1194 = vmatpush1.xpose.msra.mxu0 0.0
        %1195 = vmatprep.subr.mxu0 0.0
        %1196 = vmatpush1.xpose.msra.mxu0 0.0
        %1197 = vmatprep.subr.mxu0 0.0
        %1198 = vmatpush1.xpose.msra.mxu0 0.0
        %1199 = vmatprep.subr.mxu0 0.0
        %1200 = vmatpush1.xpose.msra.mxu0 0.0
        %1201 = vmatprep.subr.mxu0 0.0
        %1202 = vmatpush1.xpose.msra.mxu0 0.0
        %1203 = vmatprep.subr.mxu0 0.0
        %1204 = vmatpush1.xpose.msra.mxu0 0.0
        %1205 = vmatprep.subr.mxu0 0.0
        %1206 = vmatpush1.xpose.msra.mxu0 0.0
        %1207 = vmatprep.subr.mxu0 0.0
        %1208 = vmatpush1.xpose.msra.mxu0 0.0
        %1209 = vmatprep.subr.mxu0 0.0
        %1210 = vmatpush1.xpose.msra.mxu0 0.0
        %1211 = vmatprep.subr.mxu0 0.0
        %1212 = vmatpush1.xpose.msra.mxu0 0.0
        %1213 = vmatprep.subr.mxu0 0.0
        %1214 = vmatpush1.xpose.msra.mxu0 0.0
        %1215 = vmatprep.subr.mxu0 0.0
        %1216 = vmatpush1.xpose.msra.mxu0 0.0
        %1217 = vmatprep.subr.mxu0 0.0
        %1218 = vmatpush1.xpose.msra.mxu0 0.0
        %1219 = vmatprep.subr.mxu0 0.0
        %1220 = vmatpush1.xpose.msra.mxu0 0.0
        %1221 = vmatprep.mubr.f32.mxu0 0.0
        %1222 = vmatmul.mubr.f32.gmra.mrb[0].mxu0 %v1152
        %v1223 = vpop.f32.mrb[0].mxu0
        %v1224 = vadd.f32 %v768, %v1223
        %v1225 = vpop.f32.mrb[0].mxu0
        %1226 = vdwg.mxu0
        %v1227 = vsel %vm545, %v1224, -inf
        %1228 = vmax.xlane.f32.xlu0 %v1227
        %v1229 = vpop.xlane.xlu0 %1228
        %v1230 = vsub.f32 %v1224, %v1229
        %v1231 = vmul.f32 %v1230, 1.442695
        %v1232 = vpow.pop %v1231
        %v1233 = vsel %vm545, %v1232, 0.0
        %1234 = vadd.xlane.f32.xlu0 %v1233
        %v1235 = vpop.xlane.xlu0 %1234
        %v1236 = vrcp.pop %v1235
        %v1237 = vmul.f32 %v1232, %v1236
        %v1239 = vsel %vm545, %v1237, 0
        %1241 = vmatprep.subr.mxu0 0.0
        %1242 = vmatpush1.msra.mxu0 %v1148
        %1243 = vmatprep.subr.mxu0 0.0
        %1244 = vmatpush1.msra.mxu0 0.0
        %1245 = vmatprep.subr.mxu0 0.0
        %1246 = vmatpush1.msra.mxu0 0.0
        %1247 = vmatprep.subr.mxu0 0.0
        %1248 = vmatpush1.msra.mxu0 0.0
        %1249 = vmatprep.subr.mxu0 0.0
        %1250 = vmatpush1.msra.mxu0 0.0
        %1251 = vmatprep.subr.mxu0 0.0
        %1252 = vmatpush1.msra.mxu0 0.0
        %1253 = vmatprep.subr.mxu0 0.0
        %1254 = vmatpush1.msra.mxu0 0.0
        %1255 = vmatprep.subr.mxu0 0.0
        %1256 = vmatpush1.msra.mxu0 0.0
        %1257 = vmatprep.subr.mxu0 0.0
        %1258 = vmatpush1.msra.mxu0 0.0
        %1259 = vmatprep.subr.mxu0 0.0
        %1260 = vmatpush1.msra.mxu0 0.0
        %1261 = vmatprep.subr.mxu0 0.0
        %1262 = vmatpush1.msra.mxu0 0.0
        %1263 = vmatprep.subr.mxu0 0.0
        %1264 = vmatpush1.msra.mxu0 0.0
        %1265 = vmatprep.subr.mxu0 0.0
        %1266 = vmatpush1.msra.mxu0 0.0
        %1267 = vmatprep.subr.mxu0 0.0
        %1268 = vmatpush1.msra.mxu0 0.0
        %1269 = vmatprep.subr.mxu0 0.0
        %1270 = vmatpush1.msra.mxu0 0.0
        %1271 = vmatprep.subr.mxu0 0.0
        %1272 = vmatpush1.msra.mxu0 0.0
        %1273 = vmatprep.subr.mxu0 0.0
        %1274 = vmatpush1.msra.mxu0 0.0
        %1275 = vmatprep.subr.mxu0 0.0
        %1276 = vmatpush1.msra.mxu0 0.0
        %1277 = vmatprep.subr.mxu0 0.0
        %1278 = vmatpush1.msra.mxu0 0.0
        %1279 = vmatprep.subr.mxu0 0.0
        %1280 = vmatpush1.msra.mxu0 0.0
        %1281 = vmatprep.subr.mxu0 0.0
        %1282 = vmatpush1.msra.mxu0 0.0
        %1283 = vmatprep.subr.mxu0 0.0
        %1284 = vmatpush1.msra.mxu0 0.0
        %1285 = vmatprep.subr.mxu0 0.0
        %1286 = vmatpush1.msra.mxu0 0.0
        %1287 = vmatprep.subr.mxu0 0.0
        %1288 = vmatpush1.msra.mxu0 0.0
        %1289 = vmatprep.subr.mxu0 0.0
        %1290 = vmatpush1.msra.mxu0 0.0
        %1291 = vmatprep.subr.mxu0 0.0
        %1292 = vmatpush1.msra.mxu0 0.0
        %1293 = vmatprep.subr.mxu0 0.0
        %1294 = vmatpush1.msra.mxu0 0.0
        %1295 = vmatprep.subr.mxu0 0.0
        %1296 = vmatpush1.msra.mxu0 0.0
        %1297 = vmatprep.subr.mxu0 0.0
        %1298 = vmatpush1.msra.mxu0 0.0
        %1299 = vmatprep.subr.mxu0 0.0
        %1300 = vmatpush1.msra.mxu0 0.0
        %1301 = vmatprep.subr.mxu0 0.0
        %1302 = vmatpush1.msra.mxu0 0.0
        %1303 = vmatprep.subr.mxu0 0.0
        %1304 = vmatpush1.msra.mxu0 0.0
        %1305 = vmatprep.mubr.f32.mxu0 0.0
        %1306 = vmatmul.mubr.f32.gmra.mrb[0].mxu0 %v1239
        %v1307 = vpop.f32.mrb[0].mxu0
        %v1308 = vadd.f32 0.0, %v1307
        %v1309 = vpop.f32.mrb[0].mxu0
        %1310 = vdwg.mxu0
        %v1312 = vsel %vm545, %v1308, 0
        %1314 = vmatprep.subr.mxu0 0.0
        %1315 = vmatpush1.msra.mxu0 %v541
        %1316 = vmatprep.subr.mxu0 0.0
        %1317 = vmatpush1.msra.mxu0 0.0
        %1318 = vmatprep.subr.mxu0 0.0
        %1319 = vmatpush1.msra.mxu0 0.0
        %1320 = vmatprep.subr.mxu0 0.0
        %1321 = vmatpush1.msra.mxu0 0.0
        %1322 = vmatprep.subr.mxu0 0.0
        %1323 = vmatpush1.msra.mxu0 0.0
        %1324 = vmatprep.subr.mxu0 0.0
        %1325 = vmatpush1.msra.mxu0 0.0
        %1326 = vmatprep.subr.mxu0 0.0
        %1327 = vmatpush1.msra.mxu0 0.0
        %1328 = vmatprep.subr.mxu0 0.0
        %1329 = vmatpush1.msra.mxu0 0.0
        %1330 = vmatprep.subr.mxu0 0.0
        %1331 = vmatpush1.msra.mxu0 0.0
        %1332 = vmatprep.subr.mxu0 0.0
        %1333 = vmatpush1.msra.mxu0 0.0
        %1334 = vmatprep.subr.mxu0 0.0
        %1335 = vmatpush1.msra.mxu0 0.0
        %1336 = vmatprep.subr.mxu0 0.0
        %1337 = vmatpush1.msra.mxu0 0.0
        %1338 = vmatprep.subr.mxu0 0.0
        %1339 = vmatpush1.msra.mxu0 0.0
        %1340 = vmatprep.subr.mxu0 0.0
        %1341 = vmatpush1.msra.mxu0 0.0
        %1342 = vmatprep.subr.mxu0 0.0
        %1343 = vmatpush1.msra.mxu0 0.0
        %1344 = vmatprep.subr.mxu0 0.0
        %1345 = vmatpush1.msra.mxu0 0.0
        %1346 = vmatprep.subr.mxu0 0.0
        %1347 = vmatpush1.msra.mxu0 0.0
        %1348 = vmatprep.subr.mxu0 0.0
        %1349 = vmatpush1.msra.mxu0 0.0
        %1350 = vmatprep.subr.mxu0 0.0
        %1351 = vmatpush1.msra.mxu0 0.0
        %1352 = vmatprep.subr.mxu0 0.0
        %1353 = vmatpush1.msra.mxu0 0.0
        %1354 = vmatprep.subr.mxu0 0.0
        %1355 = vmatpush1.msra.mxu0 0.0
        %1356 = vmatprep.subr.mxu0 0.0
        %1357 = vmatpush1.msra.mxu0 0.0
        %1358 = vmatprep.subr.mxu0 0.0
        %1359 = vmatpush1.msra.mxu0 0.0
        %1360 = vmatprep.subr.mxu0 0.0
        %1361 = vmatpush1.msra.mxu0 0.0
        %1362 = vmatprep.subr.mxu0 0.0
        %1363 = vmatpush1.msra.mxu0 0.0
        %1364 = vmatprep.subr.mxu0 0.0
        %1365 = vmatpush1.msra.mxu0 0.0
        %1366 = vmatprep.subr.mxu0 0.0
        %1367 = vmatpush1.msra.mxu0 0.0
        %1368 = vmatprep.subr.mxu0 0.0
        %1369 = vmatpush1.msra.mxu0 0.0
        %1370 = vmatprep.subr.mxu0 0.0
        %1371 = vmatpush1.msra.mxu0 0.0
        %1372 = vmatprep.subr.mxu0 0.0
        %1373 = vmatpush1.msra.mxu0 0.0
        %1374 = vmatprep.subr.mxu0 0.0
        %1375 = vmatpush1.msra.mxu0 0.0
        %1376 = vmatprep.subr.mxu0 0.0
        %1377 = vmatpush1.msra.mxu0 0.0
        %1378 = vmatprep.mubr.f32.mxu0 0.0
        %1379 = vmatmul.mubr.f32.gmra.mrb[0].mxu0 %v1312
        %v1380 = vpop.f32.mrb[0].mxu0
        %v1381 = vadd.f32 0.0, %v1380
        %v1382 = vpop.f32.mrb[0].mxu0
        %1383 = vdwg.mxu0
        %v1385 = vsel %vm545, %v926, 0
        %1387 = vmatprep.subr.mxu0 0.0
        %1388 = vmatpush1.msra.mxu0 %v540
        %1389 = vmatprep.subr.mxu0 0.0
        %1390 = vmatpush1.msra.mxu0 0.0
        %1391 = vmatprep.subr.mxu0 0.0
        %1392 = vmatpush1.msra.mxu0 0.0
        %1393 = vmatprep.subr.mxu0 0.0
        %1394 = vmatpush1.msra.mxu0 0.0
        %1395 = vmatprep.subr.mxu0 0.0
        %1396 = vmatpush1.msra.mxu0 0.0
        %1397 = vmatprep.subr.mxu0 0.0
        %1398 = vmatpush1.msra.mxu0 0.0
        %1399 = vmatprep.subr.mxu0 0.0
        %1400 = vmatpush1.msra.mxu0 0.0
        %1401 = vmatprep.subr.mxu0 0.0
        %1402 = vmatpush1.msra.mxu0 0.0
        %1403 = vmatprep.subr.mxu0 0.0
        %1404 = vmatpush1.msra.mxu0 0.0
        %1405 = vmatprep.subr.mxu0 0.0
        %1406 = vmatpush1.msra.mxu0 0.0
        %1407 = vmatprep.subr.mxu0 0.0
        %1408 = vmatpush1.msra.mxu0 0.0
        %1409 = vmatprep.subr.mxu0 0.0
        %1410 = vmatpush1.msra.mxu0 0.0
        %1411 = vmatprep.subr.mxu0 0.0
        %1412 = vmatpush1.msra.mxu0 0.0
        %1413 = vmatprep.subr.mxu0 0.0
        %1414 = vmatpush1.msra.mxu0 0.0
        %1415 = vmatprep.subr.mxu0 0.0
        %1416 = vmatpush1.msra.mxu0 0.0
        %1417 = vmatprep.subr.mxu0 0.0
        %1418 = vmatpush1.msra.mxu0 0.0
        %1419 = vmatprep.subr.mxu0 0.0
        %1420 = vmatpush1.msra.mxu0 0.0
        %1421 = vmatprep.subr.mxu0 0.0
        %1422 = vmatpush1.msra.mxu0 0.0
        %1423 = vmatprep.subr.mxu0 0.0
        %1424 = vmatpush1.msra.mxu0 0.0
        %1425 = vmatprep.subr.mxu0 0.0
        %1426 = vmatpush1.msra.mxu0 0.0
        %1427 = vmatprep.subr.mxu0 0.0
        %1428 = vmatpush1.msra.mxu0 0.0
        %1429 = vmatprep.subr.mxu0 0.0
        %1430 = vmatpush1.msra.mxu0 0.0
        %1431 = vmatprep.subr.mxu0 0.0
        %1432 = vmatpush1.msra.mxu0 0.0
        %1433 = vmatprep.subr.mxu0 0.0
        %1434 = vmatpush1.msra.mxu0 0.0
        %1435 = vmatprep.subr.mxu0 0.0
        %1436 = vmatpush1.msra.mxu0 0.0
        %1437 = vmatprep.subr.mxu0 0.0
        %1438 = vmatpush1.msra.mxu0 0.0
        %1439 = vmatprep.subr.mxu0 0.0
        %1440 = vmatpush1.msra.mxu0 0.0
        %1441 = vmatprep.subr.mxu0 0.0
        %1442 = vmatpush1.msra.mxu0 0.0
        %1443 = vmatprep.subr.mxu0 0.0
        %1444 = vmatpush1.msra.mxu0 0.0
        %1445 = vmatprep.subr.mxu0 0.0
        %1446 = vmatpush1.msra.mxu0 0.0
        %1447 = vmatprep.subr.mxu0 0.0
        %1448 = vmatpush1.msra.mxu0 0.0
        %1449 = vmatprep.subr.mxu0 0.0
        %1450 = vmatpush1.msra.mxu0 0.0
        %1451 = vmatprep.mubr.f32.mxu0 0.0
        %1452 = vmatmul.mubr.f32.gmra.mrb[0].mxu0 %v1385
        %v1453 = vpop.f32.mrb[0].mxu0
        %v1454 = vadd.f32 %v1381, %v1453
        %v1455 = vpop.f32.mrb[0].mxu0
        %1456 = vdwg.mxu0
        %1457 = vrot.lane.b32.xlu0 %v537, 112
        %v1458 = vpop.permute.xlu0 %1457
        %v1459 = vsel %vm545, %v1458, 0
        %1461 = vmatprep.subr.mxu0 0.0
        %1462 = vmatpush1.msra.mxu0 %v544
        %1463 = vmatprep.subr.mxu0 0.0
        %1464 = vmatpush1.msra.mxu0 0.0
        %1465 = vmatprep.subr.mxu0 0.0
        %1466 = vmatpush1.msra.mxu0 0.0
        %1467 = vmatprep.subr.mxu0 0.0
        %1468 = vmatpush1.msra.mxu0 0.0
        %1469 = vmatprep.subr.mxu0 0.0
        %1470 = vmatpush1.msra.mxu0 0.0
        %1471 = vmatprep.subr.mxu0 0.0
        %1472 = vmatpush1.msra.mxu0 0.0
        %1473 = vmatprep.subr.mxu0 0.0
        %1474 = vmatpush1.msra.mxu0 0.0
        %1475 = vmatprep.subr.mxu0 0.0
        %1476 = vmatpush1.msra.mxu0 0.0
        %1477 = vmatprep.subr.mxu0 0.0
        %1478 = vmatpush1.msra.mxu0 0.0
        %1479 = vmatprep.subr.mxu0 0.0
        %1480 = vmatpush1.msra.mxu0 0.0
        %1481 = vmatprep.subr.mxu0 0.0
        %1482 = vmatpush1.msra.mxu0 0.0
        %1483 = vmatprep.subr.mxu0 0.0
        %1484 = vmatpush1.msra.mxu0 0.0
        %1485 = vmatprep.subr.mxu0 0.0
        %1486 = vmatpush1.msra.mxu0 0.0
        %1487 = vmatprep.subr.mxu0 0.0
        %1488 = vmatpush1.msra.mxu0 0.0
        %1489 = vmatprep.subr.mxu0 0.0
        %1490 = vmatpush1.msra.mxu0 0.0
        %1491 = vmatprep.subr.mxu0 0.0
        %1492 = vmatpush1.msra.mxu0 0.0
        %1493 = vmatprep.subr.mxu0 0.0
        %1494 = vmatpush1.msra.mxu0 0.0
        %1495 = vmatprep.subr.mxu0 0.0
        %1496 = vmatpush1.msra.mxu0 0.0
        %1497 = vmatprep.subr.mxu0 0.0
        %1498 = vmatpush1.msra.mxu0 0.0
        %1499 = vmatprep.subr.mxu0 0.0
        %1500 = vmatpush1.msra.mxu0 0.0
        %1501 = vmatprep.subr.mxu0 0.0
        %1502 = vmatpush1.msra.mxu0 0.0
        %1503 = vmatprep.subr.mxu0 0.0
        %1504 = vmatpush1.msra.mxu0 0.0
        %1505 = vmatprep.subr.mxu0 0.0
        %1506 = vmatpush1.msra.mxu0 0.0
        %1507 = vmatprep.subr.mxu0 0.0
        %1508 = vmatpush1.msra.mxu0 0.0
        %1509 = vmatprep.subr.mxu0 0.0
        %1510 = vmatpush1.msra.mxu0 0.0
        %1511 = vmatprep.subr.mxu0 0.0
        %1512 = vmatpush1.msra.mxu0 0.0
        %1513 = vmatprep.subr.mxu0 0.0
        %1514 = vmatpush1.msra.mxu0 0.0
        %1515 = vmatprep.subr.mxu0 0.0
        %1516 = vmatpush1.msra.mxu0 0.0
        %1517 = vmatprep.subr.mxu0 0.0
        %1518 = vmatpush1.msra.mxu0 0.0
        %1519 = vmatprep.subr.mxu0 0.0
        %1520 = vmatpush1.msra.mxu0 0.0
        %1521 = vmatprep.subr.mxu0 0.0
        %1522 = vmatpush1.msra.mxu0 0.0
        %1523 = vmatprep.subr.mxu0 0.0
        %1524 = vmatpush1.msra.mxu0 0.0
        %1525 = vmatprep.mubr.f32.mxu0 0.0
        %1526 = vmatmul.mubr.f32.gmra.mrb[0].mxu0 %v1459
        %v1527 = vpop.f32.mrb[0].mxu0
        %v1528 = vadd.f32 0.0, %v1527
        %v1529 = vpop.f32.mrb[0].mxu0
        %1530 = vdwg.mxu0
        %1531 = vrot.lane.b32.xlu0 %v538, 112
        %v1532 = vpop.permute.xlu0 %1531
        %v1533 = vsel %vm545, %v1532, 0
        %1535 = vmatprep.subr.mxu0 0.0
        %1536 = vmatpush1.msra.mxu0 %v619
        %1537 = vmatprep.subr.mxu0 0.0
        %1538 = vmatpush1.msra.mxu0 0.0
        %1539 = vmatprep.subr.mxu0 0.0
        %1540 = vmatpush1.msra.mxu0 0.0
        %1541 = vmatprep.subr.mxu0 0.0
        %1542 = vmatpush1.msra.mxu0 0.0
        %1543 = vmatprep.subr.mxu0 0.0
        %1544 = vmatpush1.msra.mxu0 0.0
        %1545 = vmatprep.subr.mxu0 0.0
        %1546 = vmatpush1.msra.mxu0 0.0
        %1547 = vmatprep.subr.mxu0 0.0
        %1548 = vmatpush1.msra.mxu0 0.0
        %1549 = vmatprep.subr.mxu0 0.0
        %1550 = vmatpush1.msra.mxu0 0.0
        %1551 = vmatprep.subr.mxu0 0.0
        %1552 = vmatpush1.msra.mxu0 0.0
        %1553 = vmatprep.subr.mxu0 0.0
        %1554 = vmatpush1.msra.mxu0 0.0
        %1555 = vmatprep.subr.mxu0 0.0
        %1556 = vmatpush1.msra.mxu0 0.0
        %1557 = vmatprep.subr.mxu0 0.0
        %1558 = vmatpush1.msra.mxu0 0.0
        %1559 = vmatprep.subr.mxu0 0.0
        %1560 = vmatpush1.msra.mxu0 0.0
        %1561 = vmatprep.subr.mxu0 0.0
        %1562 = vmatpush1.msra.mxu0 0.0
        %1563 = vmatprep.subr.mxu0 0.0
        %1564 = vmatpush1.msra.mxu0 0.0
        %1565 = vmatprep.subr.mxu0 0.0
        %1566 = vmatpush1.msra.mxu0 0.0
        %1567 = vmatprep.subr.mxu0 0.0
        %1568 = vmatpush1.msra.mxu0 0.0
        %1569 = vmatprep.subr.mxu0 0.0
        %1570 = vmatpush1.msra.mxu0 0.0
        %1571 = vmatprep.subr.mxu0 0.0
        %1572 = vmatpush1.msra.mxu0 0.0
        %1573 = vmatprep.subr.mxu0 0.0
        %1574 = vmatpush1.msra.mxu0 0.0
        %1575 = vmatprep.subr.mxu0 0.0
        %1576 = vmatpush1.msra.mxu0 0.0
        %1577 = vmatprep.subr.mxu0 0.0
        %1578 = vmatpush1.msra.mxu0 0.0
        %1579 = vmatprep.subr.mxu0 0.0
        %1580 = vmatpush1.msra.mxu0 0.0
        %1581 = vmatprep.subr.mxu0 0.0
        %1582 = vmatpush1.msra.mxu0 0.0
        %1583 = vmatprep.subr.mxu0 0.0
        %1584 = vmatpush1.msra.mxu0 0.0
        %1585 = vmatprep.subr.mxu0 0.0
        %1586 = vmatpush1.msra.mxu0 0.0
        %1587 = vmatprep.subr.mxu0 0.0
        %1588 = vmatpush1.msra.mxu0 0.0
        %1589 = vmatprep.subr.mxu0 0.0
        %1590 = vmatpush1.msra.mxu0 0.0
        %1591 = vmatprep.subr.mxu0 0.0
        %1592 = vmatpush1.msra.mxu0 0.0
        %1593 = vmatprep.subr.mxu0 0.0
        %1594 = vmatpush1.msra.mxu0 0.0
        %1595 = vmatprep.subr.mxu0 0.0
        %1596 = vmatpush1.msra.mxu0 0.0
        %1597 = vmatprep.subr.mxu0 0.0
        %1598 = vmatpush1.msra.mxu0 0.0
        %1599 = vmatprep.mubr.f32.mxu0 0.0
        %1600 = vmatmul.mubr.f32.gmra.mrb[0].mxu0 %v1533
        %v1601 = vpop.f32.mrb[0].mxu0
        %v1602 = vadd.f32 0.0, %v1601
        %v1603 = vpop.f32.mrb[0].mxu0
        %1604 = vdwg.mxu0
        %1605 = vrot.lane.b32.xlu0 %v539, 112
        %v1606 = vpop.permute.xlu0 %1605
        %v1607 = vsel %vm545, %v1606, 0
        %1609 = vmatprep.subr.mxu0 0.0
        %1610 = vmatpush1.msra.mxu0 %v693
        %1611 = vmatprep.subr.mxu0 0.0
        %1612 = vmatpush1.msra.mxu0 0.0
        %1613 = vmatprep.subr.mxu0 0.0
        %1614 = vmatpush1.msra.mxu0 0.0
        %1615 = vmatprep.subr.mxu0 0.0
        %1616 = vmatpush1.msra.mxu0 0.0
        %1617 = vmatprep.subr.mxu0 0.0
        %1618 = vmatpush1.msra.mxu0 0.0
        %1619 = vmatprep.subr.mxu0 0.0
        %1620 = vmatpush1.msra.mxu0 0.0
        %1621 = vmatprep.subr.mxu0 0.0
        %1622 = vmatpush1.msra.mxu0 0.0
        %1623 = vmatprep.subr.mxu0 0.0
        %1624 = vmatpush1.msra.mxu0 0.0
        %1625 = vmatprep.subr.mxu0 0.0
        %1626 = vmatpush1.msra.mxu0 0.0
        %1627 = vmatprep.subr.mxu0 0.0
        %1628 = vmatpush1.msra.mxu0 0.0
        %1629 = vmatprep.subr.mxu0 0.0
        %1630 = vmatpush1.msra.mxu0 0.0
        %1631 = vmatprep.subr.mxu0 0.0
        %1632 = vmatpush1.msra.mxu0 0.0
        %1633 = vmatprep.subr.mxu0 0.0
        %1634 = vmatpush1.msra.mxu0 0.0
        %1635 = vmatprep.subr.mxu0 0.0
        %1636 = vmatpush1.msra.mxu0 0.0
        %1637 = vmatprep.subr.mxu0 0.0
        %1638 = vmatpush1.msra.mxu0 0.0
        %1639 = vmatprep.subr.mxu0 0.0
        %1640 = vmatpush1.msra.mxu0 0.0
        %1641 = vmatprep.subr.mxu0 0.0
        %1642 = vmatpush1.msra.mxu0 0.0
        %1643 = vmatprep.subr.mxu0 0.0
        %1644 = vmatpush1.msra.mxu0 0.0
        %1645 = vmatprep.subr.mxu0 0.0
        %1646 = vmatpush1.msra.mxu0 0.0
        %1647 = vmatprep.subr.mxu0 0.0
        %1648 = vmatpush1.msra.mxu0 0.0
        %1649 = vmatprep.subr.mxu0 0.0
        %1650 = vmatpush1.msra.mxu0 0.0
        %1651 = vmatprep.subr.mxu0 0.0
        %1652 = vmatpush1.msra.mxu0 0.0
        %1653 = vmatprep.subr.mxu0 0.0
        %1654 = vmatpush1.msra.mxu0 0.0
        %1655 = vmatprep.subr.mxu0 0.0
        %1656 = vmatpush1.msra.mxu0 0.0
        %1657 = vmatprep.subr.mxu0 0.0
        %1658 = vmatpush1.msra.mxu0 0.0
        %1659 = vmatprep.subr.mxu0 0.0
        %1660 = vmatpush1.msra.mxu0 0.0
        %1661 = vmatprep.subr.mxu0 0.0
        %1662 = vmatpush1.msra.mxu0 0.0
        %1663 = vmatprep.subr.mxu0 0.0
        %1664 = vmatpush1.msra.mxu0 0.0
        %1665 = vmatprep.subr.mxu0 0.0
        %1666 = vmatpush1.msra.mxu0 0.0
        %1667 = vmatprep.subr.mxu0 0.0
        %1668 = vmatpush1.msra.mxu0 0.0
        %1669 = vmatprep.subr.mxu0 0.0
        %1670 = vmatpush1.msra.mxu0 0.0
        %1671 = vmatprep.subr.mxu0 0.0
        %1672 = vmatpush1.msra.mxu0 0.0
        %1673 = vmatprep.mubr.f32.mxu0 0.0
        %1674 = vmatmul.mubr.f32.gmra.mrb[0].mxu0 %v1607
        %v1675 = vpop.f32.mrb[0].mxu0
        %v1676 = vadd.f32 0.0, %v1675
        %v1677 = vpop.f32.mrb[0].mxu0
        %1678 = vdwg.mxu0
        %v1680 = vsel %vm545, %v1528, 0
        %v1683 = vsel %vm545, %v1602, 0
        %1685 = vmatprep.subr.mxu0 0.0
        %1686 = vmatpush1.xpose.msra.mxu0 %v1683
        %1687 = vmatprep.subr.mxu0 0.0
        %1688 = vmatpush1.xpose.msra.mxu0 0.0
        %1689 = vmatprep.subr.mxu0 0.0
        %1690 = vmatpush1.xpose.msra.mxu0 0.0
        %1691 = vmatprep.subr.mxu0 0.0
        %1692 = vmatpush1.xpose.msra.mxu0 0.0
        %1693 = vmatprep.subr.mxu0 0.0
        %1694 = vmatpush1.xpose.msra.mxu0 0.0
        %1695 = vmatprep.subr.mxu0 0.0
        %1696 = vmatpush1.xpose.msra.mxu0 0.0
        %1697 = vmatprep.subr.mxu0 0.0
        %1698 = vmatpush1.xpose.msra.mxu0 0.0
        %1699 = vmatprep.subr.mxu0 0.0
        %1700 = vmatpush1.xpose.msra.mxu0 0.0
        %1701 = vmatprep.subr.mxu0 0.0
        %1702 = vmatpush1.xpose.msra.mxu0 0.0
        %1703 = vmatprep.subr.mxu0 0.0
        %1704 = vmatpush1.xpose.msra.mxu0 0.0
        %1705 = vmatprep.subr.mxu0 0.0
        %1706 = vmatpush1.xpose.msra.mxu0 0.0
        %1707 = vmatprep.subr.mxu0 0.0
        %1708 = vmatpush1.xpose.msra.mxu0 0.0
        %1709 = vmatprep.subr.mxu0 0.0
        %1710 = vmatpush1.xpose.msra.mxu0 0.0
        %1711 = vmatprep.subr.mxu0 0.0
        %1712 = vmatpush1.xpose.msra.mxu0 0.0
        %1713 = vmatprep.subr.mxu0 0.0
        %1714 = vmatpush1.xpose.msra.mxu0 0.0
        %1715 = vmatprep.subr.mxu0 0.0
        %1716 = vmatpush1.xpose.msra.mxu0 0.0
        %1717 = vmatprep.subr.mxu0 0.0
        %1718 = vmatpush1.xpose.msra.mxu0 0.0
        %1719 = vmatprep.subr.mxu0 0.0
        %1720 = vmatpush1.xpose.msra.mxu0 0.0
        %1721 = vmatprep.subr.mxu0 0.0
        %1722 = vmatpush1.xpose.msra.mxu0 0.0
        %1723 = vmatprep.subr.mxu0 0.0
        %1724 = vmatpush1.xpose.msra.mxu0 0.0
        %1725 = vmatprep.subr.mxu0 0.0
        %1726 = vmatpush1.xpose.msra.mxu0 0.0
        %1727 = vmatprep.subr.mxu0 0.0
        %1728 = vmatpush1.xpose.msra.mxu0 0.0
        %1729 = vmatprep.subr.mxu0 0.0
        %1730 = vmatpush1.xpose.msra.mxu0 0.0
        %1731 = vmatprep.subr.mxu0 0.0
        %1732 = vmatpush1.xpose.msra.mxu0 0.0
        %1733 = vmatprep.subr.mxu0 0.0
        %1734 = vmatpush1.xpose.msra.mxu0 0.0
        %1735 = vmatprep.subr.mxu0 0.0
        %1736 = vmatpush1.xpose.msra.mxu0 0.0
        %1737 = vmatprep.subr.mxu0 0.0
        %1738 = vmatpush1.xpose.msra.mxu0 0.0
        %1739 = vmatprep.subr.mxu0 0.0
        %1740 = vmatpush1.xpose.msra.mxu0 0.0
        %1741 = vmatprep.subr.mxu0 0.0
        %1742 = vmatpush1.xpose.msra.mxu0 0.0
        %1743 = vmatprep.subr.mxu0 0.0
        %1744 = vmatpush1.xpose.msra.mxu0 0.0
        %1745 = vmatprep.subr.mxu0 0.0
        %1746 = vmatpush1.xpose.msra.mxu0 0.0
        %1747 = vmatprep.subr.mxu0 0.0
        %1748 = vmatpush1.xpose.msra.mxu0 0.0
        %1749 = vmatprep.mubr.f32.mxu0 0.0
        %1750 = vmatmul.mubr.f32.gmra.mrb[0].mxu0 %v1680
        %v1751 = vpop.f32.mrb[0].mxu0
        %v1752 = vadd.f32 %v768, %v1751
        %v1753 = vpop.f32.mrb[0].mxu0
        %1754 = vdwg.mxu0
        %v1755 = vsel %vm545, %v1752, -inf
        %1756 = vmax.xlane.f32.xlu0 %v1755
        %v1757 = vpop.xlane.xlu0 %1756
        %v1758 = vsub.f32 %v1752, %v1757
        %v1759 = vmul.f32 %v1758, 1.442695
        %v1760 = vpow.pop %v1759
        %v1761 = vsel %vm545, %v1760, 0.0
        %1762 = vadd.xlane.f32.xlu0 %v1761
        %v1763 = vpop.xlane.xlu0 %1762
        %v1764 = vrcp.pop %v1763
        %v1765 = vmul.f32 %v1760, %v1764
        %v1767 = vsel %vm545, %v1765, 0
        %1769 = vmatprep.subr.mxu0 0.0
        %1770 = vmatpush1.msra.mxu0 %v1676
        %1771 = vmatprep.subr.mxu0 0.0
        %1772 = vmatpush1.msra.mxu0 0.0
        %1773 = vmatprep.subr.mxu0 0.0
        %1774 = vmatpush1.msra.mxu0 0.0
        %1775 = vmatprep.subr.mxu0 0.0
        %1776 = vmatpush1.msra.mxu0 0.0
        %1777 = vmatprep.subr.mxu0 0.0
        %1778 = vmatpush1.msra.mxu0 0.0
        %1779 = vmatprep.subr.mxu0 0.0
        %1780 = vmatpush1.msra.mxu0 0.0
        %1781 = vmatprep.subr.mxu0 0.0
        %1782 = vmatpush1.msra.mxu0 0.0
        %1783 = vmatprep.subr.mxu0 0.0
        %1784 = vmatpush1.msra.mxu0 0.0
        %1785 = vmatprep.subr.mxu0 0.0
        %1786 = vmatpush1.msra.mxu0 0.0
        %1787 = vmatprep.subr.mxu0 0.0
        %1788 = vmatpush1.msra.mxu0 0.0
        %1789 = vmatprep.subr.mxu0 0.0
        %1790 = vmatpush1.msra.mxu0 0.0
        %1791 = vmatprep.subr.mxu0 0.0
        %1792 = vmatpush1.msra.mxu0 0.0
        %1793 = vmatprep.subr.mxu0 0.0
        %1794 = vmatpush1.msra.mxu0 0.0
        %1795 = vmatprep.subr.mxu0 0.0
        %1796 = vmatpush1.msra.mxu0 0.0
        %1797 = vmatprep.subr.mxu0 0.0
        %1798 = vmatpush1.msra.mxu0 0.0
        %1799 = vmatprep.subr.mxu0 0.0
        %1800 = vmatpush1.msra.mxu0 0.0
        %1801 = vmatprep.subr.mxu0 0.0
        %1802 = vmatpush1.msra.mxu0 0.0
        %1803 = vmatprep.subr.mxu0 0.0
        %1804 = vmatpush1.msra.mxu0 0.0
        %1805 = vmatprep.subr.mxu0 0.0
        %1806 = vmatpush1.msra.mxu0 0.0
        %1807 = vmatprep.subr.mxu0 0.0
        %1808 = vmatpush1.msra.mxu0 0.0
        %1809 = vmatprep.subr.mxu0 0.0
        %1810 = vmatpush1.msra.mxu0 0.0
        %1811 = vmatprep.subr.mxu0 0.0
        %1812 = vmatpush1.msra.mxu0 0.0
        %1813 = vmatprep.subr.mxu0 0.0
        %1814 = vmatpush1.msra.mxu0 0.0
        %1815 = vmatprep.subr.mxu0 0.0
        %1816 = vmatpush1.msra.mxu0 0.0
        %1817 = vmatprep.subr.mxu0 0.0
        %1818 = vmatpush1.msra.mxu0 0.0
        %1819 = vmatprep.subr.mxu0 0.0
        %1820 = vmatpush1.msra.mxu0 0.0
        %1821 = vmatprep.subr.mxu0 0.0
        %1822 = vmatpush1.msra.mxu0 0.0
        %1823 = vmatprep.subr.mxu0 0.0
        %1824 = vmatpush1.msra.mxu0 0.0
        %1825 = vmatprep.subr.mxu0 0.0
        %1826 = vmatpush1.msra.mxu0 0.0
        %1827 = vmatprep.subr.mxu0 0.0
        %1828 = vmatpush1.msra.mxu0 0.0
        %1829 = vmatprep.subr.mxu0 0.0
        %1830 = vmatpush1.msra.mxu0 0.0
        %1831 = vmatprep.subr.mxu0 0.0
        %1832 = vmatpush1.msra.mxu0 0.0
        %1833 = vmatprep.mubr.f32.mxu0 0.0
        %1834 = vmatmul.mubr.f32.gmra.mrb[0].mxu0 %v1767
        %v1835 = vpop.f32.mrb[0].mxu0
        %v1836 = vadd.f32 0.0, %v1835
        %v1837 = vpop.f32.mrb[0].mxu0
        %1838 = vdwg.mxu0
        %v1840 = vsel %vm545, %v1836, 0
        %1842 = vmatprep.subr.mxu0 0.0
        %1843 = vmatpush1.msra.mxu0 %v542
        %1844 = vmatprep.subr.mxu0 0.0
        %1845 = vmatpush1.msra.mxu0 0.0
        %1846 = vmatprep.subr.mxu0 0.0
        %1847 = vmatpush1.msra.mxu0 0.0
        %1848 = vmatprep.subr.mxu0 0.0
        %1849 = vmatpush1.msra.mxu0 0.0
        %1850 = vmatprep.subr.mxu0 0.0
        %1851 = vmatpush1.msra.mxu0 0.0
        %1852 = vmatprep.subr.mxu0 0.0
        %1853 = vmatpush1.msra.mxu0 0.0
        %1854 = vmatprep.subr.mxu0 0.0
        %1855 = vmatpush1.msra.mxu0 0.0
        %1856 = vmatprep.subr.mxu0 0.0
        %1857 = vmatpush1.msra.mxu0 0.0
        %1858 = vmatprep.subr.mxu0 0.0
        %1859 = vmatpush1.msra.mxu0 0.0
        %1860 = vmatprep.subr.mxu0 0.0
        %1861 = vmatpush1.msra.mxu0 0.0
        %1862 = vmatprep.subr.mxu0 0.0
        %1863 = vmatpush1.msra.mxu0 0.0
        %1864 = vmatprep.subr.mxu0 0.0
        %1865 = vmatpush1.msra.mxu0 0.0
        %1866 = vmatprep.subr.mxu0 0.0
        %1867 = vmatpush1.msra.mxu0 0.0
        %1868 = vmatprep.subr.mxu0 0.0
        %1869 = vmatpush1.msra.mxu0 0.0
        %1870 = vmatprep.subr.mxu0 0.0
        %1871 = vmatpush1.msra.mxu0 0.0
        %1872 = vmatprep.subr.mxu0 0.0
        %1873 = vmatpush1.msra.mxu0 0.0
        %1874 = vmatprep.subr.mxu0 0.0
        %1875 = vmatpush1.msra.mxu0 0.0
        %1876 = vmatprep.subr.mxu0 0.0
        %1877 = vmatpush1.msra.mxu0 0.0
        %1878 = vmatprep.subr.mxu0 0.0
        %1879 = vmatpush1.msra.mxu0 0.0
        %1880 = vmatprep.subr.mxu0 0.0
        %1881 = vmatpush1.msra.mxu0 0.0
        %1882 = vmatprep.subr.mxu0 0.0
        %1883 = vmatpush1.msra.mxu0 0.0
        %1884 = vmatprep.subr.mxu0 0.0
        %1885 = vmatpush1.msra.mxu0 0.0
        %1886 = vmatprep.subr.mxu0 0.0
        %1887 = vmatpush1.msra.mxu0 0.0
        %1888 = vmatprep.subr.mxu0 0.0
        %1889 = vmatpush1.msra.mxu0 0.0
        %1890 = vmatprep.subr.mxu0 0.0
        %1891 = vmatpush1.msra.mxu0 0.0
        %1892 = vmatprep.subr.mxu0 0.0
        %1893 = vmatpush1.msra.mxu0 0.0
        %1894 = vmatprep.subr.mxu0 0.0
        %1895 = vmatpush1.msra.mxu0 0.0
        %1896 = vmatprep.subr.mxu0 0.0
        %1897 = vmatpush1.msra.mxu0 0.0
        %1898 = vmatprep.subr.mxu0 0.0
        %1899 = vmatpush1.msra.mxu0 0.0
        %1900 = vmatprep.subr.mxu0 0.0
        %1901 = vmatpush1.msra.mxu0 0.0
        %1902 = vmatprep.subr.mxu0 0.0
        %1903 = vmatpush1.msra.mxu0 0.0
        %1904 = vmatprep.subr.mxu0 0.0
        %1905 = vmatpush1.msra.mxu0 0.0
        %1906 = vmatprep.mubr.f32.mxu0 0.0
        %1907 = vmatmul.mubr.f32.gmra.mrb[0].mxu0 %v1840
        %v1908 = vpop.f32.mrb[0].mxu0
        %v1909 = vadd.f32 0.0, %v1908
        %v1910 = vpop.f32.mrb[0].mxu0
        %1911 = vdwg.mxu0
        %v1912 = vadd.f32 %v1454, %v1909
        %1913 = vrot.lane.b32.xlu0 %v537, 104
        %v1914 = vpop.permute.xlu0 %1913
        %v1915 = vsel %vm545, %v1914, 0
        %1917 = vmatprep.subr.mxu0 0.0
        %1918 = vmatpush1.msra.mxu0 %v544
        %1919 = vmatprep.subr.mxu0 0.0
        %1920 = vmatpush1.msra.mxu0 0.0
        %1921 = vmatprep.subr.mxu0 0.0
        %1922 = vmatpush1.msra.mxu0 0.0
        %1923 = vmatprep.subr.mxu0 0.0
        %1924 = vmatpush1.msra.mxu0 0.0
        %1925 = vmatprep.subr.mxu0 0.0
        %1926 = vmatpush1.msra.mxu0 0.0
        %1927 = vmatprep.subr.mxu0 0.0
        %1928 = vmatpush1.msra.mxu0 0.0
        %1929 = vmatprep.subr.mxu0 0.0
        %1930 = vmatpush1.msra.mxu0 0.0
        %1931 = vmatprep.subr.mxu0 0.0
        %1932 = vmatpush1.msra.mxu0 0.0
        %1933 = vmatprep.subr.mxu0 0.0
        %1934 = vmatpush1.msra.mxu0 0.0
        %1935 = vmatprep.subr.mxu0 0.0
        %1936 = vmatpush1.msra.mxu0 0.0
        %1937 = vmatprep.subr.mxu0 0.0
        %1938 = vmatpush1.msra.mxu0 0.0
        %1939 = vmatprep.subr.mxu0 0.0
        %1940 = vmatpush1.msra.mxu0 0.0
        %1941 = vmatprep.subr.mxu0 0.0
        %1942 = vmatpush1.msra.mxu0 0.0
        %1943 = vmatprep.subr.mxu0 0.0
        %1944 = vmatpush1.msra.mxu0 0.0
        %1945 = vmatprep.subr.mxu0 0.0
        %1946 = vmatpush1.msra.mxu0 0.0
        %1947 = vmatprep.subr.mxu0 0.0
        %1948 = vmatpush1.msra.mxu0 0.0
        %1949 = vmatprep.subr.mxu0 0.0
        %1950 = vmatpush1.msra.mxu0 0.0
        %1951 = vmatprep.subr.mxu0 0.0
        %1952 = vmatpush1.msra.mxu0 0.0
        %1953 = vmatprep.subr.mxu0 0.0
        %1954 = vmatpush1.msra.mxu0 0.0
        %1955 = vmatprep.subr.mxu0 0.0
        %1956 = vmatpush1.msra.mxu0 0.0
        %1957 = vmatprep.subr.mxu0 0.0
        %1958 = vmatpush1.msra.mxu0 0.0
        %1959 = vmatprep.subr.mxu0 0.0
        %1960 = vmatpush1.msra.mxu0 0.0
        %1961 = vmatprep.subr.mxu0 0.0
        %1962 = vmatpush1.msra.mxu0 0.0
        %1963 = vmatprep.subr.mxu0 0.0
        %1964 = vmatpush1.msra.mxu0 0.0
        %1965 = vmatprep.subr.mxu0 0.0
        %1966 = vmatpush1.msra.mxu0 0.0
        %1967 = vmatprep.subr.mxu0 0.0
        %1968 = vmatpush1.msra.mxu0 0.0
        %1969 = vmatprep.subr.mxu0 0.0
        %1970 = vmatpush1.msra.mxu0 0.0
        %1971 = vmatprep.subr.mxu0 0.0
        %1972 = vmatpush1.msra.mxu0 0.0
        %1973 = vmatprep.subr.mxu0 0.0
        %1974 = vmatpush1.msra.mxu0 0.0
        %1975 = vmatprep.subr.mxu0 0.0
        %1976 = vmatpush1.msra.mxu0 0.0
        %1977 = vmatprep.subr.mxu0 0.0
        %1978 = vmatpush1.msra.mxu0 0.0
        %1979 = vmatprep.subr.mxu0 0.0
        %1980 = vmatpush1.msra.mxu0 0.0
        %1981 = vmatprep.mubr.f32.mxu0 0.0
        %1982 = vmatmul.mubr.f32.gmra.mrb[0].mxu0 %v1915
        %v1983 = vpop.f32.mrb[0].mxu0
        %v1984 = vadd.f32 0.0, %v1983
        %v1985 = vpop.f32.mrb[0].mxu0
        %1986 = vdwg.mxu0
        %1987 = vrot.lane.b32.xlu0 %v538, 104
        %v1988 = vpop.permute.xlu0 %1987
        %v1989 = vsel %vm545, %v1988, 0
        %1991 = vmatprep.subr.mxu0 0.0
        %1992 = vmatpush1.msra.mxu0 %v619
        %1993 = vmatprep.subr.mxu0 0.0
        %1994 = vmatpush1.msra.mxu0 0.0
        %1995 = vmatprep.subr.mxu0 0.0
        %1996 = vmatpush1.msra.mxu0 0.0
        %1997 = vmatprep.subr.mxu0 0.0
        %1998 = vmatpush1.msra.mxu0 0.0
        %1999 = vmatprep.subr.mxu0 0.0
        %2000 = vmatpush1.msra.mxu0 0.0
        %2001 = vmatprep.subr.mxu0 0.0
        %2002 = vmatpush1.msra.mxu0 0.0
        %2003 = vmatprep.subr.mxu0 0.0
        %2004 = vmatpush1.msra.mxu0 0.0
        %2005 = vmatprep.subr.mxu0 0.0
        %2006 = vmatpush1.msra.mxu0 0.0
        %2007 = vmatprep.subr.mxu0 0.0
        %2008 = vmatpush1.msra.mxu0 0.0
        %2009 = vmatprep.subr.mxu0 0.0
        %2010 = vmatpush1.msra.mxu0 0.0
        %2011 = vmatprep.subr.mxu0 0.0
        %2012 = vmatpush1.msra.mxu0 0.0
        %2013 = vmatprep.subr.mxu0 0.0
        %2014 = vmatpush1.msra.mxu0 0.0
        %2015 = vmatprep.subr.mxu0 0.0
        %2016 = vmatpush1.msra.mxu0 0.0
        %2017 = vmatprep.subr.mxu0 0.0
        %2018 = vmatpush1.msra.mxu0 0.0
        %2019 = vmatprep.subr.mxu0 0.0
        %2020 = vmatpush1.msra.mxu0 0.0
        %2021 = vmatprep.subr.mxu0 0.0
        %2022 = vmatpush1.msra.mxu0 0.0
        %2023 = vmatprep.subr.mxu0 0.0
        %2024 = vmatpush1.msra.mxu0 0.0
        %2025 = vmatprep.subr.mxu0 0.0
        %2026 = vmatpush1.msra.mxu0 0.0
        %2027 = vmatprep.subr.mxu0 0.0
        %2028 = vmatpush1.msra.mxu0 0.0
        %2029 = vmatprep.subr.mxu0 0.0
        %2030 = vmatpush1.msra.mxu0 0.0
        %2031 = vmatprep.subr.mxu0 0.0
        %2032 = vmatpush1.msra.mxu0 0.0
        %2033 = vmatprep.subr.mxu0 0.0
        %2034 = vmatpush1.msra.mxu0 0.0
        %2035 = vmatprep.subr.mxu0 0.0
        %2036 = vmatpush1.msra.mxu0 0.0
        %2037 = vmatprep.subr.mxu0 0.0
        %2038 = vmatpush1.msra.mxu0 0.0
        %2039 = vmatprep.subr.mxu0 0.0
        %2040 = vmatpush1.msra.mxu0 0.0
        %2041 = vmatprep.subr.mxu0 0.0
        %2042 = vmatpush1.msra.mxu0 0.0
        %2043 = vmatprep.subr.mxu0 0.0
        %2044 = vmatpush1.msra.mxu0 0.0
        %2045 = vmatprep.subr.mxu0 0.0
        %2046 = vmatpush1.msra.mxu0 0.0
        %2047 = vmatprep.subr.mxu0 0.0
        %2048 = vmatpush1.msra.mxu0 0.0
        %2049 = vmatprep.subr.mxu0 0.0
        %2050 = vmatpush1.msra.mxu0 0.0
        %2051 = vmatprep.subr.mxu0 0.0
        %2052 = vmatpush1.msra.mxu0 0.0
        %2053 = vmatprep.subr.mxu0 0.0
        %2054 = vmatpush1.msra.mxu0 0.0
        %2055 = vmatprep.mubr.f32.mxu0 0.0
        %2056 = vmatmul.mubr.f32.gmra.mrb[0].mxu0 %v1989
        %v2057 = vpop.f32.mrb[0].mxu0
        %v2058 = vadd.f32 0.0, %v2057
        %v2059 = vpop.f32.mrb[0].mxu0
        %2060 = vdwg.mxu0
        %2061 = vrot.lane.b32.xlu0 %v539, 104
        %v2062 = vpop.permute.xlu0 %2061
        %v2063 = vsel %vm545, %v2062, 0
        %2065 = vmatprep.subr.mxu0 0.0
        %2066 = vmatpush1.msra.mxu0 %v693
        %2067 = vmatprep.subr.mxu0 0.0
        %2068 = vmatpush1.msra.mxu0 0.0
        %2069 = vmatprep.subr.mxu0 0.0
        %2070 = vmatpush1.msra.mxu0 0.0
        %2071 = vmatprep.subr.mxu0 0.0
        %2072 = vmatpush1.msra.mxu0 0.0
        %2073 = vmatprep.subr.mxu0 0.0
        %2074 = vmatpush1.msra.mxu0 0.0
        %2075 = vmatprep.subr.mxu0 0.0
        %2076 = vmatpush1.msra.mxu0 0.0
        %2077 = vmatprep.subr.mxu0 0.0
        %2078 = vmatpush1.msra.mxu0 0.0
        %2079 = vmatprep.subr.mxu0 0.0
        %2080 = vmatpush1.msra.mxu0 0.0
        %2081 = vmatprep.subr.mxu0 0.0
        %2082 = vmatpush1.msra.mxu0 0.0
        %2083 = vmatprep.subr.mxu0 0.0
        %2084 = vmatpush1.msra.mxu0 0.0
        %2085 = vmatprep.subr.mxu0 0.0
        %2086 = vmatpush1.msra.mxu0 0.0
        %2087 = vmatprep.subr.mxu0 0.0
        %2088 = vmatpush1.msra.mxu0 0.0
        %2089 = vmatprep.subr.mxu0 0.0
        %2090 = vmatpush1.msra.mxu0 0.0
        %2091 = vmatprep.subr.mxu0 0.0
        %2092 = vmatpush1.msra.mxu0 0.0
        %2093 = vmatprep.subr.mxu0 0.0
        %2094 = vmatpush1.msra.mxu0 0.0
        %2095 = vmatprep.subr.mxu0 0.0
        %2096 = vmatpush1.msra.mxu0 0.0
        %2097 = vmatprep.subr.mxu0 0.0
        %2098 = vmatpush1.msra.mxu0 0.0
        %2099 = vmatprep.subr.mxu0 0.0
        %2100 = vmatpush1.msra.mxu0 0.0
        %2101 = vmatprep.subr.mxu0 0.0
        %2102 = vmatpush1.msra.mxu0 0.0
        %2103 = vmatprep.subr.mxu0 0.0
        %2104 = vmatpush1.msra.mxu0 0.0
        %2105 = vmatprep.subr.mxu0 0.0
        %2106 = vmatpush1.msra.mxu0 0.0
        %2107 = vmatprep.subr.mxu0 0.0
        %2108 = vmatpush1.msra.mxu0 0.0
        %2109 = vmatprep.subr.mxu0 0.0
        %2110 = vmatpush1.msra.mxu0 0.0
        %2111 = vmatprep.subr.mxu0 0.0
        %2112 = vmatpush1.msra.mxu0 0.0
        %2113 = vmatprep.subr.mxu0 0.0
        %2114 = vmatpush1.msra.mxu0 0.0
        %2115 = vmatprep.subr.mxu0 0.0
        %2116 = vmatpush1.msra.mxu0 0.0
        %2117 = vmatprep.subr.mxu0 0.0
        %2118 = vmatpush1.msra.mxu0 0.0
        %2119 = vmatprep.subr.mxu0 0.0
        %2120 = vmatpush1.msra.mxu0 0.0
        %2121 = vmatprep.subr.mxu0 0.0
        %2122 = vmatpush1.msra.mxu0 0.0
        %2123 = vmatprep.subr.mxu0 0.0
        %2124 = vmatpush1.msra.mxu0 0.0
        %2125 = vmatprep.subr.mxu0 0.0
        %2126 = vmatpush1.msra.mxu0 0.0
        %2127 = vmatprep.subr.mxu0 0.0
        %2128 = vmatpush1.msra.mxu0 0.0
        %2129 = vmatprep.mubr.f32.mxu0 0.0
        %2130 = vmatmul.mubr.f32.gmra.mrb[0].mxu0 %v2063
        %v2131 = vpop.f32.mrb[0].mxu0
        %v2132 = vadd.f32 0.0, %v2131
        %v2133 = vpop.f32.mrb[0].mxu0
        %2134 = vdwg.mxu0
        %v2136 = vsel %vm545, %v1984, 0
        %v2139 = vsel %vm545, %v2058, 0
        %2141 = vmatprep.subr.mxu0 0.0
        %2142 = vmatpush1.xpose.msra.mxu0 %v2139
        %2143 = vmatprep.subr.mxu0 0.0
        %2144 = vmatpush1.xpose.msra.mxu0 0.0
        %2145 = vmatprep.subr.mxu0 0.0
        %2146 = vmatpush1.xpose.msra.mxu0 0.0
        %2147 = vmatprep.subr.mxu0 0.0
        %2148 = vmatpush1.xpose.msra.mxu0 0.0
        %2149 = vmatprep.subr.mxu0 0.0
        %2150 = vmatpush1.xpose.msra.mxu0 0.0
        %2151 = vmatprep.subr.mxu0 0.0
        %2152 = vmatpush1.xpose.msra.mxu0 0.0
        %2153 = vmatprep.subr.mxu0 0.0
        %2154 = vmatpush1.xpose.msra.mxu0 0.0
        %2155 = vmatprep.subr.mxu0 0.0
        %2156 = vmatpush1.xpose.msra.mxu0 0.0
        %2157 = vmatprep.subr.mxu0 0.0
        %2158 = vmatpush1.xpose.msra.mxu0 0.0
        %2159 = vmatprep.subr.mxu0 0.0
        %2160 = vmatpush1.xpose.msra.mxu0 0.0
        %2161 = vmatprep.subr.mxu0 0.0
        %2162 = vmatpush1.xpose.msra.mxu0 0.0
        %2163 = vmatprep.subr.mxu0 0.0
        %2164 = vmatpush1.xpose.msra.mxu0 0.0
        %2165 = vmatprep.subr.mxu0 0.0
        %2166 = vmatpush1.xpose.msra.mxu0 0.0
        %2167 = vmatprep.subr.mxu0 0.0
        %2168 = vmatpush1.xpose.msra.mxu0 0.0
        %2169 = vmatprep.subr.mxu0 0.0
        %2170 = vmatpush1.xpose.msra.mxu0 0.0
        %2171 = vmatprep.subr.mxu0 0.0
        %2172 = vmatpush1.xpose.msra.mxu0 0.0
        %2173 = vmatprep.subr.mxu0 0.0
        %2174 = vmatpush1.xpose.msra.mxu0 0.0
        %2175 = vmatprep.subr.mxu0 0.0
        %2176 = vmatpush1.xpose.msra.mxu0 0.0
        %2177 = vmatprep.subr.mxu0 0.0
        %2178 = vmatpush1.xpose.msra.mxu0 0.0
        %2179 = vmatprep.subr.mxu0 0.0
        %2180 = vmatpush1.xpose.msra.mxu0 0.0
        %2181 = vmatprep.subr.mxu0 0.0
        %2182 = vmatpush1.xpose.msra.mxu0 0.0
        %2183 = vmatprep.subr.mxu0 0.0
        %2184 = vmatpush1.xpose.msra.mxu0 0.0
        %2185 = vmatprep.subr.mxu0 0.0
        %2186 = vmatpush1.xpose.msra.mxu0 0.0
        %2187 = vmatprep.subr.mxu0 0.0
        %2188 = vmatpush1.xpose.msra.mxu0 0.0
        %2189 = vmatprep.subr.mxu0 0.0
        %2190 = vmatpush1.xpose.msra.mxu0 0.0
        %2191 = vmatprep.subr.mxu0 0.0
        %2192 = vmatpush1.xpose.msra.mxu0 0.0
        %2193 = vmatprep.subr.mxu0 0.0
        %2194 = vmatpush1.xpose.msra.mxu0 0.0
        %2195 = vmatprep.subr.mxu0 0.0
        %2196 = vmatpush1.xpose.msra.mxu0 0.0
        %2197 = vmatprep.subr.mxu0 0.0
        %2198 = vmatpush1.xpose.msra.mxu0 0.0
        %2199 = vmatprep.subr.mxu0 0.0
        %2200 = vmatpush1.xpose.msra.mxu0 0.0
        %2201 = vmatprep.subr.mxu0 0.0
        %2202 = vmatpush1.xpose.msra.mxu0 0.0
        %2203 = vmatprep.subr.mxu0 0.0
        %2204 = vmatpush1.xpose.msra.mxu0 0.0
        %2205 = vmatprep.mubr.f32.mxu0 0.0
        %2206 = vmatmul.mubr.f32.gmra.mrb[0].mxu0 %v2136
        %v2207 = vpop.f32.mrb[0].mxu0
        %v2208 = vadd.f32 %v768, %v2207
        %v2209 = vpop.f32.mrb[0].mxu0
        %2210 = vdwg.mxu0
        %v2211 = vsel %vm545, %v2208, -inf
        %2212 = vmax.xlane.f32.xlu0 %v2211
        %v2213 = vpop.xlane.xlu0 %2212
        %v2214 = vsub.f32 %v2208, %v2213
        %v2215 = vmul.f32 %v2214, 1.442695
        %v2216 = vpow.pop %v2215
        %v2217 = vsel %vm545, %v2216, 0.0
        %2218 = vadd.xlane.f32.xlu0 %v2217
        %v2219 = vpop.xlane.xlu0 %2218
        %v2220 = vrcp.pop %v2219
        %v2221 = vmul.f32 %v2216, %v2220
        %v2223 = vsel %vm545, %v2221, 0
        %2225 = vmatprep.subr.mxu0 0.0
        %2226 = vmatpush1.msra.mxu0 %v2132
        %2227 = vmatprep.subr.mxu0 0.0
        %2228 = vmatpush1.msra.mxu0 0.0
        %2229 = vmatprep.subr.mxu0 0.0
        %2230 = vmatpush1.msra.mxu0 0.0
        %2231 = vmatprep.subr.mxu0 0.0
        %2232 = vmatpush1.msra.mxu0 0.0
        %2233 = vmatprep.subr.mxu0 0.0
        %2234 = vmatpush1.msra.mxu0 0.0
        %2235 = vmatprep.subr.mxu0 0.0
        %2236 = vmatpush1.msra.mxu0 0.0
        %2237 = vmatprep.subr.mxu0 0.0
        %2238 = vmatpush1.msra.mxu0 0.0
        %2239 = vmatprep.subr.mxu0 0.0
        %2240 = vmatpush1.msra.mxu0 0.0
        %2241 = vmatprep.subr.mxu0 0.0
        %2242 = vmatpush1.msra.mxu0 0.0
        %2243 = vmatprep.subr.mxu0 0.0
        %2244 = vmatpush1.msra.mxu0 0.0
        %2245 = vmatprep.subr.mxu0 0.0
        %2246 = vmatpush1.msra.mxu0 0.0
        %2247 = vmatprep.subr.mxu0 0.0
        %2248 = vmatpush1.msra.mxu0 0.0
        %2249 = vmatprep.subr.mxu0 0.0
        %2250 = vmatpush1.msra.mxu0 0.0
        %2251 = vmatprep.subr.mxu0 0.0
        %2252 = vmatpush1.msra.mxu0 0.0
        %2253 = vmatprep.subr.mxu0 0.0
        %2254 = vmatpush1.msra.mxu0 0.0
        %2255 = vmatprep.subr.mxu0 0.0
        %2256 = vmatpush1.msra.mxu0 0.0
        %2257 = vmatprep.subr.mxu0 0.0
        %2258 = vmatpush1.msra.mxu0 0.0
        %2259 = vmatprep.subr.mxu0 0.0
        %2260 = vmatpush1.msra.mxu0 0.0
        %2261 = vmatprep.subr.mxu0 0.0
        %2262 = vmatpush1.msra.mxu0 0.0
        %2263 = vmatprep.subr.mxu0 0.0
        %2264 = vmatpush1.msra.mxu0 0.0
        %2265 = vmatprep.subr.mxu0 0.0
        %2266 = vmatpush1.msra.mxu0 0.0
        %2267 = vmatprep.subr.mxu0 0.0
        %2268 = vmatpush1.msra.mxu0 0.0
        %2269 = vmatprep.subr.mxu0 0.0
        %2270 = vmatpush1.msra.mxu0 0.0
        %2271 = vmatprep.subr.mxu0 0.0
        %2272 = vmatpush1.msra.mxu0 0.0
        %2273 = vmatprep.subr.mxu0 0.0
        %2274 = vmatpush1.msra.mxu0 0.0
        %2275 = vmatprep.subr.mxu0 0.0
        %2276 = vmatpush1.msra.mxu0 0.0
        %2277 = vmatprep.subr.mxu0 0.0
        %2278 = vmatpush1.msra.mxu0 0.0
        %2279 = vmatprep.subr.mxu0 0.0
        %2280 = vmatpush1.msra.mxu0 0.0
        %2281 = vmatprep.subr.mxu0 0.0
        %2282 = vmatpush1.msra.mxu0 0.0
        %2283 = vmatprep.subr.mxu0 0.0
        %2284 = vmatpush1.msra.mxu0 0.0
        %2285 = vmatprep.subr.mxu0 0.0
        %2286 = vmatpush1.msra.mxu0 0.0
        %2287 = vmatprep.subr.mxu0 0.0
        %2288 = vmatpush1.msra.mxu0 0.0
        %2289 = vmatprep.mubr.f32.mxu0 0.0
        %2290 = vmatmul.mubr.f32.gmra.mrb[0].mxu0 %v2223
        %v2291 = vpop.f32.mrb[0].mxu0
        %v2292 = vadd.f32 0.0, %v2291
        %v2293 = vpop.f32.mrb[0].mxu0
        %2294 = vdwg.mxu0
        %v2296 = vsel %vm545, %v2292, 0
        %2298 = vmatprep.subr.mxu0 0.0
        %2299 = vmatpush1.msra.mxu0 %v543
        %2300 = vmatprep.subr.mxu0 0.0
        %2301 = vmatpush1.msra.mxu0 0.0
        %2302 = vmatprep.subr.mxu0 0.0
        %2303 = vmatpush1.msra.mxu0 0.0
        %2304 = vmatprep.subr.mxu0 0.0
        %2305 = vmatpush1.msra.mxu0 0.0
        %2306 = vmatprep.subr.mxu0 0.0
        %2307 = vmatpush1.msra.mxu0 0.0
        %2308 = vmatprep.subr.mxu0 0.0
        %2309 = vmatpush1.msra.mxu0 0.0
        %2310 = vmatprep.subr.mxu0 0.0
        %2311 = vmatpush1.msra.mxu0 0.0
        %2312 = vmatprep.subr.mxu0 0.0
        %2313 = vmatpush1.msra.mxu0 0.0
        %2314 = vmatprep.subr.mxu0 0.0
        %2315 = vmatpush1.msra.mxu0 0.0
        %2316 = vmatprep.subr.mxu0 0.0
        %2317 = vmatpush1.msra.mxu0 0.0
        %2318 = vmatprep.subr.mxu0 0.0
        %2319 = vmatpush1.msra.mxu0 0.0
        %2320 = vmatprep.subr.mxu0 0.0
        %2321 = vmatpush1.msra.mxu0 0.0
        %2322 = vmatprep.subr.mxu0 0.0
        %2323 = vmatpush1.msra.mxu0 0.0
        %2324 = vmatprep.subr.mxu0 0.0
        %2325 = vmatpush1.msra.mxu0 0.0
        %2326 = vmatprep.subr.mxu0 0.0
        %2327 = vmatpush1.msra.mxu0 0.0
        %2328 = vmatprep.subr.mxu0 0.0
        %2329 = vmatpush1.msra.mxu0 0.0
        %2330 = vmatprep.subr.mxu0 0.0
        %2331 = vmatpush1.msra.mxu0 0.0
        %2332 = vmatprep.subr.mxu0 0.0
        %2333 = vmatpush1.msra.mxu0 0.0
        %2334 = vmatprep.subr.mxu0 0.0
        %2335 = vmatpush1.msra.mxu0 0.0
        %2336 = vmatprep.subr.mxu0 0.0
        %2337 = vmatpush1.msra.mxu0 0.0
        %2338 = vmatprep.subr.mxu0 0.0
        %2339 = vmatpush1.msra.mxu0 0.0
        %2340 = vmatprep.subr.mxu0 0.0
        %2341 = vmatpush1.msra.mxu0 0.0
        %2342 = vmatprep.subr.mxu0 0.0
        %2343 = vmatpush1.msra.mxu0 0.0
        %2344 = vmatprep.subr.mxu0 0.0
        %2345 = vmatpush1.msra.mxu0 0.0
        %2346 = vmatprep.subr.mxu0 0.0
        %2347 = vmatpush1.msra.mxu0 0.0
        %2348 = vmatprep.subr.mxu0 0.0
        %2349 = vmatpush1.msra.mxu0 0.0
        %2350 = vmatprep.subr.mxu0 0.0
        %2351 = vmatpush1.msra.mxu0 0.0
        %2352 = vmatprep.subr.mxu0 0.0
        %2353 = vmatpush1.msra.mxu0 0.0
        %2354 = vmatprep.subr.mxu0 0.0
        %2355 = vmatpush1.msra.mxu0 0.0
        %2356 = vmatprep.subr.mxu0 0.0
        %2357 = vmatpush1.msra.mxu0 0.0
        %2358 = vmatprep.subr.mxu0 0.0
        %2359 = vmatpush1.msra.mxu0 0.0
        %2360 = vmatprep.subr.mxu0 0.0
        %2361 = vmatpush1.msra.mxu0 0.0
        %2362 = vmatprep.mubr.f32.mxu0 0.0
        %2363 = vmatmul.mubr.f32.gmra.mrb[0].mxu0 %v2296
        %v2364 = vpop.f32.mrb[0].mxu0
        %v2365 = vadd.f32 0.0, %v2364
        %v2366 = vpop.f32.mrb[0].mxu0
        %2367 = vdwg.mxu0
        %v2368 = vadd.f32 %v1912, %v2365
        %v2369 = vld [vmem:[%s8] sm:$0x1]
        %v2371 = vlaneseq
        %v2372 = vshrl.u32 %v2371, 7
        %v2373 = vsub.s32 0, %v2372
        %v2374 = vrot.slane %v2369, %v2373
        %v2376 = vadd.f32 %v2368, %v2374
        %v2377 = vadd.f32 %v2376, %v537
        %vm2378 = vcmask 261120
        %v2379 = vsel %vm2378, %v2377, 0.0
        %2380 = vadd.xlane.f32.xlu0 %v2379
        %v2381 = vpop.xlane.xlu0 %2380
        %v2382 = vrcp.pop 32.0
        %v2383 = vmul.f32 %v2381, %v2382
        %v2384 = vsub.f32 %v2377, %v2383
        %v2385 = vmul.f32 %v2384, %v2384
        %v2386 = vsel %vm2378, %v2385, 0.0
        %2387 = vadd.xlane.f32.xlu0 %v2386
        %v2388 = vpop.xlane.xlu0 %2387
        %v2389 = vmul.f32 %v2388, %v2382
        %v2390 = vadd.f32 %v2389, 1e-05
        %v2391 = vrsqrt.pop %v2390
        %v2392 = vmul.f32 %v2384, %v2391
        %v2393 = vld [vmem:[%s9] sm:$0x1]
        %v2395 = vlaneseq
        %v2396 = vshrl.u32 %v2395, 7
        %v2397 = vsub.s32 0, %v2396
        %v2398 = vrot.slane %v2393, %v2397
        %v2400 = vmul.f32 %v2392, %v2398
        %v2401 = vld [vmem:[%s10] sm:$0x1]
        %v2403 = vlaneseq
        %v2404 = vshrl.u32 %v2403, 7
        %v2405 = vsub.s32 0, %v2404
        %v2406 = vrot.slane %v2401, %v2405
        %v2408 = vadd.f32 %v2400, %v2406
        %2409 = vst.msk [vmem:[%s536] sm:$0xff] %vm2378, %v2408
        %s2410 = sand.u32 %s308, 1
        %s2411 = scalar_lea.sflag [#allocation4], %s2410
        %s2412 = sand.u32 %s308, 1
        %s2413 = smul.addr %s2412, 8
        %s2414 = scalar_lea.vmem [#allocation13], %s2413
        // Predicated region
        $region89: #{tpu_custom_call.1} parent=63 // pred_check
          %p2415 = pneg %p318
        $region90: #{tpu_custom_call.1} parent=63 // pred_check_branch
          %2417 = sbr.rel (%p2415) target = $region92
        $region91: #{tpu_custom_call.1} parent=63 // pred_region
          %s2419 = ssub.s32 128, 128
          %2420 = vsyncadd %s2411, %s2419
          %s2421 = sadd.s32 %s38, %s37
          %s2422 = smul.addr %s2421, 128
          %s2423 = scalar_lea.hbm %s11, %s2422
          %s2425 = sshll.u32 %s2414, 4
          %s2426 = int_to_ptr.vmem [resolvable:$true] %s2425
          %2428 = dma.vmem_to_hbm [thread:$0]  %s2426, 128, %s2423, %s2411
        $region92: #{tpu_custom_call.1} parent=63 // pred_fallthru
          _
      $region64: #{tpu_custom_call.1} parent=5 // pred_fallthru
        _
      %p2429 = scmp.le.s32.totalorder 2, %s28
      // Predicated region
      $region93: #{tpu_custom_call.1} parent=5 // pred_check
        %p2430 = pneg %p2429
      $region94: #{tpu_custom_call.1} parent=5 // pred_check_branch
        %2432 = sbr.rel (%p2430) target = $region96
      $region95: #{tpu_custom_call.1} parent=5 // pred_region
        %s2433 = ssub.s32 %s28, 2
        // Predicated region
        $region97: #{tpu_custom_call.1} parent=95 // pred_check
          %p2434 = pneg %p324
        $region98: #{tpu_custom_call.1} parent=95 // pred_check_branch
          %2436 = sbr.rel (%p2434) target = $region100
        $region99: #{tpu_custom_call.1} parent=95 // pred_region
          %s2437 = sand.u32 %s309, 1
          %s2438 = scalar_lea.sflag [#allocation4], %s2437
          %s2439 = sand.u32 %s309, 1
          %s2440 = smul.addr %s2439, 8
          %s2441 = scalar_lea.vmem [#allocation13], %s2440
          %2442 = dma.done %s2438, 128
        $region100: #{tpu_custom_call.1} parent=95 // pred_fallthru
          _
      $region96: #{tpu_custom_call.1} parent=5 // pred_fallthru
        _
    $region6: #{tpu_custom_call.1} parent=1 // loop_footer
      %s32 = sadd.s32 1, %s28
    $region7: #{tpu_custom_call.1} parent=1 // loop_footer_branch
      %27 = sbr.rel target = $region3
    $region8: #{tpu_custom_call.1} parent=1 // loop_exit
      _
    %2443 = vsyncpa [#allocation3], 1
    %s2444 = scalar_lea.sflag [#allocation3], 1
    %2445 = vsyncpa %s2444, 1
    %2446 = vsyncpa [#allocation6], 1
    %s2447 = scalar_lea.sflag [#allocation6], 1
    %2448 = vsyncpa %s2447, 1
    %2449 = vsyncpa [#allocation9], 1
    %2450 = vsyncpa [#allocation12], 1
    %2451 = vsyncpa [#allocation4], 1
    %s2452 = scalar_lea.sflag [#allocation4], 1
    %2453 = vsyncpa %s2452, 1

</llo_original>
